<compile_context>
chip_gen: v6e
topology: v6e:2x2x1
jax: 0.10.0
libtpu: 0.0.40
codegen_flags: <defaults>
</compile_context>

<pallas_src>
import math
from functools import partial

import jax
import jax.numpy as jnp
from jax import lax
from jax.experimental import pallas as pl
from jax.experimental.pallas import tpu as pltpu


VMEM_LIMIT_BYTES = 48 * 1024 * 1024   # > v5e 16 MiB scoped default, < v7x 64 MiB physical


# --------------------------------------------------------------------------
# helpers
# --------------------------------------------------------------------------

def _fit(dim, target, align):
    """Largest tile <= target that is a multiple of `align` and divides `dim`,
    or the full dim if dim is small / indivisible (block == full dim is legal)."""
    if dim <= target:
        return dim
    t = (target // align) * align
    while t > align and dim % t:
        t -= align
    return t if (t >= align and dim % t == 0) else dim


def _gelu_sigmoid(u):
    # sigmoid-form GELU: 1 EUP + 2 VALU ops/elem (vs ~8 VALU for the tanh polynomial).
    # TODO(synk): differs from BERT's erf-GELU by <~2e-2 abs; acceptable for bf16 inference.
    return u * jax.nn.sigmoid(1.702 * u)


def _head_group(n_heads, d_head):
    """Heads per 128-lane group (so q/k/v slabs and output stores are lane-aligned)."""
    group = 1
    if d_head < 128 and 128 % d_head == 0:
        group = 128 // d_head
        while group > 1 and n_heads % group:
            group //= 2
    return group


def _cost(flops, bytes_accessed, transcendentals=0):
    return pl.CostEstimate(flops=int(flops), transcendentals=int(transcendentals),
                           bytes_accessed=int(bytes_accessed))


# --------------------------------------------------------------------------
# tiled linear:  out = x @ w + b
# --------------------------------------------------------------------------

def _linear_kernel(x_ref, w_ref, b_ref, o_ref, acc_ref):
    @pl.when(pl.program_id(2) == 0)
    def _():
        acc_ref[...] = jnp.zeros_like(acc_ref)

    acc_ref[...] += jnp.dot(x_ref[...], w_ref[...],
                            preferred_element_type=jnp.float32)

    @pl.when(pl.program_id(2) == pl.num_programs(2) - 1)
    def _():
        o_ref[...] = (acc_ref[...] + b_ref[...]).astype(o_ref.dtype)


def linear(x, w, b, *, out_dtype=jnp.bfloat16, tm=512, tn=768, tk=768):
    m, k = x.shape
    n = w.shape[1]
    tm = _fit(m, tm, 8)
    tn = _fit(n, tn, 256)     # 256-aligned output tiles for the 2x256^2 MXU (v6e/v7x)
    tk = _fit(k, tk, 256)
    bytes_accessed = (m * k * x.dtype.itemsize + k * n * w.dtype.itemsize
                      + n * 4 + m * n * jnp.dtype(out_dtype).itemsize)
    return pl.pallas_call(
        _linear_kernel,
        out_shape=jax.ShapeDtypeStruct((m, n), out_dtype),
        grid=(m // tm, n // tn, k // tk),
        in_specs=[
            pl.BlockSpec((tm, tk), lambda i, j, kk: (i, kk)),
            pl.BlockSpec((tk, tn), lambda i, j, kk: (kk, j)),
            pl.BlockSpec((1, tn), lambda i, j, kk: (0, j)),
        ],
        out_specs=pl.BlockSpec((tm, tn), lambda i, j, kk: (i, j)),
        scratch_shapes=[pltpu.VMEM((tm, tn), jnp.float32)],
        compiler_params=pltpu.CompilerParams(
            dimension_semantics=("parallel", "parallel", "arbitrary"),
            vmem_limit_bytes=VMEM_LIMIT_BYTES),
        cost_estimate=_cost(2 * m * k * n, bytes_accessed),
    )(x, w, b.reshape(1, n))


# --------------------------------------------------------------------------
# fused: out = LayerNorm((x @ w + b) + residual)     (attention output projection)
# --------------------------------------------------------------------------

def _proj_res_ln_kernel(x_ref, w_ref, b_ref, r_ref, g_ref, bb_ref, o_ref, acc_ref,
                        *, eps):
    @pl.when(pl.program_id(1) == 0)
    def _():
        acc_ref[...] = jnp.zeros_like(acc_ref)

    acc_ref[...] += jnp.dot(x_ref[...], w_ref[...],
                            preferred_element_type=jnp.float32)

    @pl.when(pl.program_id(1) == pl.num_programs(1) - 1)
    def _():
        y = acc_ref[...] + b_ref[...] + r_ref[...].astype(jnp.float32)
        mu = jnp.mean(y, axis=-1, keepdims=True)
        yc = y - mu
        var = jnp.mean(yc * yc, axis=-1, keepdims=True)
        o_ref[...] = (yc * jax.lax.rsqrt(var + eps) * g_ref[...]
                      + bb_ref[...]).astype(o_ref.dtype)


def proj_residual_ln(x, w, b, res, gamma, beta, *, eps=1e-12, tm=512, tk=768,
                     out_dtype=jnp.bfloat16):
    m, k = x.shape
    n = w.shape[1]                       # full hidden width per output tile
    tm = _fit(m, tm, 8)
    tk = _fit(k, tk, 256)
    bytes_accessed = (m * k * 2 + k * n * 2 + 3 * n * 4 + m * n * 2
                      + m * n * jnp.dtype(out_dtype).itemsize)
    return pl.pallas_call(
        partial(_proj_res_ln_kernel, eps=eps),
        out_shape=jax.ShapeDtypeStruct((m, n), out_dtype),
        grid=(m // tm, k // tk),
        in_specs=[
            pl.BlockSpec((tm, tk), lambda i, kk: (i, kk)),
            pl.BlockSpec((tk, n), lambda i, kk: (kk, 0)),
            pl.BlockSpec((1, n), lambda i, kk: (0, 0)),
            pl.BlockSpec((tm, n), lambda i, kk: (i, 0)),
            pl.BlockSpec((1, n), lambda i, kk: (0, 0)),
            pl.BlockSpec((1, n), lambda i, kk: (0, 0)),
        ],
        out_specs=pl.BlockSpec((tm, n), lambda i, kk: (i, 0)),
        scratch_shapes=[pltpu.VMEM((tm, n), jnp.float32)],
        compiler_params=pltpu.CompilerParams(
            dimension_semantics=("parallel", "arbitrary"),
            vmem_limit_bytes=VMEM_LIMIT_BYTES),
        cost_estimate=_cost(2 * m * k * n + 10 * m * n, bytes_accessed,
                            transcendentals=m),
    )(x, w, b.reshape(1, n), res, gamma.reshape(1, n), beta.reshape(1, n))


# --------------------------------------------------------------------------
# fused FFN: out = LayerNorm(gelu(x@Wi + bi) @ Wo + bo + residual)
# intermediate activation stays in VMEM (never written to HBM)
# --------------------------------------------------------------------------

def _ffn_res_ln_kernel(x_ref, wi_ref, bi_ref, wo_ref, bo_ref, r_ref, g_ref, bb_ref,
                       o_ref, acc_ref, *, eps):
    @pl.when(pl.program_id(1) == 0)
    def _():
        acc_ref[...] = jnp.zeros_like(acc_ref)

    u = jnp.dot(x_ref[...], wi_ref[...], preferred_element_type=jnp.float32)
    u = _gelu_sigmoid(u + bi_ref[...])
    acc_ref[...] += jnp.dot(u.astype(x_ref.dtype), wo_ref[...],
                            preferred_element_type=jnp.float32)

    @pl.when(pl.program_id(1) == pl.num_programs(1) - 1)
    def _():
        y = acc_ref[...] + bo_ref[...] + r_ref[...].astype(jnp.float32)
        mu = jnp.mean(y, axis=-1, keepdims=True)
        yc = y - mu
        var = jnp.mean(yc * yc, axis=-1, keepdims=True)
        o_ref[...] = (yc * jax.lax.rsqrt(var + eps) * g_ref[...]
                      + bb_ref[...]).astype(o_ref.dtype)


def ffn_residual_ln(x, wi, bi, wo, bo, res, gamma, beta, *, eps=1e-12, tm=512,
                    ti=1024, out_dtype=jnp.bfloat16):
    m, h = x.shape
    inter = wi.shape[1]
    tm = _fit(m, tm, 8)
    ti = _fit(inter, ti, 256)
    bytes_accessed = (m * h * 2 + h * inter * 2 + inter * 4 + inter * h * 2
                      + 3 * h * 4 + m * h * 2 + m * h * jnp.dtype(out_dtype).itemsize)
    return pl.pallas_call(
        partial(_ffn_res_ln_kernel, eps=eps),
        out_shape=jax.ShapeDtypeStruct((m, h), out_dtype),
        grid=(m // tm, inter // ti),
        in_specs=[
            pl.BlockSpec((tm, h), lambda i, j: (i, 0)),
            pl.BlockSpec((h, ti), lambda i, j: (0, j)),
            pl.BlockSpec((1, ti), lambda i, j: (0, j)),
            pl.BlockSpec((ti, h), lambda i, j: (j, 0)),
            pl.BlockSpec((1, h), lambda i, j: (0, 0)),
            pl.BlockSpec((tm, h), lambda i, j: (i, 0)),
            pl.BlockSpec((1, h), lambda i, j: (0, 0)),
            pl.BlockSpec((1, h), lambda i, j: (0, 0)),
        ],
        out_specs=pl.BlockSpec((tm, h), lambda i, j: (i, 0)),
        scratch_shapes=[pltpu.VMEM((tm, h), jnp.float32)],
        compiler_params=pltpu.CompilerParams(
            dimension_semantics=("parallel", "arbitrary"),
            vmem_limit_bytes=VMEM_LIMIT_BYTES),
        cost_estimate=_cost(4 * m * h * inter + 6 * m * inter + 10 * m * h,
                            bytes_accessed, transcendentals=m * inter),
    )(x, wi, bi.reshape(1, inter), wo, bo.reshape(1, h), res,
      gamma.reshape(1, h), beta.reshape(1, h))


# --------------------------------------------------------------------------
# standalone tiled layernorm (embedding output)
# --------------------------------------------------------------------------

def _ln_kernel(x_ref, g_ref, b_ref, o_ref, *, eps):
    x = x_ref[...].astype(jnp.float32)
    mu = jnp.mean(x, axis=-1, keepdims=True)
    xc = x - mu
    var = jnp.mean(xc * xc, axis=-1, keepdims=True)
    o_ref[...] = (xc * jax.lax.rsqrt(var + eps) * g_ref[...]
                  + b_ref[...]).astype(o_ref.dtype)


def layernorm(x, gamma, beta, *, eps=1e-12, tm=512, out_dtype=jnp.bfloat16):
    m, h = x.shape
    tm = _fit(m, tm, 8)
    return pl.pallas_call(
        partial(_ln_kernel, eps=eps),
        out_shape=jax.ShapeDtypeStruct((m, h), out_dtype),
        grid=(m // tm,),
        in_specs=[pl.BlockSpec((tm, h), lambda i: (i, 0)),
                  pl.BlockSpec((1, h), lambda i: (0, 0)),
                  pl.BlockSpec((1, h), lambda i: (0, 0))],
        out_specs=pl.BlockSpec((tm, h), lambda i: (i, 0)),
        compiler_params=pltpu.CompilerParams(dimension_semantics=("parallel",)),
    )(x, gamma.reshape(1, h), beta.reshape(1, h))


# --------------------------------------------------------------------------
# multi-head self-attention over 128-lane head groups.
# QKV is group-packed: last dim = n_groups * [q_g | k_g | v_g], each 128 lanes wide,
# so every grid step DMAs one contiguous (S, 384) slab and its q/k/v slices are
# lane-aligned. Grid = (batch, head_group), both parallel (megacore friendly).
# --------------------------------------------------------------------------

def _mha_kernel(qkv_ref, bias_ref, o_ref, *, group_heads, d_head, scale):
    gw = group_heads * d_head
    qkv = qkv_ref[0]                              # (S, 3*gw) bf16
    q = qkv[:, 0:gw]
    k = qkv[:, gw:2 * gw]
    v = qkv[:, 2 * gw:3 * gw]
    bias = bias_ref[0].astype(jnp.float32)        # (1, S) additive key-mask bias

    ctx_parts = []
    for hh in range(group_heads):                 # unrolled (<= 2 iterations)
        lo, hi = hh * d_head, (hh + 1) * d_head
        # contraction dims instead of materializing k.T (no XLU transpose)
        s = lax.dot_general(q[:, lo:hi], k[:, lo:hi],
                            (((1,), (1,)), ((), ())),
                            preferred_element_type=jnp.float32)
        s = s * scale + bias
        s = s - jnp.max(s, axis=-1, keepdims=True)
        p = jnp.exp(s)
        p = p * pl.reciprocal(jnp.sum(p, axis=-1, keepdims=True), approx=True)
        ctx_parts.append(jnp.dot(p.astype(qkv.dtype), v[:, lo:hi],
                                 preferred_element_type=jnp.float32))
    # one lane-dense, unmasked 128-wide store per grid step
    ctx = ctx_parts[0] if len(ctx_parts) == 1 else jnp.concatenate(ctx_parts, axis=-1)
    o_ref[0] = ctx.astype(o_ref.dtype)


def attention(qkv, mask_bias, n_heads):
    b, s, h3 = qkv.shape
    hidden = h3 // 3
    d_head = hidden // n_heads
    group_heads = _head_group(n_heads, d_head)
    n_groups = n_heads // group_heads
    gw = group_heads * d_head
    return pl.pallas_call(
        partial(_mha_kernel, group_heads=group_heads, d_head=d_head,
                scale=1.0 / math.sqrt(d_head)),
        out_shape=jax.ShapeDtypeStruct((b, s, hidden), jnp.bfloat16),
        grid=(b, n_groups),
        in_specs=[pl.BlockSpec((1, s, 3 * gw), lambda i, g: (i, 0, g)),
                  pl.BlockSpec((1, 1, s), lambda i, g: (i, 0, 0))],
        out_specs=pl.BlockSpec((1, s, gw), lambda i, g: (i, 0, g)),
        compiler_params=pltpu.CompilerParams(
            dimension_semantics=("parallel", "parallel")),
    )(qkv, mask_bias)


# --------------------------------------------------------------------------
# parameters
# --------------------------------------------------------------------------

def _pack_qkv(wq, wk, wv, bq, bk, bv, n_heads):
    """Interleave Q/K/V columns per 128-lane head group: [q_g0,k_g0,v_g0, q_g1,...]."""
    h = wq.shape[0]
    d_head = h // n_heads
    group_heads = _head_group(n_heads, d_head)
    gw = group_heads * d_head
    n_groups = n_heads // group_heads
    w_cols, b_cols = [], []
    for g in range(n_groups):
        sl = slice(g * gw, (g + 1) * gw)
        w_cols += [wq[:, sl], wk[:, sl], wv[:, sl]]
        b_cols += [bq[sl], bk[sl], bv[sl]]
    return jnp.concatenate(w_cols, axis=1), jnp.concatenate(b_cols)


def init_params(key, *, vocab_size, hidden, n_layers, n_heads, intermediate,
                max_pos, type_vocab):
    std = 0.02
    keys = jax.random.split(key, 5 + 6 * n_layers)
    ki = iter(keys)

    def dense(shape):
        return jax.random.normal(next(ki), shape, dtype=jnp.float32) * std

    params = {
        "word_emb": dense((vocab_size, hidden)),
        "pos_emb": dense((max_pos, hidden)),
        "type_emb": dense((type_vocab, hidden)),
        "emb_ln_g": jnp.ones((hidden,), jnp.float32),
        "emb_ln_b": jnp.zeros((hidden,), jnp.float32),
        "layers": [],
    }
    for _ in range(n_layers):
        wq, wk, wv = dense((hidden, hidden)), dense((hidden, hidden)), dense((hidden, hidden))
        bq = bk = bv = jnp.zeros((hidden,), jnp.float32)
        w_qkv, b_qkv = _pack_qkv(wq, wk, wv, bq, bk, bv, n_heads)
        params["layers"].append({
            "w_qkv": w_qkv.astype(jnp.bfloat16),
            "b_qkv": b_qkv,
            "wo": dense((hidden, hidden)).astype(jnp.bfloat16),
            "bo": jnp.zeros((hidden,), jnp.float32),
            "ln1_g": jnp.ones((hidden,), jnp.float32),
            "ln1_b": jnp.zeros((hidden,), jnp.float32),
            "wi": dense((hidden, intermediate)).astype(jnp.bfloat16),
            "bi": jnp.zeros((intermediate,), jnp.float32),
            "wo2": dense((intermediate, hidden)).astype(jnp.bfloat16),
            "bo2": jnp.zeros((hidden,), jnp.float32),
            "ln2_g": jnp.ones((hidden,), jnp.float32),
            "ln2_b": jnp.zeros((hidden,), jnp.float32),
        })

    # fused span heads, padded to a lane-dense 128-wide output (cols 0:2 start, 2:4 end)
    start_w, end_w = dense((hidden, 2)), dense((hidden, 2))
    head_w = jnp.zeros((hidden, 128), jnp.float32)
    head_w = head_w.at[:, 0:2].set(start_w).at[:, 2:4].set(end_w)
    params["head_w"] = head_w.astype(jnp.bfloat16)
    params["head_b"] = jnp.zeros((128,), jnp.float32)
    return params


# --------------------------------------------------------------------------
# forward pass
# --------------------------------------------------------------------------

def bert_mrc_ner_forward(params, input_ids, token_type_ids, attention_mask, *, n_heads):
    b, s = input_ids.shape
    hidden = params["word_emb"].shape[1]

    # embeddings: table gathers are plain-JAX glue; LN runs in Pallas
    positions = jnp.arange(s, dtype=jnp.int32)
    emb = (params["word_emb"][input_ids]
           + params["pos_emb"][positions][None, :, :]
           + params["type_emb"][token_type_ids])
    h = layernorm(emb.reshape(b * s, hidden), params["emb_ln_g"], params["emb_ln_b"])

    # additive attention-mask bias over key positions, (B, 1, S)
    mask_bias = ((1.0 - attention_mask.astype(jnp.float32)) * -10000.0).reshape(b, 1, s)

    for layer in params["layers"]:
        qkv = linear(h, layer["w_qkv"], layer["b_qkv"])                     # (B*S, 3H) group-packed
        ctx = attention(qkv.reshape(b, s, 3 * hidden), mask_bias, n_heads)  # (B, S, H)
        h = proj_residual_ln(ctx.reshape(b * s, hidden), layer["wo"], layer["bo"],
                             h, layer["ln1_g"], layer["ln1_b"])
        h = ffn_residual_ln(h, layer["wi"], layer["bi"], layer["wo2"], layer["bo2"],
                            h, layer["ln2_g"], layer["ln2_b"])

    # fused span heads (lane-dense 128-wide output, sliced outside the kernel)
    logits = linear(h, params["head_w"], params["head_b"], out_dtype=jnp.float32)
    start_logits = logits[:, 0:2]     # (B*S, 2)
    end_logits = logits[:, 2:4]       # (B*S, 2)

    # TODO(synk): the training branch of the reference forward references an undefined
    # `span_loss`; only the (start_logits, end_logits) inference path is implemented.
    return start_logits, end_logits


# --------------------------------------------------------------------------
# main
# --------------------------------------------------------------------------

if __name__ == "__main__":
    B, S = 2, 16
    HIDDEN, N_LAYERS, N_HEADS, INTERMEDIATE = 128, 2, 2, 512   # head_dim = 64, as in BERT
    VOCAB, MAX_POS, TYPE_VOCAB = 256, 64, 2

    key = jax.random.PRNGKey(0)
    pkey, ikey = jax.random.split(key)

    params = init_params(pkey, vocab_size=VOCAB, hidden=HIDDEN, n_layers=N_LAYERS,
                         n_heads=N_HEADS, intermediate=INTERMEDIATE,
                         max_pos=MAX_POS, type_vocab=TYPE_VOCAB)

    input_ids = jax.random.randint(ikey, (B, S), 0, VOCAB, dtype=jnp.int32)
    token_type_ids = jnp.zeros((B, S), dtype=jnp.int32)
    # second example has its last three tokens padded
    attention_mask = jnp.array([[1] * S, [1] * (S - 3) + [0, 0, 0]], dtype=jnp.int32)

    fwd = jax.jit(partial(bert_mrc_ner_forward, n_heads=N_HEADS))
    start_logits, end_logits = fwd(params, input_ids, token_type_ids, attention_mask)
    jax.block_until_ready((start_logits, end_logits))

    assert start_logits.shape == (B * S, 2) and end_logits.shape == (B * S, 2)
    assert bool(jnp.all(jnp.isfinite(start_logits))) and bool(jnp.all(jnp.isfinite(end_logits)))
    print("KERNEL_OK")
</pallas_src>

<mosaic_0001>
module attributes {stable_mosaic.version = 11 : i64} {
  func.func @_ln_kernel(%arg0: i32, %arg1: memref<32x128xf32, #tpu.memory_space<vmem>>, %arg2: memref<1x128xf32, #tpu.memory_space<vmem>>, %arg3: memref<1x128xf32, #tpu.memory_space<vmem>>, %arg4: memref<32x128xbf16, #tpu.memory_space<vmem>>) attributes {dimension_semantics = [#tpu.dimension_semantics<parallel>], iteration_bounds = array<i64: 1>, scalar_prefetch = 0 : i64, scratch_operands = 0 : i64, tpu.core_type = #tpu.core_type<tc>, window_params = [{transform_indices = @transform_0, window_bounds = array<i64: 32, 128>}, {pipeline_mode = #tpu.pipeline_mode<synchronous>, transform_indices = @transform_1, window_bounds = array<i64: 1, 128>}, {pipeline_mode = #tpu.pipeline_mode<synchronous>, transform_indices = @transform_2, window_bounds = array<i64: 1, 128>}, {transform_indices = @transform_3, window_bounds = array<i64: 32, 128>}]} {
    %c0 = arith.constant 0 : index
    %c0_0 = arith.constant 0 : index
    %0 = vector.load %arg1[%c0, %c0_0] : memref<32x128xf32, #tpu.memory_space<vmem>>, vector<32x128xf32>
    %cst = arith.constant dense<0.000000e+00> : vector<32xf32>
    %1 = vector.multi_reduction <add>, %0, %cst [1] : vector<32x128xf32> to vector<32xf32>
    %2 = vector.shape_cast %1 : vector<32xf32> to vector<32x1xf32>
    %cst_1 = arith.constant 1.280000e+02 : f32
    %3 = vector.broadcast %cst_1 : f32 to vector<32x1xf32>
    %4 = arith.divf %2, %3 : vector<32x1xf32>
    %5 = vector.broadcast %4 : vector<32x1xf32> to vector<32x128xf32>
    %6 = arith.subf %0, %5 : vector<32x128xf32>
    %7 = arith.mulf %6, %6 : vector<32x128xf32>
    %cst_2 = arith.constant dense<0.000000e+00> : vector<32xf32>
    %8 = vector.multi_reduction <add>, %7, %cst_2 [1] : vector<32x128xf32> to vector<32xf32>
    %9 = vector.shape_cast %8 : vector<32xf32> to vector<32x1xf32>
    %cst_3 = arith.constant 1.280000e+02 : f32
    %10 = vector.broadcast %cst_3 : f32 to vector<32x1xf32>
    %11 = arith.divf %9, %10 : vector<32x1xf32>
    %cst_4 = arith.constant 9.99999996E-13 : f32
    %12 = vector.broadcast %cst_4 : f32 to vector<32x1xf32>
    %13 = arith.addf %11, %12 : vector<32x1xf32>
    %14 = math.rsqrt %13 : vector<32x1xf32>
    %15 = vector.broadcast %14 : vector<32x1xf32> to vector<32x128xf32>
    %16 = arith.mulf %6, %15 : vector<32x128xf32>
    %c0_5 = arith.constant 0 : index
    %c0_6 = arith.constant 0 : index
    %17 = vector.load %arg2[%c0_5, %c0_6] : memref<1x128xf32, #tpu.memory_space<vmem>>, vector<1x128xf32>
    %18 = vector.broadcast %17 : vector<1x128xf32> to vector<32x128xf32>
    %19 = arith.mulf %16, %18 : vector<32x128xf32>
    %c0_7 = arith.constant 0 : index
    %c0_8 = arith.constant 0 : index
    %20 = vector.load %arg3[%c0_7, %c0_8] : memref<1x128xf32, #tpu.memory_space<vmem>>, vector<1x128xf32>
    %21 = vector.broadcast %20 : vector<1x128xf32> to vector<32x128xf32>
    %22 = arith.addf %19, %21 : vector<32x128xf32>
    %23 = arith.truncf %22 : vector<32x128xf32> to vector<32x128xbf16>
    %c0_9 = arith.constant 0 : index
    %c0_10 = arith.constant 0 : index
    %24 = vector.load %arg4[%c0_9, %c0_10] : memref<32x128xbf16, #tpu.memory_space<vmem>>, vector<32x128xbf16>
    tpu.vector_store %arg4[%c0_9, %c0_10], %23 {strides = array<i32>} : memref<32x128xbf16, #tpu.memory_space<vmem>>, vector<32x128xbf16>,
    return
  }
  func.func @transform_0(%arg0: i32) -> (i32, i32) {
    %c0_i32 = arith.constant 0 : i32
    %c0_i32_0 = arith.constant 0 : i32
    return %arg0, %c0_i32 : i32, i32
  }
  func.func @transform_1(%arg0: i32) -> (i32, i32) {
    %c0_i32 = arith.constant 0 : i32
    %c0_i32_0 = arith.constant 0 : i32
    %c0_i32_1 = arith.constant 0 : i32
    return %c0_i32, %c0_i32_0 : i32, i32
  }
  func.func @transform_2(%arg0: i32) -> (i32, i32) {
    %c0_i32 = arith.constant 0 : i32
    %c0_i32_0 = arith.constant 0 : i32
    %c0_i32_1 = arith.constant 0 : i32
    return %c0_i32, %c0_i32_0 : i32, i32
  }
  func.func @transform_3(%arg0: i32) -> (i32, i32) {
    %c0_i32 = arith.constant 0 : i32
    %c0_i32_0 = arith.constant 0 : i32
    return %arg0, %c0_i32 : i32, i32
  }
}

module attributes {stable_mosaic.version = 11 : i64} {
  func.func @_proj_res_ln_kernel(%arg0: i32, %arg1: i32, %arg2: memref<32x128xbf16, #tpu.memory_space<vmem>>, %arg3: memref<128x128xbf16, #tpu.memory_space<vmem>>, %arg4: memref<1x128xf32, #tpu.memory_space<vmem>>, %arg5: memref<32x128xbf16, #tpu.memory_space<vmem>>, %arg6: memref<1x128xf32, #tpu.memory_space<vmem>>, %arg7: memref<1x128xf32, #tpu.memory_space<vmem>>, %arg8: memref<32x128xbf16, #tpu.memory_space<vmem>>, %arg9: memref<32x128xf32, #tpu.memory_space<vmem>>) attributes {dimension_semantics = [#tpu.dimension_semantics<parallel>, #tpu.dimension_semantics<arbitrary>], iteration_bounds = array<i64: 1, 1>, scalar_prefetch = 0 : i64, scratch_operands = 1 : i64, tpu.core_type = #tpu.core_type<tc>, window_params = [{transform_indices = @transform_0, window_bounds = array<i64: 32, 128>}, {transform_indices = @transform_1, window_bounds = array<i64: 128, 128>}, {pipeline_mode = #tpu.pipeline_mode<synchronous>, transform_indices = @transform_2, window_bounds = array<i64: 1, 128>}, {transform_indices = @transform_3, window_bounds = array<i64: 32, 128>}, {pipeline_mode = #tpu.pipeline_mode<synchronous>, transform_indices = @transform_4, window_bounds = array<i64: 1, 128>}, {pipeline_mode = #tpu.pipeline_mode<synchronous>, transform_indices = @transform_5, window_bounds = array<i64: 1, 128>}, {transform_indices = @transform_6, window_bounds = array<i64: 32, 128>}]} {
    %c0_i32 = arith.constant 0 : i32
    %0 = arith.cmpi eq, %arg1, %c0_i32 : i32
    %1 = arith.extui %0 : i1 to i32
    %c0_i32_0 = arith.constant 0 : i32
    %2 = arith.cmpi ne, %1, %c0_i32_0 : i32
    scf.if %2 {
      %cst_10 = arith.constant 0.000000e+00 : f32
      %12 = vector.broadcast %cst_10 : f32 to vector<32x128xf32>
      %c0_11 = arith.constant 0 : index
      %c0_12 = arith.constant 0 : index
      %13 = vector.load %arg9[%c0_11, %c0_12] : memref<32x128xf32, #tpu.memory_space<vmem>>, vector<32x128xf32>
      tpu.vector_store %arg9[%c0_11, %c0_12], %12 {strides = array<i32>} : memref<32x128xf32, #tpu.memory_space<vmem>>, vector<32x128xf32>,
    } else {
    }
    %c0 = arith.constant 0 : index
    %c0_1 = arith.constant 0 : index
    %3 = vector.load %arg9[%c0, %c0_1] : memref<32x128xf32, #tpu.memory_space<vmem>>, vector<32x128xf32>
    %c0_2 = arith.constant 0 : index
    %c0_3 = arith.constant 0 : index
    %4 = vector.load %arg2[%c0_2, %c0_3] : memref<32x128xbf16, #tpu.memory_space<vmem>>, vector<32x128xbf16>
    %c0_4 = arith.constant 0 : index
    %c0_5 = arith.constant 0 : index
    %5 = vector.load %arg3[%c0_4, %c0_5] : memref<128x128xbf16, #tpu.memory_space<vmem>>, vector<128x128xbf16>
    %cst = arith.constant dense<0.000000e+00> : vector<32x128xf32>
    %6 = tpu.matmul %4, %5, %cst {dimension_numbers = #tpu.dot_dimension_numbers<[1], [0], [0], [1], [0, 0, 1, 1], [], []>} : vector<32x128xbf16>, vector<128x128xbf16>, vector<32x128xf32> -> vector<32x128xf32>
    %7 = arith.addf %3, %6 : vector<32x128xf32>
    %c0_6 = arith.constant 0 : index
    %c0_7 = arith.constant 0 : index
    %8 = vector.load %arg9[%c0_6, %c0_7] : memref<32x128xf32, #tpu.memory_space<vmem>>, vector<32x128xf32>
    tpu.vector_store %arg9[%c0_6, %c0_7], %7 {strides = array<i32>} : memref<32x128xf32, #tpu.memory_space<vmem>>, vector<32x128xf32>,
    %c0_i32_8 = arith.constant 0 : i32
    %9 = arith.cmpi eq, %arg1, %c0_i32_8 : i32
    %10 = arith.extui %9 : i1 to i32
    %c0_i32_9 = arith.constant 0 : i32
    %11 = arith.cmpi ne, %10, %c0_i32_9 : i32
    scf.if %11 {
      %c0_10 = arith.constant 0 : index
      %c0_11 = arith.constant 0 : index
      %12 = vector.load %arg9[%c0_10, %c0_11] : memref<32x128xf32, #tpu.memory_space<vmem>>, vector<32x128xf32>
      %c0_12 = arith.constant 0 : index
      %c0_13 = arith.constant 0 : index
      %13 = vector.load %arg4[%c0_12, %c0_13] : memref<1x128xf32, #tpu.memory_space<vmem>>, vector<1x128xf32>
      %14 = vector.broadcast %13 : vector<1x128xf32> to vector<32x128xf32>
      %15 = arith.addf %12, %14 : vector<32x128xf32>
      %c0_14 = arith.constant 0 : index
      %c0_15 = arith.constant 0 : index
      %16 = vector.load %arg5[%c0_14, %c0_15] : memref<32x128xbf16, #tpu.memory_space<vmem>>, vector<32x128xbf16>
      %17 = arith.extf %16 : vector<32x128xbf16> to vector<32x128xf32>
      %18 = arith.addf %15, %17 : vector<32x128xf32>
      %cst_16 = arith.constant dense<0.000000e+00> : vector<32xf32>
      %19 = vector.multi_reduction <add>, %18, %cst_16 [1] : vector<32x128xf32> to vector<32xf32>
      %20 = vector.shape_cast %19 : vector<32xf32> to vector<32x1xf32>
      %cst_17 = arith.constant 1.280000e+02 : f32
      %21 = vector.broadcast %cst_17 : f32 to vector<32x1xf32>
      %22 = arith.divf %20, %21 : vector<32x1xf32>
      %23 = vector.broadcast %22 : vector<32x1xf32> to vector<32x128xf32>
      %24 = arith.subf %18, %23 : vector<32x128xf32>
      %25 = arith.mulf %24, %24 : vector<32x128xf32>
      %cst_18 = arith.constant dense<0.000000e+00> : vector<32xf32>
      %26 = vector.multi_reduction <add>, %25, %cst_18 [1] : vector<32x128xf32> to vector<32xf32>
      %27 = vector.shape_cast %26 : vector<32xf32> to vector<32x1xf32>
      %cst_19 = arith.constant 1.280000e+02 : f32
      %28 = vector.broadcast %cst_19 : f32 to vector<32x1xf32>
      %29 = arith.divf %27, %28 : vector<32x1xf32>
      %cst_20 = arith.constant 9.99999996E-13 : f32
      %30 = vector.broadcast %cst_20 : f32 to vector<32x1xf32>
      %31 = arith.addf %29, %30 : vector<32x1xf32>
      %32 = math.rsqrt %31 : vector<32x1xf32>
      %33 = vector.broadcast %32 : vector<32x1xf32> to vector<32x128xf32>
      %34 = arith.mulf %24, %33 : vector<32x128xf32>
      %c0_21 = arith.constant 0 : index
      %c0_22 = arith.constant 0 : index
      %35 = vector.load %arg6[%c0_21, %c0_22] : memref<1x128xf32, #tpu.memory_space<vmem>>, vector<1x128xf32>
      %36 = vector.broadcast %35 : vector<1x128xf32> to vector<32x128xf32>
      %37 = arith.mulf %34, %36 : vector<32x128xf32>
      %c0_23 = arith.constant 0 : index
      %c0_24 = arith.constant 0 : index
      %38 = vector.load %arg7[%c0_23, %c0_24] : memref<1x128xf32, #tpu.memory_space<vmem>>, vector<1x128xf32>
      %39 = vector.broadcast %38 : vector<1x128xf32> to vector<32x128xf32>
      %40 = arith.addf %37, %39 : vector<32x128xf32>
      %41 = arith.truncf %40 : vector<32x128xf32> to vector<32x128xbf16>
      %c0_25 = arith.constant 0 : index
      %c0_26 = arith.constant 0 : index
      %42 = vector.load %arg8[%c0_25, %c0_26] : memref<32x128xbf16, #tpu.memory_space<vmem>>, vector<32x128xbf16>
      tpu.vector_store %arg8[%c0_25, %c0_26], %41 {strides = array<i32>} : memref<32x128xbf16, #tpu.memory_space<vmem>>, vector<32x128xbf16>,
    } else {
    }
    return
  }
  func.func @transform_0(%arg0: i32, %arg1: i32) -> (i32, i32) {
    %c0_i32 = arith.constant 0 : i32
    return %arg0, %arg1 : i32, i32
  }
  func.func @transform_1(%arg0: i32, %arg1: i32) -> (i32, i32) {
    %c0_i32 = arith.constant 0 : i32
    %c0_i32_0 = arith.constant 0 : i32
    return %arg1, %c0_i32 : i32, i32
  }
  func.func @transform_2(%arg0: i32, %arg1: i32) -> (i32, i32) {
    %c0_i32 = arith.constant 0 : i32
    %c0_i32_0 = arith.constant 0 : i32
    %c0_i32_1 = arith.constant 0 : i32
    return %c0_i32, %c0_i32_0 : i32, i32
  }
  func.func @transform_3(%arg0: i32, %arg1: i32) -> (i32, i32) {
    %c0_i32 = arith.constant 0 : i32
    %c0_i32_0 = arith.constant 0 : i32
    return %arg0, %c0_i32 : i32, i32
  }
  func.func @transform_4(%arg0: i32, %arg1: i32) -> (i32, i32) {
    %c0_i32 = arith.constant 0 : i32
    %c0_i32_0 = arith.constant 0 : i32
    %c0_i32_1 = arith.constant 0 : i32
    return %c0_i32, %c0_i32_0 : i32, i32
  }
  func.func @transform_5(%arg0: i32, %arg1: i32) -> (i32, i32) {
    %c0_i32 = arith.constant 0 : i32
    %c0_i32_0 = arith.constant 0 : i32
    %c0_i32_1 = arith.constant 0 : i32
    return %c0_i32, %c0_i32_0 : i32, i32
  }
  func.func @transform_6(%arg0: i32, %arg1: i32) -> (i32, i32) {
    %c0_i32 = arith.constant 0 : i32
    %c0_i32_0 = arith.constant 0 : i32
    return %arg0, %c0_i32 : i32, i32
  }
}

module attributes {stable_mosaic.version = 11 : i64} {
  func.func @_mha_kernel(%arg0: i32, %arg1: i32, %arg2: memref<1x16x384xbf16, #tpu.memory_space<vmem>>, %arg3: memref<1x1x16xf32, #tpu.memory_space<vmem>>, %arg4: memref<1x16x128xbf16, #tpu.memory_space<vmem>>) attributes {dimension_semantics = [#tpu.dimension_semantics<parallel>, #tpu.dimension_semantics<parallel>], iteration_bounds = array<i64: 2, 1>, scalar_prefetch = 0 : i64, scratch_operands = 0 : i64, tpu.core_type = #tpu.core_type<tc>, window_params = [{transform_indices = @transform_0, window_bounds = array<i64: 1, 16, 384>}, {transform_indices = @transform_1, window_bounds = array<i64: 1, 1, 16>}, {transform_indices = @transform_2, window_bounds = array<i64: 1, 16, 128>}]} {
    %c0 = arith.constant 0 : index
    %c0_0 = arith.constant 0 : index
    %c0_1 = arith.constant 0 : index
    %0 = vector.load %arg2[%c0, %c0_0, %c0_1] : memref<1x16x384xbf16, #tpu.memory_space<vmem>>, vector<1x16x384xbf16>
    %1 = vector.shape_cast %0 : vector<1x16x384xbf16> to vector<16x384xbf16>
    %2 = vector.extract_strided_slice %1 {offsets = [0, 0], sizes = [16, 128], strides = [1, 1]} : vector<16x384xbf16> to vector<16x128xbf16>
    %3 = vector.extract_strided_slice %1 {offsets = [0, 128], sizes = [16, 128], strides = [1, 1]} : vector<16x384xbf16> to vector<16x128xbf16>
    %4 = vector.extract_strided_slice %1 {offsets = [0, 256], sizes = [16, 128], strides = [1, 1]} : vector<16x384xbf16> to vector<16x128xbf16>
    %c0_2 = arith.constant 0 : index
    %c0_3 = arith.constant 0 : index
    %c0_4 = arith.constant 0 : index
    %5 = vector.load %arg3[%c0_2, %c0_3, %c0_4] : memref<1x1x16xf32, #tpu.memory_space<vmem>>, vector<1x1x16xf32>
    %6 = vector.shape_cast %5 : vector<1x1x16xf32> to vector<1x16xf32>
    %7 = vector.extract_strided_slice %2 {offsets = [0, 0], sizes = [16, 64], strides = [1, 1]} : vector<16x128xbf16> to vector<16x64xbf16>
    %8 = vector.extract_strided_slice %3 {offsets = [0, 0], sizes = [16, 64], strides = [1, 1]} : vector<16x128xbf16> to vector<16x64xbf16>
    %cst = arith.constant dense<0.000000e+00> : vector<16x16xf32>
    %9 = tpu.matmul %7, %8, %cst {dimension_numbers = #tpu.dot_dimension_numbers<[1], [1], [0], [0], [0, 0, 1, 0], [], []>} : vector<16x64xbf16>, vector<16x64xbf16>, vector<16x16xf32> -> vector<16x16xf32>
    %cst_5 = arith.constant 1.250000e-01 : f32
    %10 = vector.broadcast %cst_5 : f32 to vector<16x16xf32>
    %11 = arith.mulf %9, %10 : vector<16x16xf32>
    %12 = vector.broadcast %6 : vector<1x16xf32> to vector<16x16xf32>
    %13 = arith.addf %11, %12 : vector<16x16xf32>
    %cst_6 = arith.constant dense<0xFF800000> : vector<16xf32>
    %14 = vector.multi_reduction <maximumf>, %13, %cst_6 [1] : vector<16x16xf32> to vector<16xf32>
    %15 = vector.shape_cast %14 : vector<16xf32> to vector<16x1xf32>
    %16 = vector.broadcast %15 : vector<16x1xf32> to vector<16x16xf32>
    %17 = arith.subf %13, %16 : vector<16x16xf32>
    %18 = math.exp %17 : vector<16x16xf32>
    %cst_7 = arith.constant dense<0.000000e+00> : vector<16xf32>
    %19 = vector.multi_reduction <add>, %18, %cst_7 [1] : vector<16x16xf32> to vector<16xf32>
    %20 = vector.shape_cast %19 : vector<16xf32> to vector<16x1xf32>
    %21 = tpu.reciprocal %20 {approx = true} : vector<16x1xf32> -> vector<16x1xf32>
    %22 = vector.broadcast %21 : vector<16x1xf32> to vector<16x16xf32>
    %23 = arith.mulf %18, %22 : vector<16x16xf32>
    %24 = arith.truncf %23 : vector<16x16xf32> to vector<16x16xbf16>
    %25 = vector.extract_strided_slice %4 {offsets = [0, 0], sizes = [16, 64], strides = [1, 1]} : vector<16x128xbf16> to vector<16x64xbf16>
    %cst_8 = arith.constant dense<0.000000e+00> : vector<16x64xf32>
    %26 = tpu.matmul %24, %25, %cst_8 {dimension_numbers = #tpu.dot_dimension_numbers<[1], [0], [0], [1], [0, 0, 1, 1], [], []>} : vector<16x16xbf16>, vector<16x64xbf16>, vector<16x64xf32> -> vector<16x64xf32>
    %27 = vector.extract_strided_slice %2 {offsets = [0, 64], sizes = [16, 64], strides = [1, 1]} : vector<16x128xbf16> to vector<16x64xbf16>
    %28 = vector.extract_strided_slice %3 {offsets = [0, 64], sizes = [16, 64], strides = [1, 1]} : vector<16x128xbf16> to vector<16x64xbf16>
    %cst_9 = arith.constant dense<0.000000e+00> : vector<16x16xf32>
    %29 = tpu.matmul %27, %28, %cst_9 {dimension_numbers = #tpu.dot_dimension_numbers<[1], [1], [0], [0], [0, 0, 1, 0], [], []>} : vector<16x64xbf16>, vector<16x64xbf16>, vector<16x16xf32> -> vector<16x16xf32>
    %cst_10 = arith.constant 1.250000e-01 : f32
    %30 = vector.broadcast %cst_10 : f32 to vector<16x16xf32>
    %31 = arith.mulf %29, %30 : vector<16x16xf32>
    %32 = vector.broadcast %6 : vector<1x16xf32> to vector<16x16xf32>
    %33 = arith.addf %31, %32 : vector<16x16xf32>
    %cst_11 = arith.constant dense<0xFF800000> : vector<16xf32>
    %34 = vector.multi_reduction <maximumf>, %33, %cst_11 [1] : vector<16x16xf32> to vector<16xf32>
    %35 = vector.shape_cast %34 : vector<16xf32> to vector<16x1xf32>
    %36 = vector.broadcast %35 : vector<16x1xf32> to vector<16x16xf32>
    %37 = arith.subf %33, %36 : vector<16x16xf32>
    %38 = math.exp %37 : vector<16x16xf32>
    %cst_12 = arith.constant dense<0.000000e+00> : vector<16xf32>
    %39 = vector.multi_reduction <add>, %38, %cst_12 [1] : vector<16x16xf32> to vector<16xf32>
    %40 = vector.shape_cast %39 : vector<16xf32> to vector<16x1xf32>
    %41 = tpu.reciprocal %40 {approx = true} : vector<16x1xf32> -> vector<16x1xf32>
    %42 = vector.broadcast %41 : vector<16x1xf32> to vector<16x16xf32>
    %43 = arith.mulf %38, %42 : vector<16x16xf32>
    %44 = arith.truncf %43 : vector<16x16xf32> to vector<16x16xbf16>
    %45 = vector.extract_strided_slice %4 {offsets = [0, 64], sizes = [16, 64], strides = [1, 1]} : vector<16x128xbf16> to vector<16x64xbf16>
    %cst_13 = arith.constant dense<0.000000e+00> : vector<16x64xf32>
    %46 = tpu.matmul %44, %45, %cst_13 {dimension_numbers = #tpu.dot_dimension_numbers<[1], [0], [0], [1], [0, 0, 1, 1], [], []>} : vector<16x16xbf16>, vector<16x64xbf16>, vector<16x64xf32> -> vector<16x64xf32>
    %47 = tpu.concatenate %26, %46 in 1 : vector<16x64xf32>, vector<16x64xf32> -> vector<16x128xf32>
    %48 = arith.truncf %47 : vector<16x128xf32> to vector<16x128xbf16>
    %c0_14 = arith.constant 0 : index
    %c0_15 = arith.constant 0 : index
    %c0_16 = arith.constant 0 : index
    %49 = vector.load %arg4[%c0_14, %c0_15, %c0_16] : memref<1x16x128xbf16, #tpu.memory_space<vmem>>, vector<1x16x128xbf16>
    %50 = vector.shape_cast %49 : vector<1x16x128xbf16> to vector<16x128xbf16>
    %51 = vector.shape_cast %48 : vector<16x128xbf16> to vector<1x16x128xbf16>
    tpu.vector_store %arg4[%c0_14, %c0_15, %c0_16], %51 {strides = array<i32>} : memref<1x16x128xbf16, #tpu.memory_space<vmem>>, vector<1x16x128xbf16>,
    return
  }
  func.func @transform_0(%arg0: i32, %arg1: i32) -> (i32, i32, i32) {
    %c0_i32 = arith.constant 0 : i32
    %c0_i32_0 = arith.constant 0 : i32
    return %arg0, %c0_i32, %arg1 : i32, i32, i32
  }
  func.func @transform_1(%arg0: i32, %arg1: i32) -> (i32, i32, i32) {
    %c0_i32 = arith.constant 0 : i32
    %c0_i32_0 = arith.constant 0 : i32
    %c0_i32_1 = arith.constant 0 : i32
    return %arg0, %c0_i32, %c0_i32_0 : i32, i32, i32
  }
  func.func @transform_2(%arg0: i32, %arg1: i32) -> (i32, i32, i32) {
    %c0_i32 = arith.constant 0 : i32
    %c0_i32_0 = arith.constant 0 : i32
    return %arg0, %c0_i32, %arg1 : i32, i32, i32
  }
}

module attributes {stable_mosaic.version = 11 : i64} {
  func.func @_linear_kernel(%arg0: i32, %arg1: i32, %arg2: i32, %arg3: memref<32x128xbf16, #tpu.memory_space<vmem>>, %arg4: memref<128x384xbf16, #tpu.memory_space<vmem>>, %arg5: memref<1x384xf32, #tpu.memory_space<vmem>>, %arg6: memref<32x384xbf16, #tpu.memory_space<vmem>>, %arg7: memref<32x384xf32, #tpu.memory_space<vmem>>) attributes {dimension_semantics = [#tpu.dimension_semantics<parallel>, #tpu.dimension_semantics<parallel>, #tpu.dimension_semantics<arbitrary>], iteration_bounds = array<i64: 1, 1, 1>, scalar_prefetch = 0 : i64, scratch_operands = 1 : i64, tpu.core_type = #tpu.core_type<tc>, window_params = [{transform_indices = @transform_0, window_bounds = array<i64: 32, 128>}, {transform_indices = @transform_1, window_bounds = array<i64: 128, 384>}, {transform_indices = @transform_2, window_bounds = array<i64: 1, 384>}, {transform_indices = @transform_3, window_bounds = array<i64: 32, 384>}]} {
    %c0_i32 = arith.constant 0 : i32
    %0 = arith.cmpi eq, %arg2, %c0_i32 : i32
    %1 = arith.extui %0 : i1 to i32
    %c0_i32_0 = arith.constant 0 : i32
    %2 = arith.cmpi ne, %1, %c0_i32_0 : i32
    scf.if %2 {
      %cst_10 = arith.constant 0.000000e+00 : f32
      %12 = vector.broadcast %cst_10 : f32 to vector<32x384xf32>
      %c0_11 = arith.constant 0 : index
      %c0_12 = arith.constant 0 : index
      %13 = vector.load %arg7[%c0_11, %c0_12] : memref<32x384xf32, #tpu.memory_space<vmem>>, vector<32x384xf32>
      tpu.vector_store %arg7[%c0_11, %c0_12], %12 {strides = array<i32>} : memref<32x384xf32, #tpu.memory_space<vmem>>, vector<32x384xf32>,
    } else {
    }
    %c0 = arith.constant 0 : index
    %c0_1 = arith.constant 0 : index
    %3 = vector.load %arg7[%c0, %c0_1] : memref<32x384xf32, #tpu.memory_space<vmem>>, vector<32x384xf32>
    %c0_2 = arith.constant 0 : index
    %c0_3 = arith.constant 0 : index
    %4 = vector.load %arg3[%c0_2, %c0_3] : memref<32x128xbf16, #tpu.memory_space<vmem>>, vector<32x128xbf16>
    %c0_4 = arith.constant 0 : index
    %c0_5 = arith.constant 0 : index
    %5 = vector.load %arg4[%c0_4, %c0_5] : memref<128x384xbf16, #tpu.memory_space<vmem>>, vector<128x384xbf16>
    %cst = arith.constant dense<0.000000e+00> : vector<32x384xf32>
    %6 = tpu.matmul %4, %5, %cst {dimension_numbers = #tpu.dot_dimension_numbers<[1], [0], [0], [1], [0, 0, 1, 1], [], []>} : vector<32x128xbf16>, vector<128x384xbf16>, vector<32x384xf32> -> vector<32x384xf32>
    %7 = arith.addf %3, %6 : vector<32x384xf32>
    %c0_6 = arith.constant 0 : index
    %c0_7 = arith.constant 0 : index
    %8 = vector.load %arg7[%c0_6, %c0_7] : memref<32x384xf32, #tpu.memory_space<vmem>>, vector<32x384xf32>
    tpu.vector_store %arg7[%c0_6, %c0_7], %7 {strides = array<i32>} : memref<32x384xf32, #tpu.memory_space<vmem>>, vector<32x384xf32>,
    %c0_i32_8 = arith.constant 0 : i32
    %9 = arith.cmpi eq, %arg2, %c0_i32_8 : i32
    %10 = arith.extui %9 : i1 to i32
    %c0_i32_9 = arith.constant 0 : i32
    %11 = arith.cmpi ne, %10, %c0_i32_9 : i32
    scf.if %11 {
      %c0_10 = arith.constant 0 : index
      %c0_11 = arith.constant 0 : index
      %12 = vector.load %arg7[%c0_10, %c0_11] : memref<32x384xf32, #tpu.memory_space<vmem>>, vector<32x384xf32>
      %c0_12 = arith.constant 0 : index
      %c0_13 = arith.constant 0 : index
      %13 = vector.load %arg5[%c0_12, %c0_13] : memref<1x384xf32, #tpu.memory_space<vmem>>, vector<1x384xf32>
      %14 = vector.broadcast %13 : vector<1x384xf32> to vector<32x384xf32>
      %15 = arith.addf %12, %14 : vector<32x384xf32>
      %16 = arith.truncf %15 : vector<32x384xf32> to vector<32x384xbf16>
      %c0_14 = arith.constant 0 : index
      %c0_15 = arith.constant 0 : index
      %17 = vector.load %arg6[%c0_14, %c0_15] : memref<32x384xbf16, #tpu.memory_space<vmem>>, vector<32x384xbf16>
      tpu.vector_store %arg6[%c0_14, %c0_15], %16 {strides = array<i32>} : memref<32x384xbf16, #tpu.memory_space<vmem>>, vector<32x384xbf16>,
    } else {
    }
    return
  }
  func.func @transform_0(%arg0: i32, %arg1: i32, %arg2: i32) -> (i32, i32) {
    %c0_i32 = arith.constant 0 : i32
    return %arg0, %arg2 : i32, i32
  }
  func.func @transform_1(%arg0: i32, %arg1: i32, %arg2: i32) -> (i32, i32) {
    %c0_i32 = arith.constant 0 : i32
    return %arg2, %arg1 : i32, i32
  }
  func.func @transform_2(%arg0: i32, %arg1: i32, %arg2: i32) -> (i32, i32) {
    %c0_i32 = arith.constant 0 : i32
    %c0_i32_0 = arith.constant 0 : i32
    return %c0_i32, %arg1 : i32, i32
  }
  func.func @transform_3(%arg0: i32, %arg1: i32, %arg2: i32) -> (i32, i32) {
    %c0_i32 = arith.constant 0 : i32
    return %arg0, %arg1 : i32, i32
  }
}

module attributes {stable_mosaic.version = 11 : i64} {
  func.func @_ffn_res_ln_kernel(%arg0: i32, %arg1: i32, %arg2: memref<32x128xbf16, #tpu.memory_space<vmem>>, %arg3: memref<128x512xbf16, #tpu.memory_space<vmem>>, %arg4: memref<1x512xf32, #tpu.memory_space<vmem>>, %arg5: memref<512x128xbf16, #tpu.memory_space<vmem>>, %arg6: memref<1x128xf32, #tpu.memory_space<vmem>>, %arg7: memref<32x128xbf16, #tpu.memory_space<vmem>>, %arg8: memref<1x128xf32, #tpu.memory_space<vmem>>, %arg9: memref<1x128xf32, #tpu.memory_space<vmem>>, %arg10: memref<32x128xbf16, #tpu.memory_space<vmem>>, %arg11: memref<32x128xf32, #tpu.memory_space<vmem>>) attributes {dimension_semantics = [#tpu.dimension_semantics<parallel>, #tpu.dimension_semantics<arbitrary>], iteration_bounds = array<i64: 1, 1>, scalar_prefetch = 0 : i64, scratch_operands = 1 : i64, tpu.core_type = #tpu.core_type<tc>, window_params = [{transform_indices = @transform_0, window_bounds = array<i64: 32, 128>}, {transform_indices = @transform_1, window_bounds = array<i64: 128, 512>}, {transform_indices = @transform_2, window_bounds = array<i64: 1, 512>}, {transform_indices = @transform_3, window_bounds = array<i64: 512, 128>}, {pipeline_mode = #tpu.pipeline_mode<synchronous>, transform_indices = @transform_4, window_bounds = array<i64: 1, 128>}, {transform_indices = @transform_5, window_bounds = array<i64: 32, 128>}, {pipeline_mode = #tpu.pipeline_mode<synchronous>, transform_indices = @transform_6, window_bounds = array<i64: 1, 128>}, {pipeline_mode = #tpu.pipeline_mode<synchronous>, transform_indices = @transform_7, window_bounds = array<i64: 1, 128>}, {transform_indices = @transform_8, window_bounds = array<i64: 32, 128>}]} {
    %c0_i32 = arith.constant 0 : i32
    %0 = arith.cmpi eq, %arg1, %c0_i32 : i32
    %1 = arith.extui %0 : i1 to i32
    %c0_i32_0 = arith.constant 0 : i32
    %2 = arith.cmpi ne, %1, %c0_i32_0 : i32
    scf.if %2 {
      %cst_17 = arith.constant 0.000000e+00 : f32
      %26 = vector.broadcast %cst_17 : f32 to vector<32x128xf32>
      %c0_18 = arith.constant 0 : index
      %c0_19 = arith.constant 0 : index
      %27 = vector.load %arg11[%c0_18, %c0_19] : memref<32x128xf32, #tpu.memory_space<vmem>>, vector<32x128xf32>
      tpu.vector_store %arg11[%c0_18, %c0_19], %26 {strides = array<i32>} : memref<32x128xf32, #tpu.memory_space<vmem>>, vector<32x128xf32>,
    } else {
    }
    %c0 = arith.constant 0 : index
    %c0_1 = arith.constant 0 : index
    %3 = vector.load %arg2[%c0, %c0_1] : memref<32x128xbf16, #tpu.memory_space<vmem>>, vector<32x128xbf16>
    %c0_2 = arith.constant 0 : index
    %c0_3 = arith.constant 0 : index
    %4 = vector.load %arg3[%c0_2, %c0_3] : memref<128x512xbf16, #tpu.memory_space<vmem>>, vector<128x512xbf16>
    %cst = arith.constant dense<0.000000e+00> : vector<32x512xf32>
    %5 = tpu.matmul %3, %4, %cst {dimension_numbers = #tpu.dot_dimension_numbers<[1], [0], [0], [1], [0, 0, 1, 1], [], []>} : vector<32x128xbf16>, vector<128x512xbf16>, vector<32x512xf32> -> vector<32x512xf32>
    %c0_4 = arith.constant 0 : index
    %c0_5 = arith.constant 0 : index
    %6 = vector.load %arg4[%c0_4, %c0_5] : memref<1x512xf32, #tpu.memory_space<vmem>>, vector<1x512xf32>
    %7 = vector.broadcast %6 : vector<1x512xf32> to vector<32x512xf32>
    %8 = arith.addf %5, %7 : vector<32x512xf32>
    %cst_6 = arith.constant 1.702000e+00 : f32
    %9 = vector.broadcast %cst_6 : f32 to vector<32x512xf32>
    %10 = arith.mulf %9, %8 : vector<32x512xf32>
    %11 = arith.negf %10 : vector<32x512xf32>
    %12 = math.exp %11 : vector<32x512xf32>
    %cst_7 = arith.constant 1.000000e+00 : f32
    %13 = vector.broadcast %cst_7 : f32 to vector<32x512xf32>
    %14 = arith.addf %13, %12 : vector<32x512xf32>
    %15 = arith.divf %13, %14 : vector<32x512xf32>
    %16 = arith.mulf %8, %15 : vector<32x512xf32>
    %c0_8 = arith.constant 0 : index
    %c0_9 = arith.constant 0 : index
    %17 = vector.load %arg11[%c0_8, %c0_9] : memref<32x128xf32, #tpu.memory_space<vmem>>, vector<32x128xf32>
    %18 = arith.truncf %16 : vector<32x512xf32> to vector<32x512xbf16>
    %c0_10 = arith.constant 0 : index
    %c0_11 = arith.constant 0 : index
    %19 = vector.load %arg5[%c0_10, %c0_11] : memref<512x128xbf16, #tpu.memory_space<vmem>>, vector<512x128xbf16>
    %cst_12 = arith.constant dense<0.000000e+00> : vector<32x128xf32>
    %20 = tpu.matmul %18, %19, %cst_12 {dimension_numbers = #tpu.dot_dimension_numbers<[1], [0], [0], [1], [0, 0, 1, 1], [], []>} : vector<32x512xbf16>, vector<512x128xbf16>, vector<32x128xf32> -> vector<32x128xf32>
    %21 = arith.addf %17, %20 : vector<32x128xf32>
    %c0_13 = arith.constant 0 : index
    %c0_14 = arith.constant 0 : index
    %22 = vector.load %arg11[%c0_13, %c0_14] : memref<32x128xf32, #tpu.memory_space<vmem>>, vector<32x128xf32>
    tpu.vector_store %arg11[%c0_13, %c0_14], %21 {strides = array<i32>} : memref<32x128xf32, #tpu.memory_space<vmem>>, vector<32x128xf32>,
    %c0_i32_15 = arith.constant 0 : i32
    %23 = arith.cmpi eq, %arg1, %c0_i32_15 : i32
    %24 = arith.extui %23 : i1 to i32
    %c0_i32_16 = arith.constant 0 : i32
    %25 = arith.cmpi ne, %24, %c0_i32_16 : i32
    scf.if %25 {
      %c0_17 = arith.constant 0 : index
      %c0_18 = arith.constant 0 : index
      %26 = vector.load %arg11[%c0_17, %c0_18] : memref<32x128xf32, #tpu.memory_space<vmem>>, vector<32x128xf32>
      %c0_19 = arith.constant 0 : index
      %c0_20 = arith.constant 0 : index
      %27 = vector.load %arg6[%c0_19, %c0_20] : memref<1x128xf32, #tpu.memory_space<vmem>>, vector<1x128xf32>
      %28 = vector.broadcast %27 : vector<1x128xf32> to vector<32x128xf32>
      %29 = arith.addf %26, %28 : vector<32x128xf32>
      %c0_21 = arith.constant 0 : index
      %c0_22 = arith.constant 0 : index
      %30 = vector.load %arg7[%c0_21, %c0_22] : memref<32x128xbf16, #tpu.memory_space<vmem>>, vector<32x128xbf16>
      %31 = arith.extf %30 : vector<32x128xbf16> to vector<32x128xf32>
      %32 = arith.addf %29, %31 : vector<32x128xf32>
      %cst_23 = arith.constant dense<0.000000e+00> : vector<32xf32>
      %33 = vector.multi_reduction <add>, %32, %cst_23 [1] : vector<32x128xf32> to vector<32xf32>
      %34 = vector.shape_cast %33 : vector<32xf32> to vector<32x1xf32>
      %cst_24 = arith.constant 1.280000e+02 : f32
      %35 = vector.broadcast %cst_24 : f32 to vector<32x1xf32>
      %36 = arith.divf %34, %35 : vector<32x1xf32>
      %37 = vector.broadcast %36 : vector<32x1xf32> to vector<32x128xf32>
      %38 = arith.subf %32, %37 : vector<32x128xf32>
      %39 = arith.mulf %38, %38 : vector<32x128xf32>
      %cst_25 = arith.constant dense<0.000000e+00> : vector<32xf32>
      %40 = vector.multi_reduction <add>, %39, %cst_25 [1] : vector<32x128xf32> to vector<32xf32>
      %41 = vector.shape_cast %40 : vector<32xf32> to vector<32x1xf32>
      %cst_26 = arith.constant 1.280000e+02 : f32
      %42 = vector.broadcast %cst_26 : f32 to vector<32x1xf32>
      %43 = arith.divf %41, %42 : vector<32x1xf32>
      %cst_27 = arith.constant 9.99999996E-13 : f32
      %44 = vector.broadcast %cst_27 : f32 to vector<32x1xf32>
      %45 = arith.addf %43, %44 : vector<32x1xf32>
      %46 = math.rsqrt %45 : vector<32x1xf32>
      %47 = vector.broadcast %46 : vector<32x1xf32> to vector<32x128xf32>
      %48 = arith.mulf %38, %47 : vector<32x128xf32>
      %c0_28 = arith.constant 0 : index
      %c0_29 = arith.constant 0 : index
      %49 = vector.load %arg8[%c0_28, %c0_29] : memref<1x128xf32, #tpu.memory_space<vmem>>, vector<1x128xf32>
      %50 = vector.broadcast %49 : vector<1x128xf32> to vector<32x128xf32>
      %51 = arith.mulf %48, %50 : vector<32x128xf32>
      %c0_30 = arith.constant 0 : index
      %c0_31 = arith.constant 0 : index
      %52 = vector.load %arg9[%c0_30, %c0_31] : memref<1x128xf32, #tpu.memory_space<vmem>>, vector<1x128xf32>
      %53 = vector.broadcast %52 : vector<1x128xf32> to vector<32x128xf32>
      %54 = arith.addf %51, %53 : vector<32x128xf32>
      %55 = arith.truncf %54 : vector<32x128xf32> to vector<32x128xbf16>
      %c0_32 = arith.constant 0 : index
      %c0_33 = arith.constant 0 : index
      %56 = vector.load %arg10[%c0_32, %c0_33] : memref<32x128xbf16, #tpu.memory_space<vmem>>, vector<32x128xbf16>
      tpu.vector_store %arg10[%c0_32, %c0_33], %55 {strides = array<i32>} : memref<32x128xbf16, #tpu.memory_space<vmem>>, vector<32x128xbf16>,
    } else {
    }
    return
  }
  func.func @transform_0(%arg0: i32, %arg1: i32) -> (i32, i32) {
    %c0_i32 = arith.constant 0 : i32
    %c0_i32_0 = arith.constant 0 : i32
    return %arg0, %c0_i32 : i32, i32
  }
  func.func @transform_1(%arg0: i32, %arg1: i32) -> (i32, i32) {
    %c0_i32 = arith.constant 0 : i32
    %c0_i32_0 = arith.constant 0 : i32
    return %c0_i32, %arg1 : i32, i32
  }
  func.func @transform_2(%arg0: i32, %arg1: i32) -> (i32, i32) {
    %c0_i32 = arith.constant 0 : i32
    %c0_i32_0 = arith.constant 0 : i32
    return %c0_i32, %arg1 : i32, i32
  }
  func.func @transform_3(%arg0: i32, %arg1: i32) -> (i32, i32) {
    %c0_i32 = arith.constant 0 : i32
    %c0_i32_0 = arith.constant 0 : i32
    return %arg1, %c0_i32 : i32, i32
  }
  func.func @transform_4(%arg0: i32, %arg1: i32) -> (i32, i32) {
    %c0_i32 = arith.constant 0 : i32
    %c0_i32_0 = arith.constant 0 : i32
    %c0_i32_1 = arith.constant 0 : i32
    return %c0_i32, %c0_i32_0 : i32, i32
  }
  func.func @transform_5(%arg0: i32, %arg1: i32) -> (i32, i32) {
    %c0_i32 = arith.constant 0 : i32
    %c0_i32_0 = arith.constant 0 : i32
    return %arg0, %c0_i32 : i32, i32
  }
  func.func @transform_6(%arg0: i32, %arg1: i32) -> (i32, i32) {
    %c0_i32 = arith.constant 0 : i32
    %c0_i32_0 = arith.constant 0 : i32
    %c0_i32_1 = arith.constant 0 : i32
    return %c0_i32, %c0_i32_0 : i32, i32
  }
  func.func @transform_7(%arg0: i32, %arg1: i32) -> (i32, i32) {
    %c0_i32 = arith.constant 0 : i32
    %c0_i32_0 = arith.constant 0 : i32
    %c0_i32_1 = arith.constant 0 : i32
    return %c0_i32, %c0_i32_0 : i32, i32
  }
  func.func @transform_8(%arg0: i32, %arg1: i32) -> (i32, i32) {
    %c0_i32 = arith.constant 0 : i32
    %c0_i32_0 = arith.constant 0 : i32
    return %arg0, %c0_i32 : i32, i32
  }
}

module attributes {stable_mosaic.version = 11 : i64} {
  func.func @_linear_kernel(%arg0: i32, %arg1: i32, %arg2: i32, %arg3: memref<32x128xbf16, #tpu.memory_space<vmem>>, %arg4: memref<128x128xbf16, #tpu.memory_space<vmem>>, %arg5: memref<1x128xf32, #tpu.memory_space<vmem>>, %arg6: memref<32x128xf32, #tpu.memory_space<vmem>>, %arg7: memref<32x128xf32, #tpu.memory_space<vmem>>) attributes {dimension_semantics = [#tpu.dimension_semantics<parallel>, #tpu.dimension_semantics<parallel>, #tpu.dimension_semantics<arbitrary>], iteration_bounds = array<i64: 1, 1, 1>, scalar_prefetch = 0 : i64, scratch_operands = 1 : i64, tpu.core_type = #tpu.core_type<tc>, window_params = [{transform_indices = @transform_0, window_bounds = array<i64: 32, 128>}, {transform_indices = @transform_1, window_bounds = array<i64: 128, 128>}, {transform_indices = @transform_2, window_bounds = array<i64: 1, 128>}, {transform_indices = @transform_3, window_bounds = array<i64: 32, 128>}]} {
    %c0_i32 = arith.constant 0 : i32
    %0 = arith.cmpi eq, %arg2, %c0_i32 : i32
    %1 = arith.extui %0 : i1 to i32
    %c0_i32_0 = arith.constant 0 : i32
    %2 = arith.cmpi ne, %1, %c0_i32_0 : i32
    scf.if %2 {
      %cst_10 = arith.constant 0.000000e+00 : f32
      %12 = vector.broadcast %cst_10 : f32 to vector<32x128xf32>
      %c0_11 = arith.constant 0 : index
      %c0_12 = arith.constant 0 : index
      %13 = vector.load %arg7[%c0_11, %c0_12] : memref<32x128xf32, #tpu.memory_space<vmem>>, vector<32x128xf32>
      tpu.vector_store %arg7[%c0_11, %c0_12], %12 {strides = array<i32>} : memref<32x128xf32, #tpu.memory_space<vmem>>, vector<32x128xf32>,
    } else {
    }
    %c0 = arith.constant 0 : index
    %c0_1 = arith.constant 0 : index
    %3 = vector.load %arg7[%c0, %c0_1] : memref<32x128xf32, #tpu.memory_space<vmem>>, vector<32x128xf32>
    %c0_2 = arith.constant 0 : index
    %c0_3 = arith.constant 0 : index
    %4 = vector.load %arg3[%c0_2, %c0_3] : memref<32x128xbf16, #tpu.memory_space<vmem>>, vector<32x128xbf16>
    %c0_4 = arith.constant 0 : index
    %c0_5 = arith.constant 0 : index
    %5 = vector.load %arg4[%c0_4, %c0_5] : memref<128x128xbf16, #tpu.memory_space<vmem>>, vector<128x128xbf16>
    %cst = arith.constant dense<0.000000e+00> : vector<32x128xf32>
    %6 = tpu.matmul %4, %5, %cst {dimension_numbers = #tpu.dot_dimension_numbers<[1], [0], [0], [1], [0, 0, 1, 1], [], []>} : vector<32x128xbf16>, vector<128x128xbf16>, vector<32x128xf32> -> vector<32x128xf32>
    %7 = arith.addf %3, %6 : vector<32x128xf32>
    %c0_6 = arith.constant 0 : index
    %c0_7 = arith.constant 0 : index
    %8 = vector.load %arg7[%c0_6, %c0_7] : memref<32x128xf32, #tpu.memory_space<vmem>>, vector<32x128xf32>
    tpu.vector_store %arg7[%c0_6, %c0_7], %7 {strides = array<i32>} : memref<32x128xf32, #tpu.memory_space<vmem>>, vector<32x128xf32>,
    %c0_i32_8 = arith.constant 0 : i32
    %9 = arith.cmpi eq, %arg2, %c0_i32_8 : i32
    %10 = arith.extui %9 : i1 to i32
    %c0_i32_9 = arith.constant 0 : i32
    %11 = arith.cmpi ne, %10, %c0_i32_9 : i32
    scf.if %11 {
      %c0_10 = arith.constant 0 : index
      %c0_11 = arith.constant 0 : index
      %12 = vector.load %arg7[%c0_10, %c0_11] : memref<32x128xf32, #tpu.memory_space<vmem>>, vector<32x128xf32>
      %c0_12 = arith.constant 0 : index
      %c0_13 = arith.constant 0 : index
      %13 = vector.load %arg5[%c0_12, %c0_13] : memref<1x128xf32, #tpu.memory_space<vmem>>, vector<1x128xf32>
      %14 = vector.broadcast %13 : vector<1x128xf32> to vector<32x128xf32>
      %15 = arith.addf %12, %14 : vector<32x128xf32>
      %c0_14 = arith.constant 0 : index
      %c0_15 = arith.constant 0 : index
      %16 = vector.load %arg6[%c0_14, %c0_15] : memref<32x128xf32, #tpu.memory_space<vmem>>, vector<32x128xf32>
      tpu.vector_store %arg6[%c0_14, %c0_15], %15 {strides = array<i32>} : memref<32x128xf32, #tpu.memory_space<vmem>>, vector<32x128xf32>,
    } else {
    }
    return
  }
  func.func @transform_0(%arg0: i32, %arg1: i32, %arg2: i32) -> (i32, i32) {
    %c0_i32 = arith.constant 0 : i32
    return %arg0, %arg2 : i32, i32
  }
  func.func @transform_1(%arg0: i32, %arg1: i32, %arg2: i32) -> (i32, i32) {
    %c0_i32 = arith.constant 0 : i32
    return %arg2, %arg1 : i32, i32
  }
  func.func @transform_2(%arg0: i32, %arg1: i32, %arg2: i32) -> (i32, i32) {
    %c0_i32 = arith.constant 0 : i32
    %c0_i32_0 = arith.constant 0 : i32
    return %c0_i32, %arg1 : i32, i32
  }
  func.func @transform_3(%arg0: i32, %arg1: i32, %arg2: i32) -> (i32, i32) {
    %c0_i32 = arith.constant 0 : i32
    return %arg0, %arg1 : i32, i32
  }
}

</mosaic_0001>

<llo_original>
// kernel: bert_mrc_ner_forward.10
$region0: #{bert_mrc_ner_forward.10}
  #allocation0 [shape = 'u32[]', space=smem, size = 0x4, offset = 0x4, fixed_abs, tag = 'smem constant byte address 0x4 - core index']
  #allocation1 [shape = 'u32[144,128]{1,0:T(1,128)}', space=vmem, size = 0x12000, scoped, tag = 'internal scratch']
  %s0 = inlined_call_operand.vmem [shape: f32[32,128], index: 0, kind: input, shape index: {}]
  %s1 = inlined_call_operand.vmem [shape: f32[1,128], index: 1, kind: input, shape index: {}]
  %s2 = inlined_call_operand.vmem [shape: f32[1,128], index: 2, kind: input, shape index: {}]
  %s3 = inlined_call_operand.vmem [shape: bf16[32,128], index: 3, kind: output, shape index: {}]
  %s4 = sld [smem:[#allocation0]]
  $region22: #{bert_mrc_ner_forward.10} parent=0
    _
  %s6 = ssub.s32 1, %s4
  %s7 = scalar_select 0, %s6, %s4
  // Predicated region
  $region2: #{bert_mrc_ner_forward.10} parent=0 // pred_check
    _
  $region3: #{bert_mrc_ner_forward.10} parent=0 // pred_check_branch
    %9 = sbr.rel (0) target = $region5
  $region4: #{bert_mrc_ner_forward.10} parent=0 // pred_region
    _
  $region5: #{bert_mrc_ner_forward.10} parent=0 // pred_fallthru
    _
  // Predicated region
  $region6: #{bert_mrc_ner_forward.10} parent=0 // pred_check
    _
  $region7: #{bert_mrc_ner_forward.10} parent=0 // pred_check_branch
    %11 = sbr.rel (0) target = $region9
  $region8: #{bert_mrc_ner_forward.10} parent=0 // pred_region
    _
  $region9: #{bert_mrc_ner_forward.10} parent=0 // pred_fallthru
    _
  // Predicated region
  $region10: #{bert_mrc_ner_forward.10} parent=0 // pred_check
    _
  $region11: #{bert_mrc_ner_forward.10} parent=0 // pred_check_branch
    %13 = sbr.rel (0) target = $region13
  $region12: #{bert_mrc_ner_forward.10} parent=0 // pred_region
    _
  $region13: #{bert_mrc_ner_forward.10} parent=0 // pred_fallthru
    _
  %v14 = vld [vmem:[%s0] sm:$0xff]
  %v15 = vld [vmem:[%s0 + $0x8] sm:$0xff]
  %v16 = vld [vmem:[%s0 + $0x10] sm:$0xff]
  %v17 = vld [vmem:[%s0 + $0x18] sm:$0xff]
  %18 = vadd.xlane.f32.xlu0 %v14
  %v19 = vpop.xlane.xlu0 %18
  %20 = vadd.xlane.f32.xlu0 %v15
  %v21 = vpop.xlane.xlu0 %20
  %22 = vadd.xlane.f32.xlu0 %v16
  %v23 = vpop.xlane.xlu0 %22
  %24 = vadd.xlane.f32.xlu0 %v17
  %v25 = vpop.xlane.xlu0 %24
  %v26 = vrcp.pop 128.0
  %v27 = vmul.f32 %v19, %v26
  %v28 = vmul.f32 %v21, %v26
  %v29 = vmul.f32 %v23, %v26
  %v30 = vmul.f32 %v25, %v26
  %v31 = vsub.f32 %v14, %v27
  %v32 = vsub.f32 %v15, %v28
  %v33 = vsub.f32 %v16, %v29
  %v34 = vsub.f32 %v17, %v30
  %v35 = vmul.f32 %v31, %v31
  %v36 = vmul.f32 %v32, %v32
  %v37 = vmul.f32 %v33, %v33
  %v38 = vmul.f32 %v34, %v34
  %39 = vadd.xlane.f32.xlu0 %v35
  %v40 = vpop.xlane.xlu0 %39
  %41 = vadd.xlane.f32.xlu0 %v36
  %v42 = vpop.xlane.xlu0 %41
  %43 = vadd.xlane.f32.xlu0 %v37
  %v44 = vpop.xlane.xlu0 %43
  %45 = vadd.xlane.f32.xlu0 %v38
  %v46 = vpop.xlane.xlu0 %45
  %v47 = vmul.f32 %v40, %v26
  %v48 = vmul.f32 %v42, %v26
  %v49 = vmul.f32 %v44, %v26
  %v50 = vmul.f32 %v46, %v26
  %v51 = vadd.f32 %v47, 1e-12
  %v52 = vadd.f32 %v48, 1e-12
  %v53 = vadd.f32 %v49, 1e-12
  %v54 = vadd.f32 %v50, 1e-12
  %v55 = vrsqrt.pop %v51
  %v56 = vrsqrt.pop %v52
  %v57 = vrsqrt.pop %v53
  %v58 = vrsqrt.pop %v54
  %v59 = vmul.f32 %v31, %v55
  %v60 = vmul.f32 %v32, %v56
  %v61 = vmul.f32 %v33, %v57
  %v62 = vmul.f32 %v34, %v58
  %v63 = vld [vmem:[%s1] sm:$0x1]
  %v65 = vlaneseq
  %v66 = vshrl.u32 %v65, 7
  %v67 = vsub.s32 0, %v66
  %v68 = vrot.slane %v63, %v67
  %v70 = vmul.f32 %v59, %v68
  %v71 = vmul.f32 %v60, %v68
  %v72 = vmul.f32 %v61, %v68
  %v73 = vmul.f32 %v62, %v68
  %v74 = vld [vmem:[%s2] sm:$0x1]
  %v76 = vlaneseq
  %v77 = vshrl.u32 %v76, 7
  %v78 = vsub.s32 0, %v77
  %v79 = vrot.slane %v74, %v78
  %v81 = vadd.f32 %v70, %v79
  %v82 = vadd.f32 %v71, %v79
  %v83 = vadd.f32 %v72, %v79
  %v84 = vadd.f32 %v73, %v79
  %v85 = vpack.c.bf16 %v82, %v81
  %v86 = vpack.c.bf16 %v84, %v83
  %v89 = vunpack.c.l.b16 %v85
  %v90 = vunpack.c.h.b16 %v85
  %v91 = vunpack.c.l.b16 %v86
  %v92 = vunpack.c.h.b16 %v86
  %v93 = vpack.c.b16 %v89, %v89
  %v94 = vpack.c.b16 %v90, %v90
  %v95 = vpack.c.b16 %v91, %v91
  %v96 = vpack.c.b16 %v92, %v92
  %101 = vst [vmem:[%s3] sm:$0xf] %v93
  %102 = vst [vmem:[%s3 + $0x4] sm:$0xf] %v94
  %103 = vst [vmem:[%s3 + $0x8] sm:$0xf] %v95
  %104 = vst [vmem:[%s3 + $0xc] sm:$0xf] %v96
  // Predicated region
  $region14: #{bert_mrc_ner_forward.10} parent=0 // pred_check
    _
  $region15: #{bert_mrc_ner_forward.10} parent=0 // pred_check_branch
    %106 = sbr.rel (0) target = $region17
  $region16: #{bert_mrc_ner_forward.10} parent=0 // pred_region
    _
  $region17: #{bert_mrc_ner_forward.10} parent=0 // pred_fallthru
    _
  // Predicated region
  $region18: #{bert_mrc_ner_forward.10} parent=0 // pred_check
    _
  $region19: #{bert_mrc_ner_forward.10} parent=0 // pred_check_branch
    %108 = sbr.rel (0) target = $region21
  $region20: #{bert_mrc_ner_forward.10} parent=0 // pred_region
    _
  $region21: #{bert_mrc_ner_forward.10} parent=0 // pred_fallthru
    _

// kernel: bert_mrc_ner_forward.12
$region0: #{bert_mrc_ner_forward.12}
  #allocation0 [shape = 'u32[]', space=smem, size = 0x4, offset = 0x4, fixed_abs, tag = 'smem constant byte address 0x4 - core index']
  #allocation1 [shape = 'u32[144,128]{1,0:T(1,128)}', space=vmem, size = 0x12000, scoped, tag = 'internal scratch']
  %s0 = inlined_call_operand.vmem [shape: bf16[2,16,384], index: 0, kind: input, shape index: {}]
  %s1 = inlined_call_operand.vmem [shape: f32[2,1,16], index: 1, kind: input, shape index: {}]
  %s2 = inlined_call_operand.vmem [shape: bf16[2,16,128], index: 2, kind: output, shape index: {}]
  %s3 = sld [smem:[#allocation0]]
  $region41: #{bert_mrc_ner_forward.12} parent=0
    _
  %s5 = ssub.s32 1, %s3
  %s6 = scalar_select 0, %s5, %s3
  loop: start=0, step=1, limit=4
  $region2: #{bert_mrc_ner_forward.12} parent=0 // loop_pre_header
    _
  $region3: #{bert_mrc_ner_forward.12} parent=0 // loop_header
    %s8 = sphi 0, %s12
    %p9 = scmp.ge.s32.totalorder %s8, 4
    %s15 = sphi 0, %s27
    %s16 = sphi 0, %s23
    %s17 = sphi 0, %s15
    %s18 = sphi 0, %s16
    %s19 = sphi 0, %s17
    %s20 = sphi 0, %s18
    %s32 = sphi 0, %s34
    %s35 = sphi 0, %s32
    %s36 = sphi 0, %s35
    %s52 = sphi 0, %s36
    %s58 = sphi 0, %s60
    %s61 = sphi 0, %s58
    %s62 = sphi 0, %s61
    %s78 = sphi 0, %s62
    %s86 = sphi 0, %s88
    %s89 = sphi 0, %s86
    %s90 = sphi 0, %s89
    %s106 = sphi 0, %s90
  $region4: #{bert_mrc_ner_forward.12} parent=0 // loop_header_branch
    %11 = sbr.rel (%p9) target = $region8
  $region5: #{bert_mrc_ner_forward.12} parent=0 // loop_body
    %s13 = ssub.s32 %s8, 1
    %s14 = ssub.s32 %s8, 2
    %s21 = sadd.s32 1, %s16
    %p22 = scmp.ge.s32.totalorder %s21, 1
    %s23 = scalar_select %p22, 0, %s21
    %s24 = sadd.s32 1, %s15
    %s25 = scalar_select %p22, %s24, %s15
    %p26 = scmp.ge.s32.totalorder %s25, 2
    %s27 = scalar_select %p26, 0, %s25
    %s28 = ssub.s32 %s15, %s27
    %s29 = ssub.s32 %s16, %s23
    %s30 = sor.u32 %s28, %s29
    %p31 = scmp.eq.s32.totalorder %s30, 0
    %s33 = sadd.s32 %s32, 1
    %s34 = scalar_select %p31, %s32, %s33
    %p37 = pneg %p31
    %p38 = scmp.eq.s32.totalorder %s8, 1
    %p39 = por %p37, %p38
    %p40 = scmp.ne.s32.totalorder %s32, %s35
    %p41 = scmp.eq.s32.totalorder %s8, 0
    %p42 = por %p40, %p41
    %p43 = scmp.ne.s32.totalorder %s32, %s35
    %p44 = scmp.eq.s32.totalorder %s13, 1
    %p45 = por %p43, %p44
    %p46 = scmp.ne.s32.totalorder %s35, %s36
    %p47 = scmp.eq.s32.totalorder %s13, 0
    %p48 = por %p46, %p47
    %p49 = scmp.ne.s32.totalorder %s35, %s36
    %p50 = scmp.eq.s32.totalorder %s14, 1
    %p51 = por %p49, %p50
    %p53 = scmp.ne.s32.totalorder %s36, %s52
    %p54 = scmp.eq.s32.totalorder %s14, 0
    %p55 = por %p53, %p54
    %s56 = ssub.s32 %s15, %s27
    %p57 = scmp.eq.s32.totalorder %s56, 0
    %s59 = sadd.s32 %s58, 1
    %s60 = scalar_select %p57, %s58, %s59
    %p63 = pneg %p57
    %p64 = scmp.eq.s32.totalorder %s8, 1
    %p65 = por %p63, %p64
    %p66 = scmp.ne.s32.totalorder %s58, %s61
    %p67 = scmp.eq.s32.totalorder %s8, 0
    %p68 = por %p66, %p67
    %p69 = scmp.ne.s32.totalorder %s58, %s61
    %p70 = scmp.eq.s32.totalorder %s13, 1
    %p71 = por %p69, %p70
    %p72 = scmp.ne.s32.totalorder %s61, %s62
    %p73 = scmp.eq.s32.totalorder %s13, 0
    %p74 = por %p72, %p73
    %p75 = scmp.ne.s32.totalorder %s61, %s62
    %p76 = scmp.eq.s32.totalorder %s14, 1
    %p77 = por %p75, %p76
    %p79 = scmp.ne.s32.totalorder %s62, %s78
    %p80 = scmp.eq.s32.totalorder %s14, 0
    %p81 = por %p79, %p80
    %s82 = ssub.s32 %s15, %s27
    %s83 = ssub.s32 %s16, %s23
    %s84 = sor.u32 %s82, %s83
    %p85 = scmp.eq.s32.totalorder %s84, 0
    %s87 = sadd.s32 %s86, 1
    %s88 = scalar_select %p85, %s86, %s87
    %p91 = pneg %p85
    %p92 = scmp.eq.s32.totalorder %s8, 1
    %p93 = por %p91, %p92
    %p94 = scmp.ne.s32.totalorder %s86, %s89
    %p95 = scmp.eq.s32.totalorder %s8, 0
    %p96 = por %p94, %p95
    %p97 = scmp.ne.s32.totalorder %s86, %s89
    %p98 = scmp.eq.s32.totalorder %s13, 1
    %p99 = por %p97, %p98
    %p100 = scmp.ne.s32.totalorder %s89, %s90
    %p101 = scmp.eq.s32.totalorder %s13, 0
    %p102 = por %p100, %p101
    %p103 = scmp.ne.s32.totalorder %s89, %s90
    %p104 = scmp.eq.s32.totalorder %s14, 1
    %p105 = por %p103, %p104
    %p107 = scmp.ne.s32.totalorder %s90, %s106
    %p108 = scmp.eq.s32.totalorder %s14, 0
    %p109 = por %p107, %p108
    %p110 = scmp.le.s32.totalorder 1, %s8
    %p111 = scmp.lt.s32.totalorder %s8, 3
    %p112 = pnand %p110, %p111
    %p113 = pneg %p112
    // Predicated region
    $region9: #{bert_mrc_ner_forward.12} parent=5 // pred_check
      _
    $region10: #{bert_mrc_ner_forward.12} parent=5 // pred_check_branch
      %115 = sbr.rel (%p112) target = $region12
    $region11: #{bert_mrc_ner_forward.12} parent=5 // pred_region
      %s116 = ssub.s32 %s8, 1
    $region12: #{bert_mrc_ner_forward.12} parent=5 // pred_fallthru
      _
    %p117 = scmp.lt.s32.totalorder %s8, 2
    // Predicated region
    $region13: #{bert_mrc_ner_forward.12} parent=5 // pred_check
      %p118 = pneg %p117
    $region14: #{bert_mrc_ner_forward.12} parent=5 // pred_check_branch
      %120 = sbr.rel (%p118) target = $region16
    $region15: #{bert_mrc_ner_forward.12} parent=5 // pred_region
      // Predicated region
      $region17: #{bert_mrc_ner_forward.12} parent=15 // pred_check
        %p121 = pneg %p42
      $region18: #{bert_mrc_ner_forward.12} parent=15 // pred_check_branch
        %123 = sbr.rel (%p121) target = $region20
      $region19: #{bert_mrc_ner_forward.12} parent=15 // pred_region
        %s124 = smul.u32 3, %s16
        %p125 = scmp.lt.s32.totalorder %s15, 1
        %s126 = scalar_select %p125, %s15, 1
        %p127 = scmp.lt.s32.totalorder %s124, 2
        %s128 = scalar_select %p127, %s124, 2
        %s129 = smul.addr %s126, 6
        %s130 = sadd.s32 %s128, %s129
        %s131 = smul.addr %s130, 4
        %s132 = scalar_lea.vmem %s0, %s131
        %s133 = smul.u32 3, %s16
      $region20: #{bert_mrc_ner_forward.12} parent=15 // pred_fallthru
        _
      // Predicated region
      $region21: #{bert_mrc_ner_forward.12} parent=15 // pred_check
        %p134 = pneg %p68
      $region22: #{bert_mrc_ner_forward.12} parent=15 // pred_check_branch
        %136 = sbr.rel (%p134) target = $region24
      $region23: #{bert_mrc_ner_forward.12} parent=15 // pred_region
        %p137 = scmp.lt.s32.totalorder %s15, 1
        %s138 = scalar_select %p137, %s15, 1
        %s139 = scalar_lea.vmem %s1, %s138
      $region24: #{bert_mrc_ner_forward.12} parent=15 // pred_fallthru
        _
    $region16: #{bert_mrc_ner_forward.12} parent=5 // pred_fallthru
      _
    %p140 = scmp.le.s32.totalorder 1, %s8
    %p141 = scmp.lt.s32.totalorder %s8, 3
    %p142 = pnand %p140, %p141
    %p143 = pneg %p142
    // Predicated region
    $region25: #{bert_mrc_ner_forward.12} parent=5 // pred_check
      _
    $region26: #{bert_mrc_ner_forward.12} parent=5 // pred_check_branch
      %145 = sbr.rel (%p142) target = $region28
    $region27: #{bert_mrc_ner_forward.12} parent=5 // pred_region
      %s146 = ssub.s32 %s8, 1
      %s147 = smul.u32 3, %s18
      %p148 = scmp.lt.s32.totalorder %s17, 1
      %s149 = scalar_select %p148, %s17, 1
      %p150 = scmp.lt.s32.totalorder %s147, 2
      %s151 = scalar_select %p150, %s147, 2
      %s152 = smul.addr %s149, 6
      %s153 = sadd.s32 %s151, %s152
      %s154 = smul.addr %s153, 4
      %s155 = scalar_lea.vmem %s0, %s154
      %p156 = pneg %p48
      %p157 = pneg %p45
      %p158 = scmp.lt.s32.totalorder %s17, 1
      %s159 = scalar_select %p158, %s17, 1
      %s160 = scalar_lea.vmem %s1, %s159
      %p161 = pneg %p74
      %p162 = pneg %p71
      %p163 = pneg %p102
      %p164 = pneg %p99
      %p165 = scmp.lt.s32.totalorder %s17, 1
      %s166 = scalar_select %p165, %s17, 1
      %p167 = scmp.lt.s32.totalorder %s18, 0
      %s168 = scalar_select %p167, %s18, 0
      %s169 = smul.addr %s166, 2
      %s170 = sadd.s32 %s168, %s169
      %s171 = smul.addr %s170, 4
      %s172 = scalar_lea.vmem %s2, %s171
      %s173 = smul.u32 3, %s18
      %p174 = scmp.lt.s32.totalorder %s17, 1
      %s175 = scalar_select %p174, %s17, 1
      %p176 = scmp.lt.s32.totalorder %s173, 2
      %s177 = scalar_select %p176, %s173, 2
      %s178 = smul.addr %s175, 6
      %s179 = sadd.s32 %s177, %s178
      %s180 = smul.addr %s179, 4
      %s181 = scalar_lea.vmem %s0, %s180
      %s182 = smul.u32 3, %s18
      %p183 = scmp.lt.s32.totalorder %s17, 1
      %s184 = scalar_select %p183, %s17, 1
      %s185 = scalar_lea.vmem %s1, %s184
      %p186 = scmp.lt.s32.totalorder %s17, 1
      %s187 = scalar_select %p186, %s17, 1
      %p188 = scmp.lt.s32.totalorder %s18, 0
      %s189 = scalar_select %p188, %s18, 0
      %s190 = smul.addr %s187, 2
      %s191 = sadd.s32 %s189, %s190
      %s192 = smul.addr %s191, 4
      %s193 = scalar_lea.vmem %s2, %s192
      %v195 = vld [vmem:[%s181] sm:$0xff]
      %v196 = vld [vmem:[%s181 + $0x8] sm:$0xf]
      %v197 = vld [vmem:[%s181 + $0xc] sm:$0xff]
      %v198 = vld [vmem:[%s181 + $0x14] sm:$0xf]
      %v199 = vld [vmem:[%s185] sm:$0x1]
      %v202 = vunpack.c.l.b16 %v195
      %v203 = vunpack.c.l.b16 %v197
      %v204 = vpack.c.b16 %v203, %v202
      %v205 = vunpack.c.h.b16 %v195
      %v206 = vunpack.c.h.b16 %v197
      %v207 = vpack.c.b16 %v206, %v205
      %vm208 = vcmask 523264
      %v210 = vsel %vm208, %v204, 0
      %v213 = vsel %vm208, %v207, 0
      %215 = vmatprep.subr.bf16.mxu0 0
      %216 = vmatpush1.bf16.xpose.msra.mxu0 0
      %217 = vmatprep.subr.bf16.mxu0 0
      %218 = vmatpush1.bf16.xpose.msra.mxu0 0
      %219 = vmatprep.subr.bf16.mxu0 0
      %220 = vmatpush1.bf16.xpose.msra.mxu0 0
      %221 = vmatprep.subr.bf16.mxu0 0
      %222 = vmatpush1.bf16.xpose.msra.mxu0 0
      %223 = vmatprep.subr.bf16.mxu0 0
      %224 = vmatpush1.bf16.xpose.msra.mxu0 0
      %225 = vmatprep.subr.bf16.mxu0 0
      %226 = vmatpush1.bf16.xpose.msra.mxu0 0
      %227 = vmatprep.subr.bf16.mxu0 0
      %228 = vmatpush1.bf16.xpose.msra.mxu0 0
      %229 = vmatprep.subr.bf16.mxu0 0
      %230 = vmatpush1.bf16.xpose.msra.mxu0 %v213
      %231 = vmatprep.subr.bf16.mxu0 0
      %232 = vmatpush2.bf16.xpose.msra.mxu0 0
      %233 = vmatprep.subr.bf16.mxu0 0
      %234 = vmatpush2.bf16.xpose.msra.mxu0 0
      %235 = vmatprep.subr.bf16.mxu0 0
      %236 = vmatpush2.bf16.xpose.msra.mxu0 0
      %237 = vmatprep.subr.bf16.mxu0 0
      %238 = vmatpush2.bf16.xpose.msra.mxu0 0
      %239 = vmatprep.subr.bf16.mxu0 0
      %240 = vmatpush2.bf16.xpose.msra.mxu0 0
      %241 = vmatprep.subr.bf16.mxu0 0
      %242 = vmatpush2.bf16.xpose.msra.mxu0 0
      %243 = vmatprep.subr.bf16.mxu0 0
      %244 = vmatpush2.bf16.xpose.msra.mxu0 0
      %245 = vmatprep.subr.bf16.mxu0 0
      %246 = vmatpush2.bf16.xpose.msra.mxu0 0
      %247 = vmatprep.mubr.bf16.mxu0 0
      %248 = vmatmul.mubr.bf16.gmra.mxu0 %v210
      %v249 = vpop.f32.mrf.mxu0
      %v250 = vadd.f32 0.0, %v249
      %v251 = vpop.f32.mrf.mxu0
      %v252 = vpop.f32.mrf.mxu0
      %v253 = vadd.f32 0.0, %v252
      %v254 = vpop.f32.mrf.mxu0
      %255 = vdwg.mxu0
      %v256 = vmul.f32 %v250, 0.125
      %v257 = vmul.f32 %v253, 0.125
      %v259 = vlaneseq
      %v260 = vshrl.u32 %v259, 7
      %v261 = vsub.s32 0, %v260
      %v262 = vrot.slane %v199, %v261
      %v264 = vadd.f32 %v256, %v262
      %v265 = vadd.f32 %v257, %v262
      %vm266 = vcmask 130048
      %v267 = vsel %vm266, %v264, -inf
      %268 = vmax.xlane.f32.xlu0 %v267
      %v269 = vpop.xlane.xlu0 %268
      %v270 = vsel %vm266, %v265, -inf
      %271 = vmax.xlane.f32.xlu0 %v270
      %v272 = vpop.xlane.xlu0 %271
      %v273 = vsub.f32 %v264, %v269
      %v274 = vsub.f32 %v265, %v272
      %v275 = vmul.f32 %v273, 1.442695
      %v276 = vpow.pop %v275
      %v277 = vmul.f32 %v274, 1.442695
      %v278 = vpow.pop %v277
      %v279 = vsel %vm266, %v276, 0.0
      %280 = vadd.xlane.f32.xlu0 %v279
      %v281 = vpop.xlane.xlu0 %280
      %v282 = vsel %vm266, %v278, 0.0
      %283 = vadd.xlane.f32.xlu0 %v282
      %v284 = vpop.xlane.xlu0 %283
      %v285 = vrcp.pop %v281
      %v286 = vrcp.pop %v284
      %v287 = vmul.f32 %v276, %v285
      %v288 = vmul.f32 %v278, %v286
      %v289 = vpack.c.bf16 %v288, %v287
      %v292 = vunpack.c.l.b16 %v196
      %v293 = vunpack.c.l.b16 %v198
      %v294 = vpack.c.b16 %v293, %v292
      %v297 = vsel %vm266, %v289, 0
      %299 = vmatprep.subr.bf16.mxu0 0
      %300 = vmatpush1.bf16.msra.mxu0 0
      %301 = vmatprep.subr.bf16.mxu0 0
      %302 = vmatpush1.bf16.msra.mxu0 0
      %303 = vmatprep.subr.bf16.mxu0 0
      %304 = vmatpush1.bf16.msra.mxu0 0
      %305 = vmatprep.subr.bf16.mxu0 0
      %306 = vmatpush1.bf16.msra.mxu0 0
      %307 = vmatprep.subr.bf16.mxu0 0
      %308 = vmatpush1.bf16.msra.mxu0 0
      %309 = vmatprep.subr.bf16.mxu0 0
      %310 = vmatpush1.bf16.msra.mxu0 0
      %311 = vmatprep.subr.bf16.mxu0 0
      %312 = vmatpush1.bf16.msra.mxu0 0
      %313 = vmatprep.subr.bf16.mxu0 0
      %314 = vmatpush1.bf16.msra.mxu0 %v294
      %315 = vmatprep.subr.bf16.mxu0 0
      %316 = vmatpush2.bf16.msra.mxu0 0
      %317 = vmatprep.subr.bf16.mxu0 0
      %318 = vmatpush2.bf16.msra.mxu0 0
      %319 = vmatprep.subr.bf16.mxu0 0
      %320 = vmatpush2.bf16.msra.mxu0 0
      %321 = vmatprep.subr.bf16.mxu0 0
      %322 = vmatpush2.bf16.msra.mxu0 0
      %323 = vmatprep.subr.bf16.mxu0 0
      %324 = vmatpush2.bf16.msra.mxu0 0
      %325 = vmatprep.subr.bf16.mxu0 0
      %326 = vmatpush2.bf16.msra.mxu0 0
      %327 = vmatprep.subr.bf16.mxu0 0
      %328 = vmatpush2.bf16.msra.mxu0 0
      %329 = vmatprep.subr.bf16.mxu0 0
      %330 = vmatpush2.bf16.msra.mxu0 0
      %331 = vmatprep.mubr.bf16.mxu0 0
      %332 = vmatmul.mubr.bf16.gmra.mxu0 %v297
      %v333 = vpop.f32.mrf.mxu0
      %v334 = vadd.f32 0.0, %v333
      %v335 = vpop.f32.mrf.mxu0
      %v336 = vpop.f32.mrf.mxu0
      %v337 = vadd.f32 0.0, %v336
      %v338 = vpop.f32.mrf.mxu0
      %339 = vdwg.mxu0
      %340 = vrot.lane.b32.xlu0 %v204, 64
      %v341 = vpop.permute.xlu0 %340
      %342 = vrot.lane.b32.xlu0 %v207, 64
      %v343 = vpop.permute.xlu0 %342
      %v345 = vsel %vm208, %v341, 0
      %v348 = vsel %vm208, %v343, 0
      %350 = vmatprep.subr.bf16.mxu0 0
      %351 = vmatpush1.bf16.xpose.msra.mxu0 0
      %352 = vmatprep.subr.bf16.mxu0 0
      %353 = vmatpush1.bf16.xpose.msra.mxu0 0
      %354 = vmatprep.subr.bf16.mxu0 0
      %355 = vmatpush1.bf16.xpose.msra.mxu0 0
      %356 = vmatprep.subr.bf16.mxu0 0
      %357 = vmatpush1.bf16.xpose.msra.mxu0 0
      %358 = vmatprep.subr.bf16.mxu0 0
      %359 = vmatpush1.bf16.xpose.msra.mxu0 0
      %360 = vmatprep.subr.bf16.mxu0 0
      %361 = vmatpush1.bf16.xpose.msra.mxu0 0
      %362 = vmatprep.subr.bf16.mxu0 0
      %363 = vmatpush1.bf16.xpose.msra.mxu0 0
      %364 = vmatprep.subr.bf16.mxu0 0
      %365 = vmatpush1.bf16.xpose.msra.mxu0 %v348
      %366 = vmatprep.subr.bf16.mxu0 0
      %367 = vmatpush2.bf16.xpose.msra.mxu0 0
      %368 = vmatprep.subr.bf16.mxu0 0
      %369 = vmatpush2.bf16.xpose.msra.mxu0 0
      %370 = vmatprep.subr.bf16.mxu0 0
      %371 = vmatpush2.bf16.xpose.msra.mxu0 0
      %372 = vmatprep.subr.bf16.mxu0 0
      %373 = vmatpush2.bf16.xpose.msra.mxu0 0
      %374 = vmatprep.subr.bf16.mxu0 0
      %375 = vmatpush2.bf16.xpose.msra.mxu0 0
      %376 = vmatprep.subr.bf16.mxu0 0
      %377 = vmatpush2.bf16.xpose.msra.mxu0 0
      %378 = vmatprep.subr.bf16.mxu0 0
      %379 = vmatpush2.bf16.xpose.msra.mxu0 0
      %380 = vmatprep.subr.bf16.mxu0 0
      %381 = vmatpush2.bf16.xpose.msra.mxu0 0
      %382 = vmatprep.mubr.bf16.mxu0 0
      %383 = vmatmul.mubr.bf16.gmra.mxu0 %v345
      %v384 = vpop.f32.mrf.mxu0
      %v385 = vadd.f32 0.0, %v384
      %v386 = vpop.f32.mrf.mxu0
      %v387 = vpop.f32.mrf.mxu0
      %v388 = vadd.f32 0.0, %v387
      %v389 = vpop.f32.mrf.mxu0
      %390 = vdwg.mxu0
      %v391 = vmul.f32 %v385, 0.125
      %v392 = vmul.f32 %v388, 0.125
      %v393 = vadd.f32 %v391, %v262
      %v394 = vadd.f32 %v392, %v262
      %v395 = vsel %vm266, %v393, -inf
      %396 = vmax.xlane.f32.xlu0 %v395
      %v397 = vpop.xlane.xlu0 %396
      %v398 = vsel %vm266, %v394, -inf
      %399 = vmax.xlane.f32.xlu0 %v398
      %v400 = vpop.xlane.xlu0 %399
      %v401 = vsub.f32 %v393, %v397
      %v402 = vsub.f32 %v394, %v400
      %v403 = vmul.f32 %v401, 1.442695
      %v404 = vpow.pop %v403
      %v405 = vmul.f32 %v402, 1.442695
      %v406 = vpow.pop %v405
      %v407 = vsel %vm266, %v404, 0.0
      %408 = vadd.xlane.f32.xlu0 %v407
      %v409 = vpop.xlane.xlu0 %408
      %v410 = vsel %vm266, %v406, 0.0
      %411 = vadd.xlane.f32.xlu0 %v410
      %v412 = vpop.xlane.xlu0 %411
      %v413 = vrcp.pop %v409
      %v414 = vrcp.pop %v412
      %v415 = vmul.f32 %v404, %v413
      %v416 = vmul.f32 %v406, %v414
      %v417 = vpack.c.bf16 %v416, %v415
      %418 = vrot.lane.b32.xlu0 %v294, 64
      %v419 = vpop.permute.xlu0 %418
      %v422 = vsel %vm266, %v417, 0
      %424 = vmatprep.subr.bf16.mxu0 0
      %425 = vmatpush1.bf16.msra.mxu0 0
      %426 = vmatprep.subr.bf16.mxu0 0
      %427 = vmatpush1.bf16.msra.mxu0 0
      %428 = vmatprep.subr.bf16.mxu0 0
      %429 = vmatpush1.bf16.msra.mxu0 0
      %430 = vmatprep.subr.bf16.mxu0 0
      %431 = vmatpush1.bf16.msra.mxu0 0
      %432 = vmatprep.subr.bf16.mxu0 0
      %433 = vmatpush1.bf16.msra.mxu0 0
      %434 = vmatprep.subr.bf16.mxu0 0
      %435 = vmatpush1.bf16.msra.mxu0 0
      %436 = vmatprep.subr.bf16.mxu0 0
      %437 = vmatpush1.bf16.msra.mxu0 0
      %438 = vmatprep.subr.bf16.mxu0 0
      %439 = vmatpush1.bf16.msra.mxu0 %v419
      %440 = vmatprep.subr.bf16.mxu0 0
      %441 = vmatpush2.bf16.msra.mxu0 0
      %442 = vmatprep.subr.bf16.mxu0 0
      %443 = vmatpush2.bf16.msra.mxu0 0
      %444 = vmatprep.subr.bf16.mxu0 0
      %445 = vmatpush2.bf16.msra.mxu0 0
      %446 = vmatprep.subr.bf16.mxu0 0
      %447 = vmatpush2.bf16.msra.mxu0 0
      %448 = vmatprep.subr.bf16.mxu0 0
      %449 = vmatpush2.bf16.msra.mxu0 0
      %450 = vmatprep.subr.bf16.mxu0 0
      %451 = vmatpush2.bf16.msra.mxu0 0
      %452 = vmatprep.subr.bf16.mxu0 0
      %453 = vmatpush2.bf16.msra.mxu0 0
      %454 = vmatprep.subr.bf16.mxu0 0
      %455 = vmatpush2.bf16.msra.mxu0 0
      %456 = vmatprep.mubr.bf16.mxu0 0
      %457 = vmatmul.mubr.bf16.gmra.mxu0 %v422
      %v458 = vpop.f32.mrf.mxu0
      %v459 = vadd.f32 0.0, %v458
      %v460 = vpop.f32.mrf.mxu0
      %v461 = vpop.f32.mrf.mxu0
      %v462 = vadd.f32 0.0, %v461
      %v463 = vpop.f32.mrf.mxu0
      %464 = vdwg.mxu0
      %467 = vrot.lane.b32.xlu0 %v459, 64
      %v468 = vpop.permute.xlu0 %467
      %469 = vrot.lane.b32.xlu0 %v462, 64
      %v470 = vpop.permute.xlu0 %469
      %v473 = vsel %vm208, %v334, %v468
      %v474 = vsel %vm208, %v337, %v470
      %v475 = vpack.c.bf16 %v474, %v473
      %v477 = vunpack.c.l.b16 %v475
      %v478 = vunpack.c.h.b16 %v475
      %v479 = vpack.c.b16 %v477, %v477
      %v480 = vpack.c.b16 %v478, %v478
      %483 = vst [vmem:[%s193] sm:$0xf] %v479
      %484 = vst [vmem:[%s193 + $0x4] sm:$0xf] %v480
      %p485 = scmp.lt.s32.totalorder %s17, 1
      %s486 = scalar_select %p485, %s17, 1
      %p487 = scmp.lt.s32.totalorder %s18, 0
      %s488 = scalar_select %p487, %s18, 0
      %s489 = smul.addr %s486, 2
      %s490 = sadd.s32 %s488, %s489
      %s491 = smul.addr %s490, 4
      %s492 = scalar_lea.vmem %s2, %s491
      // Predicated region
      $region29: #{bert_mrc_ner_forward.12} parent=27 // pred_check
        %p493 = pneg %p99
      $region30: #{bert_mrc_ner_forward.12} parent=27 // pred_check_branch
        %495 = sbr.rel (%p493) target = $region32
      $region31: #{bert_mrc_ner_forward.12} parent=27 // pred_region
        _
      $region32: #{bert_mrc_ner_forward.12} parent=27 // pred_fallthru
        _
    $region28: #{bert_mrc_ner_forward.12} parent=5 // pred_fallthru
      _
    %p496 = scmp.le.s32.totalorder 2, %s8
    // Predicated region
    $region33: #{bert_mrc_ner_forward.12} parent=5 // pred_check
      %p497 = pneg %p496
    $region34: #{bert_mrc_ner_forward.12} parent=5 // pred_check_branch
      %499 = sbr.rel (%p497) target = $region36
    $region35: #{bert_mrc_ner_forward.12} parent=5 // pred_region
      %s500 = ssub.s32 %s8, 2
      // Predicated region
      $region37: #{bert_mrc_ner_forward.12} parent=35 // pred_check
        %p501 = pneg %p105
      $region38: #{bert_mrc_ner_forward.12} parent=35 // pred_check_branch
        %503 = sbr.rel (%p501) target = $region40
      $region39: #{bert_mrc_ner_forward.12} parent=35 // pred_region
        %p504 = scmp.lt.s32.totalorder %s19, 1
        %s505 = scalar_select %p504, %s19, 1
        %p506 = scmp.lt.s32.totalorder %s20, 0
        %s507 = scalar_select %p506, %s20, 0
        %s508 = smul.addr %s505, 2
        %s509 = sadd.s32 %s507, %s508
        %s510 = smul.addr %s509, 4
        %s511 = scalar_lea.vmem %s2, %s510
      $region40: #{bert_mrc_ner_forward.12} parent=35 // pred_fallthru
        _
    $region36: #{bert_mrc_ner_forward.12} parent=5 // pred_fallthru
      _
  $region6: #{bert_mrc_ner_forward.12} parent=0 // loop_footer
    %s12 = sadd.s32 1, %s8
  $region7: #{bert_mrc_ner_forward.12} parent=0 // loop_footer_branch
    %7 = sbr.rel target = $region3
  $region8: #{bert_mrc_ner_forward.12} parent=0 // loop_exit
    _

// kernel: bert_mrc_ner_forward.13
$region0: #{bert_mrc_ner_forward.13}
  #allocation0 [shape = 'u32[]', space=smem, size = 0x4, offset = 0x4, fixed_abs, tag = 'smem constant byte address 0x4 - core index']
  #allocation1 [shape = 'u32[144,128]{1,0:T(1,128)}', space=vmem, size = 0x12000, scoped, tag = 'internal scratch']
  #allocation2 [shape = 'f32[32,128]{1,0:T(8,128)}', space=vmem, size = 0x4000, scoped, tag = 'scratch operand']
  %s0 = inlined_call_operand.vmem [shape: bf16[32,128], index: 0, kind: input, shape index: {}]
  %s1 = inlined_call_operand.vmem [shape: bf16[128,128], index: 1, kind: input, shape index: {}]
  %s2 = inlined_call_operand.vmem [shape: f32[1,128], index: 2, kind: input, shape index: {}]
  %s3 = inlined_call_operand.vmem [shape: bf16[32,128], index: 3, kind: input, shape index: {}]
  %s4 = inlined_call_operand.vmem [shape: f32[1,128], index: 4, kind: input, shape index: {}]
  %s5 = inlined_call_operand.vmem [shape: f32[1,128], index: 5, kind: input, shape index: {}]
  %s6 = inlined_call_operand.vmem [shape: bf16[32,128], index: 6, kind: output, shape index: {}]
  %s7 = sld [smem:[#allocation0]]
  $region42: #{bert_mrc_ner_forward.13} parent=0
    _
  %s9 = ssub.s32 1, %s7
  %s10 = scalar_select 0, %s9, %s7
  // Predicated region
  $region2: #{bert_mrc_ner_forward.13} parent=0 // pred_check
    _
  $region3: #{bert_mrc_ner_forward.13} parent=0 // pred_check_branch
    %12 = sbr.rel (0) target = $region5
  $region4: #{bert_mrc_ner_forward.13} parent=0 // pred_region
    _
  $region5: #{bert_mrc_ner_forward.13} parent=0 // pred_fallthru
    _
  // Predicated region
  $region6: #{bert_mrc_ner_forward.13} parent=0 // pred_check
    _
  $region7: #{bert_mrc_ner_forward.13} parent=0 // pred_check_branch
    %14 = sbr.rel (0) target = $region9
  $region8: #{bert_mrc_ner_forward.13} parent=0 // pred_region
    _
  $region9: #{bert_mrc_ner_forward.13} parent=0 // pred_fallthru
    _
  // Predicated region
  $region10: #{bert_mrc_ner_forward.13} parent=0 // pred_check
    _
  $region11: #{bert_mrc_ner_forward.13} parent=0 // pred_check_branch
    %16 = sbr.rel (0) target = $region13
  $region12: #{bert_mrc_ner_forward.13} parent=0 // pred_region
    _
  $region13: #{bert_mrc_ner_forward.13} parent=0 // pred_fallthru
    _
  // Predicated region
  $region14: #{bert_mrc_ner_forward.13} parent=0 // pred_check
    _
  $region15: #{bert_mrc_ner_forward.13} parent=0 // pred_check_branch
    %18 = sbr.rel (0) target = $region17
  $region16: #{bert_mrc_ner_forward.13} parent=0 // pred_region
    _
  $region17: #{bert_mrc_ner_forward.13} parent=0 // pred_fallthru
    _
  // Predicated region
  $region18: #{bert_mrc_ner_forward.13} parent=0 // pred_check
    _
  $region19: #{bert_mrc_ner_forward.13} parent=0 // pred_check_branch
    %20 = sbr.rel (0) target = $region21
  $region20: #{bert_mrc_ner_forward.13} parent=0 // pred_region
    _
  $region21: #{bert_mrc_ner_forward.13} parent=0 // pred_fallthru
    _
  // Predicated region
  $region22: #{bert_mrc_ner_forward.13} parent=0 // pred_check
    _
  $region23: #{bert_mrc_ner_forward.13} parent=0 // pred_check_branch
    %22 = sbr.rel (0) target = $region25
  $region24: #{bert_mrc_ner_forward.13} parent=0 // pred_region
    _
  $region25: #{bert_mrc_ner_forward.13} parent=0 // pred_fallthru
    _
  %p24 = scmp.eq.s32.totalorder 0, 0
  // Predicated region
  $region26: #{bert_mrc_ner_forward.13} parent=0 // pred_check
    %p25 = pneg %p24
  $region27: #{bert_mrc_ner_forward.13} parent=0 // pred_check_branch
    %27 = sbr.rel (%p25) target = $region29
  $region28: #{bert_mrc_ner_forward.13} parent=0 // pred_region
    %28 = vst [vmem:[#allocation2] sm:$0xff] 0.0
    %29 = vst [vmem:[#allocation2 + $0x8] sm:$0xff] 0.0
    %30 = vst [vmem:[#allocation2 + $0x10] sm:$0xff] 0.0
    %31 = vst [vmem:[#allocation2 + $0x18] sm:$0xff] 0.0
  $region29: #{bert_mrc_ner_forward.13} parent=0 // pred_fallthru
    _
  %v32 = vld [vmem:[#allocation2] sm:$0xff]
  %v33 = vld [vmem:[#allocation2 + $0x8] sm:$0xff]
  %v34 = vld [vmem:[#allocation2 + $0x10] sm:$0xff]
  %v35 = vld [vmem:[#allocation2 + $0x18] sm:$0xff]
  %v36 = vld [vmem:[%s0] sm:$0xf]
  %v37 = vld [vmem:[%s0 + $0x4] sm:$0xf]
  %v38 = vld [vmem:[%s0 + $0x8] sm:$0xf]
  %v39 = vld [vmem:[%s0 + $0xc] sm:$0xf]
  %v40 = vld [vmem:[%s1] sm:$0xf]
  %v41 = vld [vmem:[%s1 + $0x4] sm:$0xf]
  %v42 = vld [vmem:[%s1 + $0x8] sm:$0xf]
  %v43 = vld [vmem:[%s1 + $0xc] sm:$0xf]
  %v44 = vld [vmem:[%s1 + $0x10] sm:$0xf]
  %v45 = vld [vmem:[%s1 + $0x14] sm:$0xf]
  %v46 = vld [vmem:[%s1 + $0x18] sm:$0xf]
  %v47 = vld [vmem:[%s1 + $0x1c] sm:$0xf]
  %v48 = vld [vmem:[%s1 + $0x20] sm:$0xf]
  %v49 = vld [vmem:[%s1 + $0x24] sm:$0xf]
  %v50 = vld [vmem:[%s1 + $0x28] sm:$0xf]
  %v51 = vld [vmem:[%s1 + $0x2c] sm:$0xf]
  %v52 = vld [vmem:[%s1 + $0x30] sm:$0xf]
  %v53 = vld [vmem:[%s1 + $0x34] sm:$0xf]
  %v54 = vld [vmem:[%s1 + $0x38] sm:$0xf]
  %v55 = vld [vmem:[%s1 + $0x3c] sm:$0xf]
  %v60 = vunpack.c.l.b16 %v36
  %v61 = vunpack.c.l.b16 %v37
  %v62 = vunpack.c.l.b16 %v38
  %v63 = vunpack.c.l.b16 %v39
  %v64 = vpack.c.b16 %v61, %v60
  %v65 = vpack.c.b16 %v63, %v62
  %v84 = vunpack.c.l.b16 %v40
  %v85 = vunpack.c.l.b16 %v41
  %v86 = vunpack.c.l.b16 %v42
  %v87 = vunpack.c.l.b16 %v43
  %v88 = vunpack.c.l.b16 %v44
  %v89 = vunpack.c.l.b16 %v45
  %v90 = vunpack.c.l.b16 %v46
  %v91 = vunpack.c.l.b16 %v47
  %v92 = vunpack.c.l.b16 %v48
  %v93 = vunpack.c.l.b16 %v49
  %v94 = vunpack.c.l.b16 %v50
  %v95 = vunpack.c.l.b16 %v51
  %v96 = vunpack.c.l.b16 %v52
  %v97 = vunpack.c.l.b16 %v53
  %v98 = vunpack.c.l.b16 %v54
  %v99 = vunpack.c.l.b16 %v55
  %v100 = vpack.c.b16 %v85, %v84
  %v101 = vpack.c.b16 %v87, %v86
  %v102 = vpack.c.b16 %v89, %v88
  %v103 = vpack.c.b16 %v91, %v90
  %v104 = vpack.c.b16 %v93, %v92
  %v105 = vpack.c.b16 %v95, %v94
  %v106 = vpack.c.b16 %v97, %v96
  %v107 = vpack.c.b16 %v99, %v98
  %116 = vmatprep.subr.bf16.mxu0 0
  %117 = vmatpush1.bf16.msra.mxu0 %v107
  %118 = vmatprep.subr.bf16.mxu0 0
  %119 = vmatpush1.bf16.msra.mxu0 %v106
  %120 = vmatprep.subr.bf16.mxu0 0
  %121 = vmatpush1.bf16.msra.mxu0 %v105
  %122 = vmatprep.subr.bf16.mxu0 0
  %123 = vmatpush1.bf16.msra.mxu0 %v104
  %124 = vmatprep.subr.bf16.mxu0 0
  %125 = vmatpush1.bf16.msra.mxu0 %v103
  %126 = vmatprep.subr.bf16.mxu0 0
  %127 = vmatpush1.bf16.msra.mxu0 %v102
  %128 = vmatprep.subr.bf16.mxu0 0
  %129 = vmatpush1.bf16.msra.mxu0 %v101
  %130 = vmatprep.subr.bf16.mxu0 0
  %131 = vmatpush1.bf16.msra.mxu0 %v100
  %132 = vmatprep.subr.bf16.mxu0 0
  %133 = vmatpush2.bf16.msra.mxu0 0
  %134 = vmatprep.subr.bf16.mxu0 0
  %135 = vmatpush2.bf16.msra.mxu0 0
  %136 = vmatprep.subr.bf16.mxu0 0
  %137 = vmatpush2.bf16.msra.mxu0 0
  %138 = vmatprep.subr.bf16.mxu0 0
  %139 = vmatpush2.bf16.msra.mxu0 0
  %140 = vmatprep.subr.bf16.mxu0 0
  %141 = vmatpush2.bf16.msra.mxu0 0
  %142 = vmatprep.subr.bf16.mxu0 0
  %143 = vmatpush2.bf16.msra.mxu0 0
  %144 = vmatprep.subr.bf16.mxu0 0
  %145 = vmatpush2.bf16.msra.mxu0 0
  %146 = vmatprep.subr.bf16.mxu0 0
  %147 = vmatpush2.bf16.msra.mxu0 0
  %148 = vmatprep.mubr.bf16.mxu0 0
  %149 = vmatmul.mubr.bf16.gmra.mxu0 %v64
  %v150 = vpop.f32.mrf.mxu0
  %v151 = vadd.f32 0.0, %v150
  %v152 = vpop.f32.mrf.mxu0
  %v153 = vpop.f32.mrf.mxu0
  %v154 = vadd.f32 0.0, %v153
  %v155 = vpop.f32.mrf.mxu0
  %156 = vmatprep.mubr.bf16.mxu0 0
  %157 = vmatmul.mubr.bf16.gmra.mxu0 %v65
  %v158 = vpop.f32.mrf.mxu0
  %v159 = vadd.f32 0.0, %v158
  %v160 = vpop.f32.mrf.mxu0
  %v161 = vpop.f32.mrf.mxu0
  %v162 = vadd.f32 0.0, %v161
  %v163 = vpop.f32.mrf.mxu0
  %164 = vdwg.mxu0
  %v165 = vadd.f32 %v32, %v151
  %v166 = vadd.f32 %v33, %v154
  %v167 = vadd.f32 %v34, %v159
  %v168 = vadd.f32 %v35, %v162
  %169 = vst [vmem:[#allocation2] sm:$0xff] %v165
  %170 = vst [vmem:[#allocation2 + $0x8] sm:$0xff] %v166
  %171 = vst [vmem:[#allocation2 + $0x10] sm:$0xff] %v167
  %172 = vst [vmem:[#allocation2 + $0x18] sm:$0xff] %v168
  // Predicated region
  $region30: #{bert_mrc_ner_forward.13} parent=0 // pred_check
    %p173 = pneg %p24
  $region31: #{bert_mrc_ner_forward.13} parent=0 // pred_check_branch
    %175 = sbr.rel (%p173) target = $region33
  $region32: #{bert_mrc_ner_forward.13} parent=0 // pred_region
    %v176 = vld [vmem:[#allocation2] sm:$0xff]
    %v177 = vld [vmem:[#allocation2 + $0x8] sm:$0xff]
    %v178 = vld [vmem:[#allocation2 + $0x10] sm:$0xff]
    %v179 = vld [vmem:[#allocation2 + $0x18] sm:$0xff]
    %v180 = vld [vmem:[%s2] sm:$0x1]
    %v182 = vlaneseq
    %v183 = vshrl.u32 %v182, 7
    %v184 = vsub.s32 0, %v183
    %v185 = vrot.slane %v180, %v184
    %v187 = vadd.f32 %v176, %v185
    %v188 = vadd.f32 %v177, %v185
    %v189 = vadd.f32 %v178, %v185
    %v190 = vadd.f32 %v179, %v185
    %v191 = vld [vmem:[%s3] sm:$0xf]
    %v192 = vld [vmem:[%s3 + $0x4] sm:$0xf]
    %v193 = vld [vmem:[%s3 + $0x8] sm:$0xf]
    %v194 = vld [vmem:[%s3 + $0xc] sm:$0xf]
    %v195 = vunpack.c.l.bf16 %v191
    %v196 = vunpack.c.l.bf16 %v192
    %v197 = vunpack.c.l.bf16 %v193
    %v198 = vunpack.c.l.bf16 %v194
    %v199 = vadd.f32 %v187, %v195
    %v200 = vadd.f32 %v188, %v196
    %v201 = vadd.f32 %v189, %v197
    %v202 = vadd.f32 %v190, %v198
    %203 = vadd.xlane.f32.xlu0 %v199
    %v204 = vpop.xlane.xlu0 %203
    %205 = vadd.xlane.f32.xlu0 %v200
    %v206 = vpop.xlane.xlu0 %205
    %207 = vadd.xlane.f32.xlu0 %v201
    %v208 = vpop.xlane.xlu0 %207
    %209 = vadd.xlane.f32.xlu0 %v202
    %v210 = vpop.xlane.xlu0 %209
    %v211 = vrcp.pop 128.0
    %v212 = vmul.f32 %v204, %v211
    %v213 = vmul.f32 %v206, %v211
    %v214 = vmul.f32 %v208, %v211
    %v215 = vmul.f32 %v210, %v211
    %v216 = vsub.f32 %v199, %v212
    %v217 = vsub.f32 %v200, %v213
    %v218 = vsub.f32 %v201, %v214
    %v219 = vsub.f32 %v202, %v215
    %v220 = vmul.f32 %v216, %v216
    %v221 = vmul.f32 %v217, %v217
    %v222 = vmul.f32 %v218, %v218
    %v223 = vmul.f32 %v219, %v219
    %224 = vadd.xlane.f32.xlu0 %v220
    %v225 = vpop.xlane.xlu0 %224
    %226 = vadd.xlane.f32.xlu0 %v221
    %v227 = vpop.xlane.xlu0 %226
    %228 = vadd.xlane.f32.xlu0 %v222
    %v229 = vpop.xlane.xlu0 %228
    %230 = vadd.xlane.f32.xlu0 %v223
    %v231 = vpop.xlane.xlu0 %230
    %v232 = vmul.f32 %v225, %v211
    %v233 = vmul.f32 %v227, %v211
    %v234 = vmul.f32 %v229, %v211
    %v235 = vmul.f32 %v231, %v211
    %v236 = vadd.f32 %v232, 1e-12
    %v237 = vadd.f32 %v233, 1e-12
    %v238 = vadd.f32 %v234, 1e-12
    %v239 = vadd.f32 %v235, 1e-12
    %v240 = vrsqrt.pop %v236
    %v241 = vrsqrt.pop %v237
    %v242 = vrsqrt.pop %v238
    %v243 = vrsqrt.pop %v239
    %v244 = vmul.f32 %v216, %v240
    %v245 = vmul.f32 %v217, %v241
    %v246 = vmul.f32 %v218, %v242
    %v247 = vmul.f32 %v219, %v243
    %v248 = vld [vmem:[%s4] sm:$0x1]
    %v250 = vlaneseq
    %v251 = vshrl.u32 %v250, 7
    %v252 = vsub.s32 0, %v251
    %v253 = vrot.slane %v248, %v252
    %v255 = vmul.f32 %v244, %v253
    %v256 = vmul.f32 %v245, %v253
    %v257 = vmul.f32 %v246, %v253
    %v258 = vmul.f32 %v247, %v253
    %v259 = vld [vmem:[%s5] sm:$0x1]
    %v261 = vlaneseq
    %v262 = vshrl.u32 %v261, 7
    %v263 = vsub.s32 0, %v262
    %v264 = vrot.slane %v259, %v263
    %v266 = vadd.f32 %v255, %v264
    %v267 = vadd.f32 %v256, %v264
    %v268 = vadd.f32 %v257, %v264
    %v269 = vadd.f32 %v258, %v264
    %v270 = vpack.c.bf16 %v267, %v266
    %v271 = vpack.c.bf16 %v269, %v268
    %v274 = vunpack.c.l.b16 %v270
    %v275 = vunpack.c.h.b16 %v270
    %v276 = vunpack.c.l.b16 %v271
    %v277 = vunpack.c.h.b16 %v271
    %v278 = vpack.c.b16 %v274, %v274
    %v279 = vpack.c.b16 %v275, %v275
    %v280 = vpack.c.b16 %v276, %v276
    %v281 = vpack.c.b16 %v277, %v277
    %286 = vst [vmem:[%s6] sm:$0xf] %v278
    %287 = vst [vmem:[%s6 + $0x4] sm:$0xf] %v279
    %288 = vst [vmem:[%s6 + $0x8] sm:$0xf] %v280
    %289 = vst [vmem:[%s6 + $0xc] sm:$0xf] %v281
  $region33: #{bert_mrc_ner_forward.13} parent=0 // pred_fallthru
    _
  // Predicated region
  $region34: #{bert_mrc_ner_forward.13} parent=0 // pred_check
    _
  $region35: #{bert_mrc_ner_forward.13} parent=0 // pred_check_branch
    %291 = sbr.rel (0) target = $region37
  $region36: #{bert_mrc_ner_forward.13} parent=0 // pred_region
    _
  $region37: #{bert_mrc_ner_forward.13} parent=0 // pred_fallthru
    _
  // Predicated region
  $region38: #{bert_mrc_ner_forward.13} parent=0 // pred_check
    _
  $region39: #{bert_mrc_ner_forward.13} parent=0 // pred_check_branch
    %293 = sbr.rel (0) target = $region41
  $region40: #{bert_mrc_ner_forward.13} parent=0 // pred_region
    _
  $region41: #{bert_mrc_ner_forward.13} parent=0 // pred_fallthru
    _

// kernel: bert_mrc_ner_forward.11
$region0: #{bert_mrc_ner_forward.11}
  #allocation0 [shape = 'u32[]', space=smem, size = 0x4, offset = 0x4, fixed_abs, tag = 'smem constant byte address 0x4 - core index']
  #allocation1 [shape = 'u32[144,128]{1,0:T(1,128)}', space=vmem, size = 0x12000, scoped, tag = 'internal scratch']
  #allocation2 [shape = 'f32[32,384]{1,0:T(8,128)}', space=vmem, size = 0xc000, scoped, tag = 'scratch operand']
  %s0 = inlined_call_operand.vmem [shape: bf16[32,128], index: 0, kind: input, shape index: {}]
  %s1 = inlined_call_operand.vmem [shape: bf16[128,384], index: 1, kind: input, shape index: {}]
  %s2 = inlined_call_operand.vmem [shape: f32[1,384], index: 2, kind: input, shape index: {}]
  %s3 = inlined_call_operand.vmem [shape: bf16[32,384], index: 3, kind: output, shape index: {}]
  %s4 = sld [smem:[#allocation0]]
  $region30: #{bert_mrc_ner_forward.11} parent=0
    _
  %s6 = ssub.s32 1, %s4
  %s7 = scalar_select 0, %s6, %s4
  // Predicated region
  $region2: #{bert_mrc_ner_forward.11} parent=0 // pred_check
    _
  $region3: #{bert_mrc_ner_forward.11} parent=0 // pred_check_branch
    %9 = sbr.rel (0) target = $region5
  $region4: #{bert_mrc_ner_forward.11} parent=0 // pred_region
    _
  $region5: #{bert_mrc_ner_forward.11} parent=0 // pred_fallthru
    _
  // Predicated region
  $region6: #{bert_mrc_ner_forward.11} parent=0 // pred_check
    _
  $region7: #{bert_mrc_ner_forward.11} parent=0 // pred_check_branch
    %11 = sbr.rel (0) target = $region9
  $region8: #{bert_mrc_ner_forward.11} parent=0 // pred_region
    _
  $region9: #{bert_mrc_ner_forward.11} parent=0 // pred_fallthru
    _
  // Predicated region
  $region10: #{bert_mrc_ner_forward.11} parent=0 // pred_check
    _
  $region11: #{bert_mrc_ner_forward.11} parent=0 // pred_check_branch
    %13 = sbr.rel (0) target = $region13
  $region12: #{bert_mrc_ner_forward.11} parent=0 // pred_region
    _
  $region13: #{bert_mrc_ner_forward.11} parent=0 // pred_fallthru
    _
  %p15 = scmp.eq.s32.totalorder 0, 0
  // Predicated region
  $region14: #{bert_mrc_ner_forward.11} parent=0 // pred_check
    %p16 = pneg %p15
  $region15: #{bert_mrc_ner_forward.11} parent=0 // pred_check_branch
    %18 = sbr.rel (%p16) target = $region17
  $region16: #{bert_mrc_ner_forward.11} parent=0 // pred_region
    %19 = vst [vmem:[#allocation2] sm:$0xff] 0.0
    %20 = vst [vmem:[#allocation2 + $0x8] sm:$0xff] 0.0
    %21 = vst [vmem:[#allocation2 + $0x10] sm:$0xff] 0.0
    %22 = vst [vmem:[#allocation2 + $0x18] sm:$0xff] 0.0
    %23 = vst [vmem:[#allocation2 + $0x20] sm:$0xff] 0.0
    %24 = vst [vmem:[#allocation2 + $0x28] sm:$0xff] 0.0
    %25 = vst [vmem:[#allocation2 + $0x30] sm:$0xff] 0.0
    %26 = vst [vmem:[#allocation2 + $0x38] sm:$0xff] 0.0
    %27 = vst [vmem:[#allocation2 + $0x40] sm:$0xff] 0.0
    %28 = vst [vmem:[#allocation2 + $0x48] sm:$0xff] 0.0
    %29 = vst [vmem:[#allocation2 + $0x50] sm:$0xff] 0.0
    %30 = vst [vmem:[#allocation2 + $0x58] sm:$0xff] 0.0
  $region17: #{bert_mrc_ner_forward.11} parent=0 // pred_fallthru
    _
  %v31 = vld [vmem:[#allocation2] sm:$0xff]
  %v32 = vld [vmem:[#allocation2 + $0x8] sm:$0xff]
  %v33 = vld [vmem:[#allocation2 + $0x10] sm:$0xff]
  %v34 = vld [vmem:[#allocation2 + $0x18] sm:$0xff]
  %v35 = vld [vmem:[#allocation2 + $0x20] sm:$0xff]
  %v36 = vld [vmem:[#allocation2 + $0x28] sm:$0xff]
  %v37 = vld [vmem:[#allocation2 + $0x30] sm:$0xff]
  %v38 = vld [vmem:[#allocation2 + $0x38] sm:$0xff]
  %v39 = vld [vmem:[#allocation2 + $0x40] sm:$0xff]
  %v40 = vld [vmem:[#allocation2 + $0x48] sm:$0xff]
  %v41 = vld [vmem:[#allocation2 + $0x50] sm:$0xff]
  %v42 = vld [vmem:[#allocation2 + $0x58] sm:$0xff]
  %v43 = vld [vmem:[%s0] sm:$0xf]
  %v44 = vld [vmem:[%s0 + $0x4] sm:$0xf]
  %v45 = vld [vmem:[%s0 + $0x8] sm:$0xf]
  %v46 = vld [vmem:[%s0 + $0xc] sm:$0xf]
  %v47 = vld [vmem:[%s1] sm:$0xff]
  %v48 = vld [vmem:[%s1 + $0x8] sm:$0xf]
  %v49 = vld [vmem:[%s1 + $0xc] sm:$0xff]
  %v50 = vld [vmem:[%s1 + $0x14] sm:$0xf]
  %v51 = vld [vmem:[%s1 + $0x18] sm:$0xff]
  %v52 = vld [vmem:[%s1 + $0x20] sm:$0xf]
  %v53 = vld [vmem:[%s1 + $0x24] sm:$0xff]
  %v54 = vld [vmem:[%s1 + $0x2c] sm:$0xf]
  %v55 = vld [vmem:[%s1 + $0x30] sm:$0xff]
  %v56 = vld [vmem:[%s1 + $0x38] sm:$0xf]
  %v57 = vld [vmem:[%s1 + $0x3c] sm:$0xff]
  %v58 = vld [vmem:[%s1 + $0x44] sm:$0xf]
  %v59 = vld [vmem:[%s1 + $0x48] sm:$0xff]
  %v60 = vld [vmem:[%s1 + $0x50] sm:$0xf]
  %v61 = vld [vmem:[%s1 + $0x54] sm:$0xff]
  %v62 = vld [vmem:[%s1 + $0x5c] sm:$0xf]
  %v63 = vld [vmem:[%s1 + $0x60] sm:$0xff]
  %v64 = vld [vmem:[%s1 + $0x68] sm:$0xf]
  %v65 = vld [vmem:[%s1 + $0x6c] sm:$0xff]
  %v66 = vld [vmem:[%s1 + $0x74] sm:$0xf]
  %v67 = vld [vmem:[%s1 + $0x78] sm:$0xff]
  %v68 = vld [vmem:[%s1 + $0x80] sm:$0xf]
  %v69 = vld [vmem:[%s1 + $0x84] sm:$0xff]
  %v70 = vld [vmem:[%s1 + $0x8c] sm:$0xf]
  %v71 = vld [vmem:[%s1 + $0x90] sm:$0xff]
  %v72 = vld [vmem:[%s1 + $0x98] sm:$0xf]
  %v73 = vld [vmem:[%s1 + $0x9c] sm:$0xff]
  %v74 = vld [vmem:[%s1 + $0xa4] sm:$0xf]
  %v75 = vld [vmem:[%s1 + $0xa8] sm:$0xff]
  %v76 = vld [vmem:[%s1 + $0xb0] sm:$0xf]
  %v77 = vld [vmem:[%s1 + $0xb4] sm:$0xff]
  %v78 = vld [vmem:[%s1 + $0xbc] sm:$0xf]
  %v83 = vunpack.c.l.b16 %v43
  %v84 = vunpack.c.l.b16 %v44
  %v85 = vunpack.c.l.b16 %v45
  %v86 = vunpack.c.l.b16 %v46
  %v87 = vpack.c.b16 %v84, %v83
  %v88 = vpack.c.b16 %v86, %v85
  %v123 = vunpack.c.l.b16 %v47
  %v124 = vunpack.c.h.b16 %v47
  %v125 = vunpack.c.l.b16 %v48
  %v126 = vunpack.c.l.b16 %v49
  %v127 = vunpack.c.h.b16 %v49
  %v128 = vunpack.c.l.b16 %v50
  %v129 = vunpack.c.l.b16 %v51
  %v130 = vunpack.c.h.b16 %v51
  %v131 = vunpack.c.l.b16 %v52
  %v132 = vunpack.c.l.b16 %v53
  %v133 = vunpack.c.h.b16 %v53
  %v134 = vunpack.c.l.b16 %v54
  %v135 = vunpack.c.l.b16 %v55
  %v136 = vunpack.c.h.b16 %v55
  %v137 = vunpack.c.l.b16 %v56
  %v138 = vunpack.c.l.b16 %v57
  %v139 = vunpack.c.h.b16 %v57
  %v140 = vunpack.c.l.b16 %v58
  %v141 = vunpack.c.l.b16 %v59
  %v142 = vunpack.c.h.b16 %v59
  %v143 = vunpack.c.l.b16 %v60
  %v144 = vunpack.c.l.b16 %v61
  %v145 = vunpack.c.h.b16 %v61
  %v146 = vunpack.c.l.b16 %v62
  %v147 = vunpack.c.l.b16 %v63
  %v148 = vunpack.c.h.b16 %v63
  %v149 = vunpack.c.l.b16 %v64
  %v150 = vunpack.c.l.b16 %v65
  %v151 = vunpack.c.h.b16 %v65
  %v152 = vunpack.c.l.b16 %v66
  %v153 = vunpack.c.l.b16 %v67
  %v154 = vunpack.c.h.b16 %v67
  %v155 = vunpack.c.l.b16 %v68
  %v156 = vunpack.c.l.b16 %v69
  %v157 = vunpack.c.h.b16 %v69
  %v158 = vunpack.c.l.b16 %v70
  %v159 = vunpack.c.l.b16 %v71
  %v160 = vunpack.c.h.b16 %v71
  %v161 = vunpack.c.l.b16 %v72
  %v162 = vunpack.c.l.b16 %v73
  %v163 = vunpack.c.h.b16 %v73
  %v164 = vunpack.c.l.b16 %v74
  %v165 = vunpack.c.l.b16 %v75
  %v166 = vunpack.c.h.b16 %v75
  %v167 = vunpack.c.l.b16 %v76
  %v168 = vunpack.c.l.b16 %v77
  %v169 = vunpack.c.h.b16 %v77
  %v170 = vunpack.c.l.b16 %v78
  %v171 = vpack.c.b16 %v126, %v123
  %v172 = vpack.c.b16 %v127, %v124
  %v173 = vpack.c.b16 %v128, %v125
  %v174 = vpack.c.b16 %v132, %v129
  %v175 = vpack.c.b16 %v133, %v130
  %v176 = vpack.c.b16 %v134, %v131
  %v177 = vpack.c.b16 %v138, %v135
  %v178 = vpack.c.b16 %v139, %v136
  %v179 = vpack.c.b16 %v140, %v137
  %v180 = vpack.c.b16 %v144, %v141
  %v181 = vpack.c.b16 %v145, %v142
  %v182 = vpack.c.b16 %v146, %v143
  %v183 = vpack.c.b16 %v150, %v147
  %v184 = vpack.c.b16 %v151, %v148
  %v185 = vpack.c.b16 %v152, %v149
  %v186 = vpack.c.b16 %v156, %v153
  %v187 = vpack.c.b16 %v157, %v154
  %v188 = vpack.c.b16 %v158, %v155
  %v189 = vpack.c.b16 %v162, %v159
  %v190 = vpack.c.b16 %v163, %v160
  %v191 = vpack.c.b16 %v164, %v161
  %v192 = vpack.c.b16 %v168, %v165
  %v193 = vpack.c.b16 %v169, %v166
  %v194 = vpack.c.b16 %v170, %v167
  %219 = vmatprep.subr.bf16.mxu0 %v193
  %220 = vmatpush1.bf16.msra.mxu0 %v192
  %221 = vmatprep.subr.bf16.mxu0 %v190
  %222 = vmatpush1.bf16.msra.mxu0 %v189
  %223 = vmatprep.subr.bf16.mxu0 %v187
  %224 = vmatpush1.bf16.msra.mxu0 %v186
  %225 = vmatprep.subr.bf16.mxu0 %v184
  %226 = vmatpush1.bf16.msra.mxu0 %v183
  %227 = vmatprep.subr.bf16.mxu0 %v181
  %228 = vmatpush1.bf16.msra.mxu0 %v180
  %229 = vmatprep.subr.bf16.mxu0 %v178
  %230 = vmatpush1.bf16.msra.mxu0 %v177
  %231 = vmatprep.subr.bf16.mxu0 %v175
  %232 = vmatpush1.bf16.msra.mxu0 %v174
  %233 = vmatprep.subr.bf16.mxu0 %v172
  %234 = vmatpush1.bf16.msra.mxu0 %v171
  %235 = vmatprep.subr.bf16.mxu0 0
  %236 = vmatpush2.bf16.msra.mxu0 0
  %237 = vmatprep.subr.bf16.mxu0 0
  %238 = vmatpush2.bf16.msra.mxu0 0
  %239 = vmatprep.subr.bf16.mxu0 0
  %240 = vmatpush2.bf16.msra.mxu0 0
  %241 = vmatprep.subr.bf16.mxu0 0
  %242 = vmatpush2.bf16.msra.mxu0 0
  %243 = vmatprep.subr.bf16.mxu0 0
  %244 = vmatpush2.bf16.msra.mxu0 0
  %245 = vmatprep.subr.bf16.mxu0 0
  %246 = vmatpush2.bf16.msra.mxu0 0
  %247 = vmatprep.subr.bf16.mxu0 0
  %248 = vmatpush2.bf16.msra.mxu0 0
  %249 = vmatprep.subr.bf16.mxu0 0
  %250 = vmatpush2.bf16.msra.mxu0 0
  %251 = vmatprep.mubr.bf16.mxu0 0
  %252 = vmatmul.mubr.bf16.gmra.mxu0 %v87
  %v253 = vpop.f32.mrf.mxu0
  %v254 = vadd.f32 0.0, %v253
  %v255 = vpop.f32.mrf.mxu0
  %v256 = vadd.f32 0.0, %v255
  %v257 = vpop.f32.mrf.mxu0
  %v258 = vadd.f32 0.0, %v257
  %v259 = vpop.f32.mrf.mxu0
  %v260 = vadd.f32 0.0, %v259
  %261 = vmatprep.mubr.bf16.mxu0 0
  %262 = vmatmul.mubr.bf16.gmra.mxu0 %v88
  %v263 = vpop.f32.mrf.mxu0
  %v264 = vadd.f32 0.0, %v263
  %v265 = vpop.f32.mrf.mxu0
  %v266 = vadd.f32 0.0, %v265
  %v267 = vpop.f32.mrf.mxu0
  %v268 = vadd.f32 0.0, %v267
  %v269 = vpop.f32.mrf.mxu0
  %v270 = vadd.f32 0.0, %v269
  %271 = vdwg.mxu0
  %272 = vmatprep.subr.bf16.mxu0 0
  %273 = vmatpush1.bf16.msra.mxu0 %v194
  %274 = vmatprep.subr.bf16.mxu0 0
  %275 = vmatpush1.bf16.msra.mxu0 %v191
  %276 = vmatprep.subr.bf16.mxu0 0
  %277 = vmatpush1.bf16.msra.mxu0 %v188
  %278 = vmatprep.subr.bf16.mxu0 0
  %279 = vmatpush1.bf16.msra.mxu0 %v185
  %280 = vmatprep.subr.bf16.mxu0 0
  %281 = vmatpush1.bf16.msra.mxu0 %v182
  %282 = vmatprep.subr.bf16.mxu0 0
  %283 = vmatpush1.bf16.msra.mxu0 %v179
  %284 = vmatprep.subr.bf16.mxu0 0
  %285 = vmatpush1.bf16.msra.mxu0 %v176
  %286 = vmatprep.subr.bf16.mxu0 0
  %287 = vmatpush1.bf16.msra.mxu0 %v173
  %288 = vmatprep.subr.bf16.mxu0 0
  %289 = vmatpush2.bf16.msra.mxu0 0
  %290 = vmatprep.subr.bf16.mxu0 0
  %291 = vmatpush2.bf16.msra.mxu0 0
  %292 = vmatprep.subr.bf16.mxu0 0
  %293 = vmatpush2.bf16.msra.mxu0 0
  %294 = vmatprep.subr.bf16.mxu0 0
  %295 = vmatpush2.bf16.msra.mxu0 0
  %296 = vmatprep.subr.bf16.mxu0 0
  %297 = vmatpush2.bf16.msra.mxu0 0
  %298 = vmatprep.subr.bf16.mxu0 0
  %299 = vmatpush2.bf16.msra.mxu0 0
  %300 = vmatprep.subr.bf16.mxu0 0
  %301 = vmatpush2.bf16.msra.mxu0 0
  %302 = vmatprep.subr.bf16.mxu0 0
  %303 = vmatpush2.bf16.msra.mxu0 0
  %304 = vmatprep.mubr.bf16.mxu0 0
  %305 = vmatmul.mubr.bf16.gmra.mxu0 %v87
  %v306 = vpop.f32.mrf.mxu0
  %v307 = vadd.f32 0.0, %v306
  %v308 = vpop.f32.mrf.mxu0
  %v309 = vpop.f32.mrf.mxu0
  %v310 = vadd.f32 0.0, %v309
  %v311 = vpop.f32.mrf.mxu0
  %312 = vmatprep.mubr.bf16.mxu0 0
  %313 = vmatmul.mubr.bf16.gmra.mxu0 %v88
  %v314 = vpop.f32.mrf.mxu0
  %v315 = vadd.f32 0.0, %v314
  %v316 = vpop.f32.mrf.mxu0
  %v317 = vpop.f32.mrf.mxu0
  %v318 = vadd.f32 0.0, %v317
  %v319 = vpop.f32.mrf.mxu0
  %320 = vdwg.mxu0
  %v321 = vadd.f32 %v31, %v254
  %v322 = vadd.f32 %v32, %v256
  %v323 = vadd.f32 %v33, %v307
  %v324 = vadd.f32 %v34, %v258
  %v325 = vadd.f32 %v35, %v260
  %v326 = vadd.f32 %v36, %v310
  %v327 = vadd.f32 %v37, %v264
  %v328 = vadd.f32 %v38, %v266
  %v329 = vadd.f32 %v39, %v315
  %v330 = vadd.f32 %v40, %v268
  %v331 = vadd.f32 %v41, %v270
  %v332 = vadd.f32 %v42, %v318
  %333 = vst [vmem:[#allocation2] sm:$0xff] %v321
  %334 = vst [vmem:[#allocation2 + $0x8] sm:$0xff] %v322
  %335 = vst [vmem:[#allocation2 + $0x10] sm:$0xff] %v323
  %336 = vst [vmem:[#allocation2 + $0x18] sm:$0xff] %v324
  %337 = vst [vmem:[#allocation2 + $0x20] sm:$0xff] %v325
  %338 = vst [vmem:[#allocation2 + $0x28] sm:$0xff] %v326
  %339 = vst [vmem:[#allocation2 + $0x30] sm:$0xff] %v327
  %340 = vst [vmem:[#allocation2 + $0x38] sm:$0xff] %v328
  %341 = vst [vmem:[#allocation2 + $0x40] sm:$0xff] %v329
  %342 = vst [vmem:[#allocation2 + $0x48] sm:$0xff] %v330
  %343 = vst [vmem:[#allocation2 + $0x50] sm:$0xff] %v331
  %344 = vst [vmem:[#allocation2 + $0x58] sm:$0xff] %v332
  // Predicated region
  $region18: #{bert_mrc_ner_forward.11} parent=0 // pred_check
    %p345 = pneg %p15
  $region19: #{bert_mrc_ner_forward.11} parent=0 // pred_check_branch
    %347 = sbr.rel (%p345) target = $region21
  $region20: #{bert_mrc_ner_forward.11} parent=0 // pred_region
    %v348 = vld [vmem:[#allocation2] sm:$0xff]
    %v349 = vld [vmem:[#allocation2 + $0x8] sm:$0xff]
    %v350 = vld [vmem:[#allocation2 + $0x10] sm:$0xff]
    %v351 = vld [vmem:[#allocation2 + $0x18] sm:$0xff]
    %v352 = vld [vmem:[#allocation2 + $0x20] sm:$0xff]
    %v353 = vld [vmem:[#allocation2 + $0x28] sm:$0xff]
    %v354 = vld [vmem:[#allocation2 + $0x30] sm:$0xff]
    %v355 = vld [vmem:[#allocation2 + $0x38] sm:$0xff]
    %v356 = vld [vmem:[#allocation2 + $0x40] sm:$0xff]
    %v357 = vld [vmem:[#allocation2 + $0x48] sm:$0xff]
    %v358 = vld [vmem:[#allocation2 + $0x50] sm:$0xff]
    %v359 = vld [vmem:[#allocation2 + $0x58] sm:$0xff]
    %v360 = vld [vmem:[%s2] sm:$0x7]
    %v362 = vlaneseq
    %v363 = vshrl.u32 %v362, 7
    %v364 = vsub.s32 0, %v363
    %v365 = vrot.slane %v360, %v364
    %v366 = vlaneseq
    %v367 = vshrl.u32 %v366, 7
    %v368 = vsub.s32 1, %v367
    %v369 = vrot.slane %v360, %v368
    %v370 = vlaneseq
    %v371 = vshrl.u32 %v370, 7
    %v372 = vsub.s32 2, %v371
    %v373 = vrot.slane %v360, %v372
    %v377 = vadd.f32 %v348, %v365
    %v378 = vadd.f32 %v349, %v369
    %v379 = vadd.f32 %v350, %v373
    %v380 = vadd.f32 %v351, %v365
    %v381 = vadd.f32 %v352, %v369
    %v382 = vadd.f32 %v353, %v373
    %v383 = vadd.f32 %v354, %v365
    %v384 = vadd.f32 %v355, %v369
    %v385 = vadd.f32 %v356, %v373
    %v386 = vadd.f32 %v357, %v365
    %v387 = vadd.f32 %v358, %v369
    %v388 = vadd.f32 %v359, %v373
    %v389 = vpack.c.bf16 %v380, %v377
    %v390 = vpack.c.bf16 %v381, %v378
    %v391 = vpack.c.bf16 %v382, %v379
    %v392 = vpack.c.bf16 %v386, %v383
    %v393 = vpack.c.bf16 %v387, %v384
    %v394 = vpack.c.bf16 %v388, %v385
    %v401 = vunpack.c.l.b16 %v389
    %v402 = vunpack.c.l.b16 %v390
    %v403 = vunpack.c.l.b16 %v391
    %v404 = vunpack.c.h.b16 %v389
    %v405 = vunpack.c.h.b16 %v390
    %v406 = vunpack.c.h.b16 %v391
    %v407 = vunpack.c.l.b16 %v392
    %v408 = vunpack.c.l.b16 %v393
    %v409 = vunpack.c.l.b16 %v394
    %v410 = vunpack.c.h.b16 %v392
    %v411 = vunpack.c.h.b16 %v393
    %v412 = vunpack.c.h.b16 %v394
    %v413 = vpack.c.b16 %v402, %v401
    %v414 = vpack.c.b16 %v403, %v403
    %v415 = vpack.c.b16 %v405, %v404
    %v416 = vpack.c.b16 %v406, %v406
    %v417 = vpack.c.b16 %v408, %v407
    %v418 = vpack.c.b16 %v409, %v409
    %v419 = vpack.c.b16 %v411, %v410
    %v420 = vpack.c.b16 %v412, %v412
    %429 = vst [vmem:[%s3] sm:$0xff] %v413
    %430 = vst [vmem:[%s3 + $0x8] sm:$0xf] %v414
    %431 = vst [vmem:[%s3 + $0xc] sm:$0xff] %v415
    %432 = vst [vmem:[%s3 + $0x14] sm:$0xf] %v416
    %433 = vst [vmem:[%s3 + $0x18] sm:$0xff] %v417
    %434 = vst [vmem:[%s3 + $0x20] sm:$0xf] %v418
    %435 = vst [vmem:[%s3 + $0x24] sm:$0xff] %v419
    %436 = vst [vmem:[%s3 + $0x2c] sm:$0xf] %v420
  $region21: #{bert_mrc_ner_forward.11} parent=0 // pred_fallthru
    _
  // Predicated region
  $region22: #{bert_mrc_ner_forward.11} parent=0 // pred_check
    _
  $region23: #{bert_mrc_ner_forward.11} parent=0 // pred_check_branch
    %438 = sbr.rel (0) target = $region25
  $region24: #{bert_mrc_ner_forward.11} parent=0 // pred_region
    _
  $region25: #{bert_mrc_ner_forward.11} parent=0 // pred_fallthru
    _
  // Predicated region
  $region26: #{bert_mrc_ner_forward.11} parent=0 // pred_check
    _
  $region27: #{bert_mrc_ner_forward.11} parent=0 // pred_check_branch
    %440 = sbr.rel (0) target = $region29
  $region28: #{bert_mrc_ner_forward.11} parent=0 // pred_region
    _
  $region29: #{bert_mrc_ner_forward.11} parent=0 // pred_fallthru
    _

// kernel: bert_mrc_ner_forward.19
$region0: #{bert_mrc_ner_forward.19}
  #allocation0 [shape = 'u32[]', space=smem, size = 0x4, offset = 0x4, fixed_abs, tag = 'smem constant byte address 0x4 - core index']
  #allocation1 [shape = 'u32[144,128]{1,0:T(1,128)}', space=vmem, size = 0x12000, scoped, tag = 'internal scratch']
  #allocation2 [shape = 'f32[32,128]{1,0:T(8,128)}', space=vmem, size = 0x4000, scoped, tag = 'scratch operand']
  %s0 = inlined_call_operand.vmem [shape: bf16[32,128], index: 0, kind: input, shape index: {}]
  %s1 = inlined_call_operand.vmem [shape: bf16[128,128], index: 1, kind: input, shape index: {}]
  %s2 = inlined_call_operand.vmem [shape: f32[1,128], index: 2, kind: input, shape index: {}]
  %s3 = inlined_call_operand.vmem [shape: f32[32,128], index: 3, kind: output, shape index: {}]
  %s4 = sld [smem:[#allocation0]]
  $region30: #{bert_mrc_ner_forward.19} parent=0
    _
  %s6 = ssub.s32 1, %s4
  %s7 = scalar_select 0, %s6, %s4
  // Predicated region
  $region2: #{bert_mrc_ner_forward.19} parent=0 // pred_check
    _
  $region3: #{bert_mrc_ner_forward.19} parent=0 // pred_check_branch
    %9 = sbr.rel (0) target = $region5
  $region4: #{bert_mrc_ner_forward.19} parent=0 // pred_region
    _
  $region5: #{bert_mrc_ner_forward.19} parent=0 // pred_fallthru
    _
  // Predicated region
  $region6: #{bert_mrc_ner_forward.19} parent=0 // pred_check
    _
  $region7: #{bert_mrc_ner_forward.19} parent=0 // pred_check_branch
    %11 = sbr.rel (0) target = $region9
  $region8: #{bert_mrc_ner_forward.19} parent=0 // pred_region
    _
  $region9: #{bert_mrc_ner_forward.19} parent=0 // pred_fallthru
    _
  // Predicated region
  $region10: #{bert_mrc_ner_forward.19} parent=0 // pred_check
    _
  $region11: #{bert_mrc_ner_forward.19} parent=0 // pred_check_branch
    %13 = sbr.rel (0) target = $region13
  $region12: #{bert_mrc_ner_forward.19} parent=0 // pred_region
    _
  $region13: #{bert_mrc_ner_forward.19} parent=0 // pred_fallthru
    _
  %p15 = scmp.eq.s32.totalorder 0, 0
  // Predicated region
  $region14: #{bert_mrc_ner_forward.19} parent=0 // pred_check
    %p16 = pneg %p15
  $region15: #{bert_mrc_ner_forward.19} parent=0 // pred_check_branch
    %18 = sbr.rel (%p16) target = $region17
  $region16: #{bert_mrc_ner_forward.19} parent=0 // pred_region
    %19 = vst [vmem:[#allocation2] sm:$0xff] 0.0
    %20 = vst [vmem:[#allocation2 + $0x8] sm:$0xff] 0.0
    %21 = vst [vmem:[#allocation2 + $0x10] sm:$0xff] 0.0
    %22 = vst [vmem:[#allocation2 + $0x18] sm:$0xff] 0.0
  $region17: #{bert_mrc_ner_forward.19} parent=0 // pred_fallthru
    _
  %v23 = vld [vmem:[#allocation2] sm:$0xff]
  %v24 = vld [vmem:[#allocation2 + $0x8] sm:$0xff]
  %v25 = vld [vmem:[#allocation2 + $0x10] sm:$0xff]
  %v26 = vld [vmem:[#allocation2 + $0x18] sm:$0xff]
  %v27 = vld [vmem:[%s0] sm:$0xf]
  %v28 = vld [vmem:[%s0 + $0x4] sm:$0xf]
  %v29 = vld [vmem:[%s0 + $0x8] sm:$0xf]
  %v30 = vld [vmem:[%s0 + $0xc] sm:$0xf]
  %v31 = vld [vmem:[%s1] sm:$0xf]
  %v32 = vld [vmem:[%s1 + $0x4] sm:$0xf]
  %v33 = vld [vmem:[%s1 + $0x8] sm:$0xf]
  %v34 = vld [vmem:[%s1 + $0xc] sm:$0xf]
  %v35 = vld [vmem:[%s1 + $0x10] sm:$0xf]
  %v36 = vld [vmem:[%s1 + $0x14] sm:$0xf]
  %v37 = vld [vmem:[%s1 + $0x18] sm:$0xf]
  %v38 = vld [vmem:[%s1 + $0x1c] sm:$0xf]
  %v39 = vld [vmem:[%s1 + $0x20] sm:$0xf]
  %v40 = vld [vmem:[%s1 + $0x24] sm:$0xf]
  %v41 = vld [vmem:[%s1 + $0x28] sm:$0xf]
  %v42 = vld [vmem:[%s1 + $0x2c] sm:$0xf]
  %v43 = vld [vmem:[%s1 + $0x30] sm:$0xf]
  %v44 = vld [vmem:[%s1 + $0x34] sm:$0xf]
  %v45 = vld [vmem:[%s1 + $0x38] sm:$0xf]
  %v46 = vld [vmem:[%s1 + $0x3c] sm:$0xf]
  %v51 = vunpack.c.l.b16 %v27
  %v52 = vunpack.c.l.b16 %v28
  %v53 = vunpack.c.l.b16 %v29
  %v54 = vunpack.c.l.b16 %v30
  %v55 = vpack.c.b16 %v52, %v51
  %v56 = vpack.c.b16 %v54, %v53
  %v75 = vunpack.c.l.b16 %v31
  %v76 = vunpack.c.l.b16 %v32
  %v77 = vunpack.c.l.b16 %v33
  %v78 = vunpack.c.l.b16 %v34
  %v79 = vunpack.c.l.b16 %v35
  %v80 = vunpack.c.l.b16 %v36
  %v81 = vunpack.c.l.b16 %v37
  %v82 = vunpack.c.l.b16 %v38
  %v83 = vunpack.c.l.b16 %v39
  %v84 = vunpack.c.l.b16 %v40
  %v85 = vunpack.c.l.b16 %v41
  %v86 = vunpack.c.l.b16 %v42
  %v87 = vunpack.c.l.b16 %v43
  %v88 = vunpack.c.l.b16 %v44
  %v89 = vunpack.c.l.b16 %v45
  %v90 = vunpack.c.l.b16 %v46
  %v91 = vpack.c.b16 %v76, %v75
  %v92 = vpack.c.b16 %v78, %v77
  %v93 = vpack.c.b16 %v80, %v79
  %v94 = vpack.c.b16 %v82, %v81
  %v95 = vpack.c.b16 %v84, %v83
  %v96 = vpack.c.b16 %v86, %v85
  %v97 = vpack.c.b16 %v88, %v87
  %v98 = vpack.c.b16 %v90, %v89
  %107 = vmatprep.subr.bf16.mxu0 0
  %108 = vmatpush1.bf16.msra.mxu0 %v98
  %109 = vmatprep.subr.bf16.mxu0 0
  %110 = vmatpush1.bf16.msra.mxu0 %v97
  %111 = vmatprep.subr.bf16.mxu0 0
  %112 = vmatpush1.bf16.msra.mxu0 %v96
  %113 = vmatprep.subr.bf16.mxu0 0
  %114 = vmatpush1.bf16.msra.mxu0 %v95
  %115 = vmatprep.subr.bf16.mxu0 0
  %116 = vmatpush1.bf16.msra.mxu0 %v94
  %117 = vmatprep.subr.bf16.mxu0 0
  %118 = vmatpush1.bf16.msra.mxu0 %v93
  %119 = vmatprep.subr.bf16.mxu0 0
  %120 = vmatpush1.bf16.msra.mxu0 %v92
  %121 = vmatprep.subr.bf16.mxu0 0
  %122 = vmatpush1.bf16.msra.mxu0 %v91
  %123 = vmatprep.subr.bf16.mxu0 0
  %124 = vmatpush2.bf16.msra.mxu0 0
  %125 = vmatprep.subr.bf16.mxu0 0
  %126 = vmatpush2.bf16.msra.mxu0 0
  %127 = vmatprep.subr.bf16.mxu0 0
  %128 = vmatpush2.bf16.msra.mxu0 0
  %129 = vmatprep.subr.bf16.mxu0 0
  %130 = vmatpush2.bf16.msra.mxu0 0
  %131 = vmatprep.subr.bf16.mxu0 0
  %132 = vmatpush2.bf16.msra.mxu0 0
  %133 = vmatprep.subr.bf16.mxu0 0
  %134 = vmatpush2.bf16.msra.mxu0 0
  %135 = vmatprep.subr.bf16.mxu0 0
  %136 = vmatpush2.bf16.msra.mxu0 0
  %137 = vmatprep.subr.bf16.mxu0 0
  %138 = vmatpush2.bf16.msra.mxu0 0
  %139 = vmatprep.mubr.bf16.mxu0 0
  %140 = vmatmul.mubr.bf16.gmra.mxu0 %v55
  %v141 = vpop.f32.mrf.mxu0
  %v142 = vadd.f32 0.0, %v141
  %v143 = vpop.f32.mrf.mxu0
  %v144 = vpop.f32.mrf.mxu0
  %v145 = vadd.f32 0.0, %v144
  %v146 = vpop.f32.mrf.mxu0
  %147 = vmatprep.mubr.bf16.mxu0 0
  %148 = vmatmul.mubr.bf16.gmra.mxu0 %v56
  %v149 = vpop.f32.mrf.mxu0
  %v150 = vadd.f32 0.0, %v149
  %v151 = vpop.f32.mrf.mxu0
  %v152 = vpop.f32.mrf.mxu0
  %v153 = vadd.f32 0.0, %v152
  %v154 = vpop.f32.mrf.mxu0
  %155 = vdwg.mxu0
  %v156 = vadd.f32 %v23, %v142
  %v157 = vadd.f32 %v24, %v145
  %v158 = vadd.f32 %v25, %v150
  %v159 = vadd.f32 %v26, %v153
  %160 = vst [vmem:[#allocation2] sm:$0xff] %v156
  %161 = vst [vmem:[#allocation2 + $0x8] sm:$0xff] %v157
  %162 = vst [vmem:[#allocation2 + $0x10] sm:$0xff] %v158
  %163 = vst [vmem:[#allocation2 + $0x18] sm:$0xff] %v159
  // Predicated region
  $region18: #{bert_mrc_ner_forward.19} parent=0 // pred_check
    %p164 = pneg %p15
  $region19: #{bert_mrc_ner_forward.19} parent=0 // pred_check_branch
    %166 = sbr.rel (%p164) target = $region21
  $region20: #{bert_mrc_ner_forward.19} parent=0 // pred_region
    %v167 = vld [vmem:[#allocation2] sm:$0xff]
    %v168 = vld [vmem:[#allocation2 + $0x8] sm:$0xff]
    %v169 = vld [vmem:[#allocation2 + $0x10] sm:$0xff]
    %v170 = vld [vmem:[#allocation2 + $0x18] sm:$0xff]
    %v171 = vld [vmem:[%s2] sm:$0x1]
    %v173 = vlaneseq
    %v174 = vshrl.u32 %v173, 7
    %v175 = vsub.s32 0, %v174
    %v176 = vrot.slane %v171, %v175
    %v178 = vadd.f32 %v167, %v176
    %v179 = vadd.f32 %v168, %v176
    %v180 = vadd.f32 %v169, %v176
    %v181 = vadd.f32 %v170, %v176
    %182 = vst [vmem:[%s3] sm:$0xff] %v178
    %183 = vst [vmem:[%s3 + $0x8] sm:$0xff] %v179
    %184 = vst [vmem:[%s3 + $0x10] sm:$0xff] %v180
    %185 = vst [vmem:[%s3 + $0x18] sm:$0xff] %v181
  $region21: #{bert_mrc_ner_forward.19} parent=0 // pred_fallthru
    _
  // Predicated region
  $region22: #{bert_mrc_ner_forward.19} parent=0 // pred_check
    _
  $region23: #{bert_mrc_ner_forward.19} parent=0 // pred_check_branch
    %187 = sbr.rel (0) target = $region25
  $region24: #{bert_mrc_ner_forward.19} parent=0 // pred_region
    _
  $region25: #{bert_mrc_ner_forward.19} parent=0 // pred_fallthru
    _
  // Predicated region
  $region26: #{bert_mrc_ner_forward.19} parent=0 // pred_check
    _
  $region27: #{bert_mrc_ner_forward.19} parent=0 // pred_check_branch
    %189 = sbr.rel (0) target = $region29
  $region28: #{bert_mrc_ner_forward.19} parent=0 // pred_region
    _
  $region29: #{bert_mrc_ner_forward.19} parent=0 // pred_fallthru
    _

// kernel: bert_mrc_ner_forward.14
$region0: #{bert_mrc_ner_forward.14}
  #allocation0 [shape = 'u32[]', space=smem, size = 0x4, offset = 0x4, fixed_abs, tag = 'smem constant byte address 0x4 - core index']
  #allocation1 [shape = 'u32[144,128]{1,0:T(1,128)}', space=vmem, size = 0x12000, scoped, tag = 'internal scratch']
  #allocation2 [shape = 'f32[32,128]{1,0:T(8,128)}', space=vmem, size = 0x4000, scoped, tag = 'scratch operand']
  %s0 = inlined_call_operand.vmem [shape: bf16[32,128], index: 0, kind: input, shape index: {}, may-alias: {0,5}]
  %s1 = inlined_call_operand.vmem [shape: bf16[128,512], index: 1, kind: input, shape index: {}]
  %s2 = inlined_call_operand.vmem [shape: f32[1,512], index: 2, kind: input, shape index: {}]
  %s3 = inlined_call_operand.vmem [shape: bf16[512,128], index: 3, kind: input, shape index: {}]
  %s4 = inlined_call_operand.vmem [shape: f32[1,128], index: 4, kind: input, shape index: {}]
  %s5 = inlined_call_operand.vmem [shape: bf16[32,128], index: 5, kind: input, shape index: {}, may-alias: {0,5}]
  %s6 = inlined_call_operand.vmem [shape: f32[1,128], index: 6, kind: input, shape index: {}]
  %s7 = inlined_call_operand.vmem [shape: f32[1,128], index: 7, kind: input, shape index: {}]
  %s8 = inlined_call_operand.vmem [shape: bf16[32,128], index: 8, kind: output, shape index: {}]
  %s9 = sld [smem:[#allocation0]]
  $region50: #{bert_mrc_ner_forward.14} parent=0
    _
  %s11 = ssub.s32 1, %s9
  %s12 = scalar_select 0, %s11, %s9
  // Predicated region
  $region2: #{bert_mrc_ner_forward.14} parent=0 // pred_check
    _
  $region3: #{bert_mrc_ner_forward.14} parent=0 // pred_check_branch
    %14 = sbr.rel (0) target = $region5
  $region4: #{bert_mrc_ner_forward.14} parent=0 // pred_region
    _
  $region5: #{bert_mrc_ner_forward.14} parent=0 // pred_fallthru
    _
  // Predicated region
  $region6: #{bert_mrc_ner_forward.14} parent=0 // pred_check
    _
  $region7: #{bert_mrc_ner_forward.14} parent=0 // pred_check_branch
    %16 = sbr.rel (0) target = $region9
  $region8: #{bert_mrc_ner_forward.14} parent=0 // pred_region
    _
  $region9: #{bert_mrc_ner_forward.14} parent=0 // pred_fallthru
    _
  // Predicated region
  $region10: #{bert_mrc_ner_forward.14} parent=0 // pred_check
    _
  $region11: #{bert_mrc_ner_forward.14} parent=0 // pred_check_branch
    %18 = sbr.rel (0) target = $region13
  $region12: #{bert_mrc_ner_forward.14} parent=0 // pred_region
    _
  $region13: #{bert_mrc_ner_forward.14} parent=0 // pred_fallthru
    _
  // Predicated region
  $region14: #{bert_mrc_ner_forward.14} parent=0 // pred_check
    _
  $region15: #{bert_mrc_ner_forward.14} parent=0 // pred_check_branch
    %20 = sbr.rel (0) target = $region17
  $region16: #{bert_mrc_ner_forward.14} parent=0 // pred_region
    _
  $region17: #{bert_mrc_ner_forward.14} parent=0 // pred_fallthru
    _
  // Predicated region
  $region18: #{bert_mrc_ner_forward.14} parent=0 // pred_check
    _
  $region19: #{bert_mrc_ner_forward.14} parent=0 // pred_check_branch
    %22 = sbr.rel (0) target = $region21
  $region20: #{bert_mrc_ner_forward.14} parent=0 // pred_region
    _
  $region21: #{bert_mrc_ner_forward.14} parent=0 // pred_fallthru
    _
  // Predicated region
  $region22: #{bert_mrc_ner_forward.14} parent=0 // pred_check
    _
  $region23: #{bert_mrc_ner_forward.14} parent=0 // pred_check_branch
    %24 = sbr.rel (0) target = $region25
  $region24: #{bert_mrc_ner_forward.14} parent=0 // pred_region
    _
  $region25: #{bert_mrc_ner_forward.14} parent=0 // pred_fallthru
    _
  // Predicated region
  $region26: #{bert_mrc_ner_forward.14} parent=0 // pred_check
    _
  $region27: #{bert_mrc_ner_forward.14} parent=0 // pred_check_branch
    %26 = sbr.rel (0) target = $region29
  $region28: #{bert_mrc_ner_forward.14} parent=0 // pred_region
    _
  $region29: #{bert_mrc_ner_forward.14} parent=0 // pred_fallthru
    _
  // Predicated region
  $region30: #{bert_mrc_ner_forward.14} parent=0 // pred_check
    _
  $region31: #{bert_mrc_ner_forward.14} parent=0 // pred_check_branch
    %28 = sbr.rel (0) target = $region33
  $region32: #{bert_mrc_ner_forward.14} parent=0 // pred_region
    _
  $region33: #{bert_mrc_ner_forward.14} parent=0 // pred_fallthru
    _
  %p30 = scmp.eq.s32.totalorder 0, 0
  // Predicated region
  $region34: #{bert_mrc_ner_forward.14} parent=0 // pred_check
    %p31 = pneg %p30
  $region35: #{bert_mrc_ner_forward.14} parent=0 // pred_check_branch
    %33 = sbr.rel (%p31) target = $region37
  $region36: #{bert_mrc_ner_forward.14} parent=0 // pred_region
    %34 = vst [vmem:[#allocation2] sm:$0xff] 0.0
    %35 = vst [vmem:[#allocation2 + $0x8] sm:$0xff] 0.0
    %36 = vst [vmem:[#allocation2 + $0x10] sm:$0xff] 0.0
    %37 = vst [vmem:[#allocation2 + $0x18] sm:$0xff] 0.0
  $region37: #{bert_mrc_ner_forward.14} parent=0 // pred_fallthru
    _
  %v38 = vld [vmem:[%s0] sm:$0xf]
  %v39 = vld [vmem:[%s0 + $0x4] sm:$0xf]
  %v40 = vld [vmem:[%s0 + $0x8] sm:$0xf]
  %v41 = vld [vmem:[%s0 + $0xc] sm:$0xf]
  %v42 = vld [vmem:[%s1] sm:$0xff]
  %v43 = vld [vmem:[%s1 + $0x8] sm:$0xff]
  %v44 = vld [vmem:[%s1 + $0x10] sm:$0xff]
  %v45 = vld [vmem:[%s1 + $0x18] sm:$0xff]
  %v46 = vld [vmem:[%s1 + $0x20] sm:$0xff]
  %v47 = vld [vmem:[%s1 + $0x28] sm:$0xff]
  %v48 = vld [vmem:[%s1 + $0x30] sm:$0xff]
  %v49 = vld [vmem:[%s1 + $0x38] sm:$0xff]
  %v50 = vld [vmem:[%s1 + $0x40] sm:$0xff]
  %v51 = vld [vmem:[%s1 + $0x48] sm:$0xff]
  %v52 = vld [vmem:[%s1 + $0x50] sm:$0xff]
  %v53 = vld [vmem:[%s1 + $0x58] sm:$0xff]
  %v54 = vld [vmem:[%s1 + $0x60] sm:$0xff]
  %v55 = vld [vmem:[%s1 + $0x68] sm:$0xff]
  %v56 = vld [vmem:[%s1 + $0x70] sm:$0xff]
  %v57 = vld [vmem:[%s1 + $0x78] sm:$0xff]
  %v58 = vld [vmem:[%s1 + $0x80] sm:$0xff]
  %v59 = vld [vmem:[%s1 + $0x88] sm:$0xff]
  %v60 = vld [vmem:[%s1 + $0x90] sm:$0xff]
  %v61 = vld [vmem:[%s1 + $0x98] sm:$0xff]
  %v62 = vld [vmem:[%s1 + $0xa0] sm:$0xff]
  %v63 = vld [vmem:[%s1 + $0xa8] sm:$0xff]
  %v64 = vld [vmem:[%s1 + $0xb0] sm:$0xff]
  %v65 = vld [vmem:[%s1 + $0xb8] sm:$0xff]
  %v66 = vld [vmem:[%s1 + $0xc0] sm:$0xff]
  %v67 = vld [vmem:[%s1 + $0xc8] sm:$0xff]
  %v68 = vld [vmem:[%s1 + $0xd0] sm:$0xff]
  %v69 = vld [vmem:[%s1 + $0xd8] sm:$0xff]
  %v70 = vld [vmem:[%s1 + $0xe0] sm:$0xff]
  %v71 = vld [vmem:[%s1 + $0xe8] sm:$0xff]
  %v72 = vld [vmem:[%s1 + $0xf0] sm:$0xff]
  %v73 = vld [vmem:[%s1 + $0xf8] sm:$0xff]
  %v74 = vld [vmem:[%s2] sm:$0xf]
  %v76 = vlaneseq
  %v77 = vshrl.u32 %v76, 7
  %v78 = vsub.s32 0, %v77
  %v79 = vrot.slane %v74, %v78
  %v80 = vlaneseq
  %v81 = vshrl.u32 %v80, 7
  %v82 = vsub.s32 1, %v81
  %v83 = vrot.slane %v74, %v82
  %v84 = vlaneseq
  %v85 = vshrl.u32 %v84, 7
  %v86 = vsub.s32 2, %v85
  %v87 = vrot.slane %v74, %v86
  %v88 = vlaneseq
  %v89 = vshrl.u32 %v88, 7
  %v90 = vsub.s32 3, %v89
  %v91 = vrot.slane %v74, %v90
  %v100 = vunpack.c.l.b16 %v38
  %v101 = vunpack.c.l.b16 %v39
  %v102 = vunpack.c.l.b16 %v40
  %v103 = vunpack.c.l.b16 %v41
  %v104 = vpack.c.b16 %v101, %v100
  %v105 = vpack.c.b16 %v103, %v102
  %v140 = vunpack.c.l.b16 %v42
  %v141 = vunpack.c.h.b16 %v42
  %v142 = vunpack.c.l.b16 %v43
  %v143 = vunpack.c.h.b16 %v43
  %v144 = vunpack.c.l.b16 %v44
  %v145 = vunpack.c.h.b16 %v44
  %v146 = vunpack.c.l.b16 %v45
  %v147 = vunpack.c.h.b16 %v45
  %v148 = vunpack.c.l.b16 %v46
  %v149 = vunpack.c.h.b16 %v46
  %v150 = vunpack.c.l.b16 %v47
  %v151 = vunpack.c.h.b16 %v47
  %v152 = vunpack.c.l.b16 %v48
  %v153 = vunpack.c.h.b16 %v48
  %v154 = vunpack.c.l.b16 %v49
  %v155 = vunpack.c.h.b16 %v49
  %v156 = vunpack.c.l.b16 %v50
  %v157 = vunpack.c.h.b16 %v50
  %v158 = vunpack.c.l.b16 %v51
  %v159 = vunpack.c.h.b16 %v51
  %v160 = vunpack.c.l.b16 %v52
  %v161 = vunpack.c.h.b16 %v52
  %v162 = vunpack.c.l.b16 %v53
  %v163 = vunpack.c.h.b16 %v53
  %v164 = vunpack.c.l.b16 %v54
  %v165 = vunpack.c.h.b16 %v54
  %v166 = vunpack.c.l.b16 %v55
  %v167 = vunpack.c.h.b16 %v55
  %v168 = vunpack.c.l.b16 %v56
  %v169 = vunpack.c.h.b16 %v56
  %v170 = vunpack.c.l.b16 %v57
  %v171 = vunpack.c.h.b16 %v57
  %v172 = vunpack.c.l.b16 %v58
  %v173 = vunpack.c.h.b16 %v58
  %v174 = vunpack.c.l.b16 %v59
  %v175 = vunpack.c.h.b16 %v59
  %v176 = vunpack.c.l.b16 %v60
  %v177 = vunpack.c.h.b16 %v60
  %v178 = vunpack.c.l.b16 %v61
  %v179 = vunpack.c.h.b16 %v61
  %v180 = vunpack.c.l.b16 %v62
  %v181 = vunpack.c.h.b16 %v62
  %v182 = vunpack.c.l.b16 %v63
  %v183 = vunpack.c.h.b16 %v63
  %v184 = vunpack.c.l.b16 %v64
  %v185 = vunpack.c.h.b16 %v64
  %v186 = vunpack.c.l.b16 %v65
  %v187 = vunpack.c.h.b16 %v65
  %v188 = vunpack.c.l.b16 %v66
  %v189 = vunpack.c.h.b16 %v66
  %v190 = vunpack.c.l.b16 %v67
  %v191 = vunpack.c.h.b16 %v67
  %v192 = vunpack.c.l.b16 %v68
  %v193 = vunpack.c.h.b16 %v68
  %v194 = vunpack.c.l.b16 %v69
  %v195 = vunpack.c.h.b16 %v69
  %v196 = vunpack.c.l.b16 %v70
  %v197 = vunpack.c.h.b16 %v70
  %v198 = vunpack.c.l.b16 %v71
  %v199 = vunpack.c.h.b16 %v71
  %v200 = vunpack.c.l.b16 %v72
  %v201 = vunpack.c.h.b16 %v72
  %v202 = vunpack.c.l.b16 %v73
  %v203 = vunpack.c.h.b16 %v73
  %v204 = vpack.c.b16 %v144, %v140
  %v205 = vpack.c.b16 %v145, %v141
  %v206 = vpack.c.b16 %v146, %v142
  %v207 = vpack.c.b16 %v147, %v143
  %v208 = vpack.c.b16 %v152, %v148
  %v209 = vpack.c.b16 %v153, %v149
  %v210 = vpack.c.b16 %v154, %v150
  %v211 = vpack.c.b16 %v155, %v151
  %v212 = vpack.c.b16 %v160, %v156
  %v213 = vpack.c.b16 %v161, %v157
  %v214 = vpack.c.b16 %v162, %v158
  %v215 = vpack.c.b16 %v163, %v159
  %v216 = vpack.c.b16 %v168, %v164
  %v217 = vpack.c.b16 %v169, %v165
  %v218 = vpack.c.b16 %v170, %v166
  %v219 = vpack.c.b16 %v171, %v167
  %v220 = vpack.c.b16 %v176, %v172
  %v221 = vpack.c.b16 %v177, %v173
  %v222 = vpack.c.b16 %v178, %v174
  %v223 = vpack.c.b16 %v179, %v175
  %v224 = vpack.c.b16 %v184, %v180
  %v225 = vpack.c.b16 %v185, %v181
  %v226 = vpack.c.b16 %v186, %v182
  %v227 = vpack.c.b16 %v187, %v183
  %v228 = vpack.c.b16 %v192, %v188
  %v229 = vpack.c.b16 %v193, %v189
  %v230 = vpack.c.b16 %v194, %v190
  %v231 = vpack.c.b16 %v195, %v191
  %v232 = vpack.c.b16 %v200, %v196
  %v233 = vpack.c.b16 %v201, %v197
  %v234 = vpack.c.b16 %v202, %v198
  %v235 = vpack.c.b16 %v203, %v199
  %268 = vmatprep.subr.bf16.mxu0 %v233
  %269 = vmatpush1.bf16.msra.mxu0 %v232
  %270 = vmatprep.subr.bf16.mxu0 %v229
  %271 = vmatpush1.bf16.msra.mxu0 %v228
  %272 = vmatprep.subr.bf16.mxu0 %v225
  %273 = vmatpush1.bf16.msra.mxu0 %v224
  %274 = vmatprep.subr.bf16.mxu0 %v221
  %275 = vmatpush1.bf16.msra.mxu0 %v220
  %276 = vmatprep.subr.bf16.mxu0 %v217
  %277 = vmatpush1.bf16.msra.mxu0 %v216
  %278 = vmatprep.subr.bf16.mxu0 %v213
  %279 = vmatpush1.bf16.msra.mxu0 %v212
  %280 = vmatprep.subr.bf16.mxu0 %v209
  %281 = vmatpush1.bf16.msra.mxu0 %v208
  %282 = vmatprep.subr.bf16.mxu0 %v205
  %283 = vmatpush1.bf16.msra.mxu0 %v204
  %284 = vmatprep.subr.bf16.mxu0 0
  %285 = vmatpush2.bf16.msra.mxu0 0
  %286 = vmatprep.subr.bf16.mxu0 0
  %287 = vmatpush2.bf16.msra.mxu0 0
  %288 = vmatprep.subr.bf16.mxu0 0
  %289 = vmatpush2.bf16.msra.mxu0 0
  %290 = vmatprep.subr.bf16.mxu0 0
  %291 = vmatpush2.bf16.msra.mxu0 0
  %292 = vmatprep.subr.bf16.mxu0 0
  %293 = vmatpush2.bf16.msra.mxu0 0
  %294 = vmatprep.subr.bf16.mxu0 0
  %295 = vmatpush2.bf16.msra.mxu0 0
  %296 = vmatprep.subr.bf16.mxu0 0
  %297 = vmatpush2.bf16.msra.mxu0 0
  %298 = vmatprep.subr.bf16.mxu0 0
  %299 = vmatpush2.bf16.msra.mxu0 0
  %300 = vmatprep.mubr.bf16.mxu0 0
  %301 = vmatmul.mubr.bf16.gmra.mxu0 %v104
  %v302 = vpop.f32.mrf.mxu0
  %v303 = vadd.f32 %v79, %v302
  %v304 = vpop.f32.mrf.mxu0
  %v305 = vadd.f32 %v83, %v304
  %v306 = vpop.f32.mrf.mxu0
  %v307 = vadd.f32 %v79, %v306
  %v308 = vpop.f32.mrf.mxu0
  %v309 = vadd.f32 %v83, %v308
  %310 = vmatprep.mubr.bf16.mxu0 0
  %311 = vmatmul.mubr.bf16.gmra.mxu0 %v105
  %v312 = vpop.f32.mrf.mxu0
  %v313 = vadd.f32 %v79, %v312
  %v314 = vpop.f32.mrf.mxu0
  %v315 = vadd.f32 %v83, %v314
  %v316 = vpop.f32.mrf.mxu0
  %v317 = vadd.f32 %v79, %v316
  %v318 = vpop.f32.mrf.mxu0
  %v319 = vadd.f32 %v83, %v318
  %320 = vdwg.mxu0
  %321 = vmatprep.subr.bf16.mxu0 %v235
  %322 = vmatpush1.bf16.msra.mxu0 %v234
  %323 = vmatprep.subr.bf16.mxu0 %v231
  %324 = vmatpush1.bf16.msra.mxu0 %v230
  %325 = vmatprep.subr.bf16.mxu0 %v227
  %326 = vmatpush1.bf16.msra.mxu0 %v226
  %327 = vmatprep.subr.bf16.mxu0 %v223
  %328 = vmatpush1.bf16.msra.mxu0 %v222
  %329 = vmatprep.subr.bf16.mxu0 %v219
  %330 = vmatpush1.bf16.msra.mxu0 %v218
  %331 = vmatprep.subr.bf16.mxu0 %v215
  %332 = vmatpush1.bf16.msra.mxu0 %v214
  %333 = vmatprep.subr.bf16.mxu0 %v211
  %334 = vmatpush1.bf16.msra.mxu0 %v210
  %335 = vmatprep.subr.bf16.mxu0 %v207
  %336 = vmatpush1.bf16.msra.mxu0 %v206
  %337 = vmatprep.subr.bf16.mxu0 0
  %338 = vmatpush2.bf16.msra.mxu0 0
  %339 = vmatprep.subr.bf16.mxu0 0
  %340 = vmatpush2.bf16.msra.mxu0 0
  %341 = vmatprep.subr.bf16.mxu0 0
  %342 = vmatpush2.bf16.msra.mxu0 0
  %343 = vmatprep.subr.bf16.mxu0 0
  %344 = vmatpush2.bf16.msra.mxu0 0
  %345 = vmatprep.subr.bf16.mxu0 0
  %346 = vmatpush2.bf16.msra.mxu0 0
  %347 = vmatprep.subr.bf16.mxu0 0
  %348 = vmatpush2.bf16.msra.mxu0 0
  %349 = vmatprep.subr.bf16.mxu0 0
  %350 = vmatpush2.bf16.msra.mxu0 0
  %351 = vmatprep.subr.bf16.mxu0 0
  %352 = vmatpush2.bf16.msra.mxu0 0
  %353 = vmatprep.mubr.bf16.mxu0 0
  %354 = vmatmul.mubr.bf16.gmra.mxu0 %v104
  %v355 = vpop.f32.mrf.mxu0
  %v356 = vadd.f32 %v87, %v355
  %v357 = vpop.f32.mrf.mxu0
  %v358 = vadd.f32 %v91, %v357
  %v359 = vpop.f32.mrf.mxu0
  %v360 = vadd.f32 %v87, %v359
  %v361 = vpop.f32.mrf.mxu0
  %v362 = vadd.f32 %v91, %v361
  %363 = vmatprep.mubr.bf16.mxu0 0
  %364 = vmatmul.mubr.bf16.gmra.mxu0 %v105
  %v365 = vpop.f32.mrf.mxu0
  %v366 = vadd.f32 %v87, %v365
  %v367 = vpop.f32.mrf.mxu0
  %v368 = vadd.f32 %v91, %v367
  %v369 = vpop.f32.mrf.mxu0
  %v370 = vadd.f32 %v87, %v369
  %v371 = vpop.f32.mrf.mxu0
  %v372 = vadd.f32 %v91, %v371
  %373 = vdwg.mxu0
  %v374 = vmul.f32 %v303, 1.702
  %v375 = vmul.f32 %v305, 1.702
  %v376 = vmul.f32 %v356, 1.702
  %v377 = vmul.f32 %v358, 1.702
  %v378 = vmul.f32 %v307, 1.702
  %v379 = vmul.f32 %v309, 1.702
  %v380 = vmul.f32 %v360, 1.702
  %v381 = vmul.f32 %v362, 1.702
  %v382 = vmul.f32 %v313, 1.702
  %v383 = vmul.f32 %v315, 1.702
  %v384 = vmul.f32 %v366, 1.702
  %v385 = vmul.f32 %v368, 1.702
  %v386 = vmul.f32 %v317, 1.702
  %v387 = vmul.f32 %v319, 1.702
  %v388 = vmul.f32 %v370, 1.702
  %v389 = vmul.f32 %v372, 1.702
  %v390 = vxor.u32 %v374, 2147483648
  %v391 = vxor.u32 %v375, 2147483648
  %v392 = vxor.u32 %v376, 2147483648
  %v393 = vxor.u32 %v377, 2147483648
  %v394 = vxor.u32 %v378, 2147483648
  %v395 = vxor.u32 %v379, 2147483648
  %v396 = vxor.u32 %v380, 2147483648
  %v397 = vxor.u32 %v381, 2147483648
  %v398 = vxor.u32 %v382, 2147483648
  %v399 = vxor.u32 %v383, 2147483648
  %v400 = vxor.u32 %v384, 2147483648
  %v401 = vxor.u32 %v385, 2147483648
  %v402 = vxor.u32 %v386, 2147483648
  %v403 = vxor.u32 %v387, 2147483648
  %v404 = vxor.u32 %v388, 2147483648
  %v405 = vxor.u32 %v389, 2147483648
  %v406 = vmul.f32 %v390, 1.442695
  %v407 = vpow.pop %v406
  %v408 = vmul.f32 %v391, 1.442695
  %v409 = vpow.pop %v408
  %v410 = vmul.f32 %v392, 1.442695
  %v411 = vpow.pop %v410
  %v412 = vmul.f32 %v393, 1.442695
  %v413 = vpow.pop %v412
  %v414 = vmul.f32 %v394, 1.442695
  %v415 = vpow.pop %v414
  %v416 = vmul.f32 %v395, 1.442695
  %v417 = vpow.pop %v416
  %v418 = vmul.f32 %v396, 1.442695
  %v419 = vpow.pop %v418
  %v420 = vmul.f32 %v397, 1.442695
  %v421 = vpow.pop %v420
  %v422 = vmul.f32 %v398, 1.442695
  %v423 = vpow.pop %v422
  %v424 = vmul.f32 %v399, 1.442695
  %v425 = vpow.pop %v424
  %v426 = vmul.f32 %v400, 1.442695
  %v427 = vpow.pop %v426
  %v428 = vmul.f32 %v401, 1.442695
  %v429 = vpow.pop %v428
  %v430 = vmul.f32 %v402, 1.442695
  %v431 = vpow.pop %v430
  %v432 = vmul.f32 %v403, 1.442695
  %v433 = vpow.pop %v432
  %v434 = vmul.f32 %v404, 1.442695
  %v435 = vpow.pop %v434
  %v436 = vmul.f32 %v405, 1.442695
  %v437 = vpow.pop %v436
  %v438 = vadd.f32 %v407, 1.0
  %v439 = vadd.f32 %v409, 1.0
  %v440 = vadd.f32 %v411, 1.0
  %v441 = vadd.f32 %v413, 1.0
  %v442 = vadd.f32 %v415, 1.0
  %v443 = vadd.f32 %v417, 1.0
  %v444 = vadd.f32 %v419, 1.0
  %v445 = vadd.f32 %v421, 1.0
  %v446 = vadd.f32 %v423, 1.0
  %v447 = vadd.f32 %v425, 1.0
  %v448 = vadd.f32 %v427, 1.0
  %v449 = vadd.f32 %v429, 1.0
  %v450 = vadd.f32 %v431, 1.0
  %v451 = vadd.f32 %v433, 1.0
  %v452 = vadd.f32 %v435, 1.0
  %v453 = vadd.f32 %v437, 1.0
  %v454 = vrcp.pop %v438
  %v455 = vmul.f32 1.0, %v454
  %v456 = vrcp.pop %v439
  %v457 = vmul.f32 1.0, %v456
  %v458 = vrcp.pop %v440
  %v459 = vmul.f32 1.0, %v458
  %v460 = vrcp.pop %v441
  %v461 = vmul.f32 1.0, %v460
  %v462 = vrcp.pop %v442
  %v463 = vmul.f32 1.0, %v462
  %v464 = vrcp.pop %v443
  %v465 = vmul.f32 1.0, %v464
  %v466 = vrcp.pop %v444
  %v467 = vmul.f32 1.0, %v466
  %v468 = vrcp.pop %v445
  %v469 = vmul.f32 1.0, %v468
  %v470 = vrcp.pop %v446
  %v471 = vmul.f32 1.0, %v470
  %v472 = vrcp.pop %v447
  %v473 = vmul.f32 1.0, %v472
  %v474 = vrcp.pop %v448
  %v475 = vmul.f32 1.0, %v474
  %v476 = vrcp.pop %v449
  %v477 = vmul.f32 1.0, %v476
  %v478 = vrcp.pop %v450
  %v479 = vmul.f32 1.0, %v478
  %v480 = vrcp.pop %v451
  %v481 = vmul.f32 1.0, %v480
  %v482 = vrcp.pop %v452
  %v483 = vmul.f32 1.0, %v482
  %v484 = vrcp.pop %v453
  %v485 = vmul.f32 1.0, %v484
  %v486 = vmul.f32 %v303, %v455
  %v487 = vmul.f32 %v305, %v457
  %v488 = vmul.f32 %v356, %v459
  %v489 = vmul.f32 %v358, %v461
  %v490 = vmul.f32 %v307, %v463
  %v491 = vmul.f32 %v309, %v465
  %v492 = vmul.f32 %v360, %v467
  %v493 = vmul.f32 %v362, %v469
  %v494 = vmul.f32 %v313, %v471
  %v495 = vmul.f32 %v315, %v473
  %v496 = vmul.f32 %v366, %v475
  %v497 = vmul.f32 %v368, %v477
  %v498 = vmul.f32 %v317, %v479
  %v499 = vmul.f32 %v319, %v481
  %v500 = vmul.f32 %v370, %v483
  %v501 = vmul.f32 %v372, %v485
  %v502 = vld [vmem:[#allocation2] sm:$0xff]
  %v503 = vld [vmem:[#allocation2 + $0x8] sm:$0xff]
  %v504 = vld [vmem:[#allocation2 + $0x10] sm:$0xff]
  %v505 = vld [vmem:[#allocation2 + $0x18] sm:$0xff]
  %v506 = vpack.c.bf16 %v490, %v486
  %v507 = vpack.c.bf16 %v491, %v487
  %v508 = vpack.c.bf16 %v492, %v488
  %v509 = vpack.c.bf16 %v493, %v489
  %v510 = vpack.c.bf16 %v498, %v494
  %v511 = vpack.c.bf16 %v499, %v495
  %v512 = vpack.c.bf16 %v500, %v496
  %v513 = vpack.c.bf16 %v501, %v497
  %v514 = vld [vmem:[%s3] sm:$0xf]
  %v515 = vld [vmem:[%s3 + $0x4] sm:$0xf]
  %v516 = vld [vmem:[%s3 + $0x8] sm:$0xf]
  %v517 = vld [vmem:[%s3 + $0xc] sm:$0xf]
  %v518 = vld [vmem:[%s3 + $0x10] sm:$0xf]
  %v519 = vld [vmem:[%s3 + $0x14] sm:$0xf]
  %v520 = vld [vmem:[%s3 + $0x18] sm:$0xf]
  %v521 = vld [vmem:[%s3 + $0x1c] sm:$0xf]
  %v522 = vld [vmem:[%s3 + $0x20] sm:$0xf]
  %v523 = vld [vmem:[%s3 + $0x24] sm:$0xf]
  %v524 = vld [vmem:[%s3 + $0x28] sm:$0xf]
  %v525 = vld [vmem:[%s3 + $0x2c] sm:$0xf]
  %v526 = vld [vmem:[%s3 + $0x30] sm:$0xf]
  %v527 = vld [vmem:[%s3 + $0x34] sm:$0xf]
  %v528 = vld [vmem:[%s3 + $0x38] sm:$0xf]
  %v529 = vld [vmem:[%s3 + $0x3c] sm:$0xf]
  %v530 = vld [vmem:[%s3 + $0x40] sm:$0xf]
  %v531 = vld [vmem:[%s3 + $0x44] sm:$0xf]
  %v532 = vld [vmem:[%s3 + $0x48] sm:$0xf]
  %v533 = vld [vmem:[%s3 + $0x4c] sm:$0xf]
  %v534 = vld [vmem:[%s3 + $0x50] sm:$0xf]
  %v535 = vld [vmem:[%s3 + $0x54] sm:$0xf]
  %v536 = vld [vmem:[%s3 + $0x58] sm:$0xf]
  %v537 = vld [vmem:[%s3 + $0x5c] sm:$0xf]
  %v538 = vld [vmem:[%s3 + $0x60] sm:$0xf]
  %v539 = vld [vmem:[%s3 + $0x64] sm:$0xf]
  %v540 = vld [vmem:[%s3 + $0x68] sm:$0xf]
  %v541 = vld [vmem:[%s3 + $0x6c] sm:$0xf]
  %v542 = vld [vmem:[%s3 + $0x70] sm:$0xf]
  %v543 = vld [vmem:[%s3 + $0x74] sm:$0xf]
  %v544 = vld [vmem:[%s3 + $0x78] sm:$0xf]
  %v545 = vld [vmem:[%s3 + $0x7c] sm:$0xf]
  %v546 = vld [vmem:[%s3 + $0x80] sm:$0xf]
  %v547 = vld [vmem:[%s3 + $0x84] sm:$0xf]
  %v548 = vld [vmem:[%s3 + $0x88] sm:$0xf]
  %v549 = vld [vmem:[%s3 + $0x8c] sm:$0xf]
  %v550 = vld [vmem:[%s3 + $0x90] sm:$0xf]
  %v551 = vld [vmem:[%s3 + $0x94] sm:$0xf]
  %v552 = vld [vmem:[%s3 + $0x98] sm:$0xf]
  %v553 = vld [vmem:[%s3 + $0x9c] sm:$0xf]
  %v554 = vld [vmem:[%s3 + $0xa0] sm:$0xf]
  %v555 = vld [vmem:[%s3 + $0xa4] sm:$0xf]
  %v556 = vld [vmem:[%s3 + $0xa8] sm:$0xf]
  %v557 = vld [vmem:[%s3 + $0xac] sm:$0xf]
  %v558 = vld [vmem:[%s3 + $0xb0] sm:$0xf]
  %v559 = vld [vmem:[%s3 + $0xb4] sm:$0xf]
  %v560 = vld [vmem:[%s3 + $0xb8] sm:$0xf]
  %v561 = vld [vmem:[%s3 + $0xbc] sm:$0xf]
  %v562 = vld [vmem:[%s3 + $0xc0] sm:$0xf]
  %v563 = vld [vmem:[%s3 + $0xc4] sm:$0xf]
  %v564 = vld [vmem:[%s3 + $0xc8] sm:$0xf]
  %v565 = vld [vmem:[%s3 + $0xcc] sm:$0xf]
  %v566 = vld [vmem:[%s3 + $0xd0] sm:$0xf]
  %v567 = vld [vmem:[%s3 + $0xd4] sm:$0xf]
  %v568 = vld [vmem:[%s3 + $0xd8] sm:$0xf]
  %v569 = vld [vmem:[%s3 + $0xdc] sm:$0xf]
  %v570 = vld [vmem:[%s3 + $0xe0] sm:$0xf]
  %v571 = vld [vmem:[%s3 + $0xe4] sm:$0xf]
  %v572 = vld [vmem:[%s3 + $0xe8] sm:$0xf]
  %v573 = vld [vmem:[%s3 + $0xec] sm:$0xf]
  %v574 = vld [vmem:[%s3 + $0xf0] sm:$0xf]
  %v575 = vld [vmem:[%s3 + $0xf4] sm:$0xf]
  %v576 = vld [vmem:[%s3 + $0xf8] sm:$0xf]
  %v577 = vld [vmem:[%s3 + $0xfc] sm:$0xf]
  %v642 = vunpack.c.l.b16 %v514
  %v643 = vunpack.c.l.b16 %v515
  %v644 = vunpack.c.l.b16 %v516
  %v645 = vunpack.c.l.b16 %v517
  %v646 = vunpack.c.l.b16 %v518
  %v647 = vunpack.c.l.b16 %v519
  %v648 = vunpack.c.l.b16 %v520
  %v649 = vunpack.c.l.b16 %v521
  %v650 = vunpack.c.l.b16 %v522
  %v651 = vunpack.c.l.b16 %v523
  %v652 = vunpack.c.l.b16 %v524
  %v653 = vunpack.c.l.b16 %v525
  %v654 = vunpack.c.l.b16 %v526
  %v655 = vunpack.c.l.b16 %v527
  %v656 = vunpack.c.l.b16 %v528
  %v657 = vunpack.c.l.b16 %v529
  %v658 = vunpack.c.l.b16 %v530
  %v659 = vunpack.c.l.b16 %v531
  %v660 = vunpack.c.l.b16 %v532
  %v661 = vunpack.c.l.b16 %v533
  %v662 = vunpack.c.l.b16 %v534
  %v663 = vunpack.c.l.b16 %v535
  %v664 = vunpack.c.l.b16 %v536
  %v665 = vunpack.c.l.b16 %v537
  %v666 = vunpack.c.l.b16 %v538
  %v667 = vunpack.c.l.b16 %v539
  %v668 = vunpack.c.l.b16 %v540
  %v669 = vunpack.c.l.b16 %v541
  %v670 = vunpack.c.l.b16 %v542
  %v671 = vunpack.c.l.b16 %v543
  %v672 = vunpack.c.l.b16 %v544
  %v673 = vunpack.c.l.b16 %v545
  %v674 = vunpack.c.l.b16 %v546
  %v675 = vunpack.c.l.b16 %v547
  %v676 = vunpack.c.l.b16 %v548
  %v677 = vunpack.c.l.b16 %v549
  %v678 = vunpack.c.l.b16 %v550
  %v679 = vunpack.c.l.b16 %v551
  %v680 = vunpack.c.l.b16 %v552
  %v681 = vunpack.c.l.b16 %v553
  %v682 = vunpack.c.l.b16 %v554
  %v683 = vunpack.c.l.b16 %v555
  %v684 = vunpack.c.l.b16 %v556
  %v685 = vunpack.c.l.b16 %v557
  %v686 = vunpack.c.l.b16 %v558
  %v687 = vunpack.c.l.b16 %v559
  %v688 = vunpack.c.l.b16 %v560
  %v689 = vunpack.c.l.b16 %v561
  %v690 = vunpack.c.l.b16 %v562
  %v691 = vunpack.c.l.b16 %v563
  %v692 = vunpack.c.l.b16 %v564
  %v693 = vunpack.c.l.b16 %v565
  %v694 = vunpack.c.l.b16 %v566
  %v695 = vunpack.c.l.b16 %v567
  %v696 = vunpack.c.l.b16 %v568
  %v697 = vunpack.c.l.b16 %v569
  %v698 = vunpack.c.l.b16 %v570
  %v699 = vunpack.c.l.b16 %v571
  %v700 = vunpack.c.l.b16 %v572
  %v701 = vunpack.c.l.b16 %v573
  %v702 = vunpack.c.l.b16 %v574
  %v703 = vunpack.c.l.b16 %v575
  %v704 = vunpack.c.l.b16 %v576
  %v705 = vunpack.c.l.b16 %v577
  %v706 = vpack.c.b16 %v643, %v642
  %v707 = vpack.c.b16 %v645, %v644
  %v708 = vpack.c.b16 %v647, %v646
  %v709 = vpack.c.b16 %v649, %v648
  %v710 = vpack.c.b16 %v651, %v650
  %v711 = vpack.c.b16 %v653, %v652
  %v712 = vpack.c.b16 %v655, %v654
  %v713 = vpack.c.b16 %v657, %v656
  %v714 = vpack.c.b16 %v659, %v658
  %v715 = vpack.c.b16 %v661, %v660
  %v716 = vpack.c.b16 %v663, %v662
  %v717 = vpack.c.b16 %v665, %v664
  %v718 = vpack.c.b16 %v667, %v666
  %v719 = vpack.c.b16 %v669, %v668
  %v720 = vpack.c.b16 %v671, %v670
  %v721 = vpack.c.b16 %v673, %v672
  %v722 = vpack.c.b16 %v675, %v674
  %v723 = vpack.c.b16 %v677, %v676
  %v724 = vpack.c.b16 %v679, %v678
  %v725 = vpack.c.b16 %v681, %v680
  %v726 = vpack.c.b16 %v683, %v682
  %v727 = vpack.c.b16 %v685, %v684
  %v728 = vpack.c.b16 %v687, %v686
  %v729 = vpack.c.b16 %v689, %v688
  %v730 = vpack.c.b16 %v691, %v690
  %v731 = vpack.c.b16 %v693, %v692
  %v732 = vpack.c.b16 %v695, %v694
  %v733 = vpack.c.b16 %v697, %v696
  %v734 = vpack.c.b16 %v699, %v698
  %v735 = vpack.c.b16 %v701, %v700
  %v736 = vpack.c.b16 %v703, %v702
  %v737 = vpack.c.b16 %v705, %v704
  %770 = vmatprep.subr.bf16.mxu0 0
  %771 = vmatpush1.bf16.msra.mxu0 %v713
  %772 = vmatprep.subr.bf16.mxu0 0
  %773 = vmatpush1.bf16.msra.mxu0 %v712
  %774 = vmatprep.subr.bf16.mxu0 0
  %775 = vmatpush1.bf16.msra.mxu0 %v711
  %776 = vmatprep.subr.bf16.mxu0 0
  %777 = vmatpush1.bf16.msra.mxu0 %v710
  %778 = vmatprep.subr.bf16.mxu0 0
  %779 = vmatpush1.bf16.msra.mxu0 %v709
  %780 = vmatprep.subr.bf16.mxu0 0
  %781 = vmatpush1.bf16.msra.mxu0 %v708
  %782 = vmatprep.subr.bf16.mxu0 0
  %783 = vmatpush1.bf16.msra.mxu0 %v707
  %784 = vmatprep.subr.bf16.mxu0 0
  %785 = vmatpush1.bf16.msra.mxu0 %v706
  %786 = vmatprep.subr.bf16.mxu0 0
  %787 = vmatpush2.bf16.msra.mxu0 %v721
  %788 = vmatprep.subr.bf16.mxu0 0
  %789 = vmatpush2.bf16.msra.mxu0 %v720
  %790 = vmatprep.subr.bf16.mxu0 0
  %791 = vmatpush2.bf16.msra.mxu0 %v719
  %792 = vmatprep.subr.bf16.mxu0 0
  %793 = vmatpush2.bf16.msra.mxu0 %v718
  %794 = vmatprep.subr.bf16.mxu0 0
  %795 = vmatpush2.bf16.msra.mxu0 %v717
  %796 = vmatprep.subr.bf16.mxu0 0
  %797 = vmatpush2.bf16.msra.mxu0 %v716
  %798 = vmatprep.subr.bf16.mxu0 0
  %799 = vmatpush2.bf16.msra.mxu0 %v715
  %800 = vmatprep.subr.bf16.mxu0 0
  %801 = vmatpush2.bf16.msra.mxu0 %v714
  %802 = vmatprep.mubr.bf16.mxu0 %v507
  %803 = vmatmul.mubr.bf16.gmra.mxu0 %v506
  %v804 = vpop.f32.mrf.mxu0
  %v805 = vadd.f32 0.0, %v804
  %v806 = vpop.f32.mrf.mxu0
  %v807 = vpop.f32.mrf.mxu0
  %v808 = vadd.f32 0.0, %v807
  %v809 = vpop.f32.mrf.mxu0
  %810 = vmatprep.mubr.bf16.mxu0 %v511
  %811 = vmatmul.mubr.bf16.gmra.mxu0 %v510
  %v812 = vpop.f32.mrf.mxu0
  %v813 = vadd.f32 0.0, %v812
  %v814 = vpop.f32.mrf.mxu0
  %v815 = vpop.f32.mrf.mxu0
  %v816 = vadd.f32 0.0, %v815
  %v817 = vpop.f32.mrf.mxu0
  %818 = vdwg.mxu0
  %819 = vmatprep.subr.bf16.mxu0 0
  %820 = vmatpush1.bf16.msra.mxu0 %v729
  %821 = vmatprep.subr.bf16.mxu0 0
  %822 = vmatpush1.bf16.msra.mxu0 %v728
  %823 = vmatprep.subr.bf16.mxu0 0
  %824 = vmatpush1.bf16.msra.mxu0 %v727
  %825 = vmatprep.subr.bf16.mxu0 0
  %826 = vmatpush1.bf16.msra.mxu0 %v726
  %827 = vmatprep.subr.bf16.mxu0 0
  %828 = vmatpush1.bf16.msra.mxu0 %v725
  %829 = vmatprep.subr.bf16.mxu0 0
  %830 = vmatpush1.bf16.msra.mxu0 %v724
  %831 = vmatprep.subr.bf16.mxu0 0
  %832 = vmatpush1.bf16.msra.mxu0 %v723
  %833 = vmatprep.subr.bf16.mxu0 0
  %834 = vmatpush1.bf16.msra.mxu0 %v722
  %835 = vmatprep.subr.bf16.mxu0 0
  %836 = vmatpush2.bf16.msra.mxu0 %v737
  %837 = vmatprep.subr.bf16.mxu0 0
  %838 = vmatpush2.bf16.msra.mxu0 %v736
  %839 = vmatprep.subr.bf16.mxu0 0
  %840 = vmatpush2.bf16.msra.mxu0 %v735
  %841 = vmatprep.subr.bf16.mxu0 0
  %842 = vmatpush2.bf16.msra.mxu0 %v734
  %843 = vmatprep.subr.bf16.mxu0 0
  %844 = vmatpush2.bf16.msra.mxu0 %v733
  %845 = vmatprep.subr.bf16.mxu0 0
  %846 = vmatpush2.bf16.msra.mxu0 %v732
  %847 = vmatprep.subr.bf16.mxu0 0
  %848 = vmatpush2.bf16.msra.mxu0 %v731
  %849 = vmatprep.subr.bf16.mxu0 0
  %850 = vmatpush2.bf16.msra.mxu0 %v730
  %851 = vmatprep.mubr.bf16.mxu0 %v509
  %852 = vmatmul.mubr.bf16.gmra.mxu0 %v508
  %v853 = vpop.f32.mrf.mxu0
  %v854 = vadd.f32 %v805, %v853
  %v855 = vpop.f32.mrf.mxu0
  %v856 = vpop.f32.mrf.mxu0
  %v857 = vadd.f32 %v808, %v856
  %v858 = vpop.f32.mrf.mxu0
  %859 = vmatprep.mubr.bf16.mxu0 %v513
  %860 = vmatmul.mubr.bf16.gmra.mxu0 %v512
  %v861 = vpop.f32.mrf.mxu0
  %v862 = vadd.f32 %v813, %v861
  %v863 = vpop.f32.mrf.mxu0
  %v864 = vpop.f32.mrf.mxu0
  %v865 = vadd.f32 %v816, %v864
  %v866 = vpop.f32.mrf.mxu0
  %867 = vdwg.mxu0
  %v868 = vadd.f32 %v502, %v854
  %v869 = vadd.f32 %v503, %v857
  %v870 = vadd.f32 %v504, %v862
  %v871 = vadd.f32 %v505, %v865
  %872 = vst [vmem:[#allocation2] sm:$0xff] %v868
  %873 = vst [vmem:[#allocation2 + $0x8] sm:$0xff] %v869
  %874 = vst [vmem:[#allocation2 + $0x10] sm:$0xff] %v870
  %875 = vst [vmem:[#allocation2 + $0x18] sm:$0xff] %v871
  // Predicated region
  $region38: #{bert_mrc_ner_forward.14} parent=0 // pred_check
    %p876 = pneg %p30
  $region39: #{bert_mrc_ner_forward.14} parent=0 // pred_check_branch
    %878 = sbr.rel (%p876) target = $region41
  $region40: #{bert_mrc_ner_forward.14} parent=0 // pred_region
    %v879 = vld [vmem:[#allocation2] sm:$0xff]
    %v880 = vld [vmem:[#allocation2 + $0x8] sm:$0xff]
    %v881 = vld [vmem:[#allocation2 + $0x10] sm:$0xff]
    %v882 = vld [vmem:[#allocation2 + $0x18] sm:$0xff]
    %v883 = vld [vmem:[%s4] sm:$0x1]
    %v885 = vlaneseq
    %v886 = vshrl.u32 %v885, 7
    %v887 = vsub.s32 0, %v886
    %v888 = vrot.slane %v883, %v887
    %v890 = vadd.f32 %v879, %v888
    %v891 = vadd.f32 %v880, %v888
    %v892 = vadd.f32 %v881, %v888
    %v893 = vadd.f32 %v882, %v888
    %v894 = vld [vmem:[%s5] sm:$0xf]
    %v895 = vld [vmem:[%s5 + $0x4] sm:$0xf]
    %v896 = vld [vmem:[%s5 + $0x8] sm:$0xf]
    %v897 = vld [vmem:[%s5 + $0xc] sm:$0xf]
    %v898 = vunpack.c.l.bf16 %v894
    %v899 = vunpack.c.l.bf16 %v895
    %v900 = vunpack.c.l.bf16 %v896
    %v901 = vunpack.c.l.bf16 %v897
    %v902 = vadd.f32 %v890, %v898
    %v903 = vadd.f32 %v891, %v899
    %v904 = vadd.f32 %v892, %v900
    %v905 = vadd.f32 %v893, %v901
    %906 = vadd.xlane.f32.xlu0 %v902
    %v907 = vpop.xlane.xlu0 %906
    %908 = vadd.xlane.f32.xlu0 %v903
    %v909 = vpop.xlane.xlu0 %908
    %910 = vadd.xlane.f32.xlu0 %v904
    %v911 = vpop.xlane.xlu0 %910
    %912 = vadd.xlane.f32.xlu0 %v905
    %v913 = vpop.xlane.xlu0 %912
    %v914 = vrcp.pop 128.0
    %v915 = vmul.f32 %v907, %v914
    %v916 = vmul.f32 %v909, %v914
    %v917 = vmul.f32 %v911, %v914
    %v918 = vmul.f32 %v913, %v914
    %v919 = vsub.f32 %v902, %v915
    %v920 = vsub.f32 %v903, %v916
    %v921 = vsub.f32 %v904, %v917
    %v922 = vsub.f32 %v905, %v918
    %v923 = vmul.f32 %v919, %v919
    %v924 = vmul.f32 %v920, %v920
    %v925 = vmul.f32 %v921, %v921
    %v926 = vmul.f32 %v922, %v922
    %927 = vadd.xlane.f32.xlu0 %v923
    %v928 = vpop.xlane.xlu0 %927
    %929 = vadd.xlane.f32.xlu0 %v924
    %v930 = vpop.xlane.xlu0 %929
    %931 = vadd.xlane.f32.xlu0 %v925
    %v932 = vpop.xlane.xlu0 %931
    %933 = vadd.xlane.f32.xlu0 %v926
    %v934 = vpop.xlane.xlu0 %933
    %v935 = vmul.f32 %v928, %v914
    %v936 = vmul.f32 %v930, %v914
    %v937 = vmul.f32 %v932, %v914
    %v938 = vmul.f32 %v934, %v914
    %v939 = vadd.f32 %v935, 1e-12
    %v940 = vadd.f32 %v936, 1e-12
    %v941 = vadd.f32 %v937, 1e-12
    %v942 = vadd.f32 %v938, 1e-12
    %v943 = vrsqrt.pop %v939
    %v944 = vrsqrt.pop %v940
    %v945 = vrsqrt.pop %v941
    %v946 = vrsqrt.pop %v942
    %v947 = vmul.f32 %v919, %v943
    %v948 = vmul.f32 %v920, %v944
    %v949 = vmul.f32 %v921, %v945
    %v950 = vmul.f32 %v922, %v946
    %v951 = vld [vmem:[%s6] sm:$0x1]
    %v953 = vlaneseq
    %v954 = vshrl.u32 %v953, 7
    %v955 = vsub.s32 0, %v954
    %v956 = vrot.slane %v951, %v955
    %v958 = vmul.f32 %v947, %v956
    %v959 = vmul.f32 %v948, %v956
    %v960 = vmul.f32 %v949, %v956
    %v961 = vmul.f32 %v950, %v956
    %v962 = vld [vmem:[%s7] sm:$0x1]
    %v964 = vlaneseq
    %v965 = vshrl.u32 %v964, 7
    %v966 = vsub.s32 0, %v965
    %v967 = vrot.slane %v962, %v966
    %v969 = vadd.f32 %v958, %v967
    %v970 = vadd.f32 %v959, %v967
    %v971 = vadd.f32 %v960, %v967
    %v972 = vadd.f32 %v961, %v967
    %v973 = vpack.c.bf16 %v970, %v969
    %v974 = vpack.c.bf16 %v972, %v971
    %v977 = vunpack.c.l.b16 %v973
    %v978 = vunpack.c.h.b16 %v973
    %v979 = vunpack.c.l.b16 %v974
    %v980 = vunpack.c.h.b16 %v974
    %v981 = vpack.c.b16 %v977, %v977
    %v982 = vpack.c.b16 %v978, %v978
    %v983 = vpack.c.b16 %v979, %v979
    %v984 = vpack.c.b16 %v980, %v980
    %989 = vst [vmem:[%s8] sm:$0xf] %v981
    %990 = vst [vmem:[%s8 + $0x4] sm:$0xf] %v982
    %991 = vst [vmem:[%s8 + $0x8] sm:$0xf] %v983
    %992 = vst [vmem:[%s8 + $0xc] sm:$0xf] %v984
  $region41: #{bert_mrc_ner_forward.14} parent=0 // pred_fallthru
    _
  // Predicated region
  $region42: #{bert_mrc_ner_forward.14} parent=0 // pred_check
    _
  $region43: #{bert_mrc_ner_forward.14} parent=0 // pred_check_branch
    %994 = sbr.rel (0) target = $region45
  $region44: #{bert_mrc_ner_forward.14} parent=0 // pred_region
    _
  $region45: #{bert_mrc_ner_forward.14} parent=0 // pred_fallthru
    _
  // Predicated region
  $region46: #{bert_mrc_ner_forward.14} parent=0 // pred_check
    _
  $region47: #{bert_mrc_ner_forward.14} parent=0 // pred_check_branch
    %996 = sbr.rel (0) target = $region49
  $region48: #{bert_mrc_ner_forward.14} parent=0 // pred_region
    _
  $region49: #{bert_mrc_ner_forward.14} parent=0 // pred_fallthru
    _

</llo_original>
